<compile_context>
chip_gen: v6e
topology: v6e:2x2x1
jax: 0.10.0
libtpu: 0.0.40
codegen_flags: <defaults>
</compile_context>

<pallas_src>
import jax
import jax.numpy as jnp
from jax.experimental import pallas as pl
from jax.experimental.pallas import tpu as pltpu

K = 3   # conv kernel size
C = 64  # conv channels / fc1 width


def convnet_kernel(x_ref, w1_ref, b1_ref, w2_ref, b2_ref,
                   wfc1_ref, bfc1_ref, wfc2_ref, bfc2_ref, out_ref):
    TB, T, F = x_ref.shape
    T1 = T - (K - 1)           # length after conv1 (valid)
    T2 = T1 - (K - 1)          # length after conv2 (valid)
    L = T2 // 2                # length after maxpool(k=2, stride=2)

    x = x_ref[...]                                            # (TB, T, F)

    # ---- conv1 + tanh : tap-accumulated MXU matmuls (no im2col concat) ----
    acc1 = jnp.dot(x[:, 0:T1, :].reshape(TB * T1, F), w1_ref[0],
                   preferred_element_type=jnp.float32)
    for k in range(1, K):
        acc1 = acc1 + jnp.dot(x[:, k:k + T1, :].reshape(TB * T1, F), w1_ref[k],
                              preferred_element_type=jnp.float32)
    h1 = jnp.tanh(acc1 + b1_ref[...]).reshape(TB, T1, C)      # (TB, T1, C)

    # ---- conv2 + tanh : tap-accumulated ----
    acc2 = jnp.dot(h1[:, 0:T2, :].reshape(TB * T2, C), w2_ref[0],
                   preferred_element_type=jnp.float32)
    for k in range(1, K):
        acc2 = acc2 + jnp.dot(h1[:, k:k + T2, :].reshape(TB * T2, C), w2_ref[k],
                              preferred_element_type=jnp.float32)
    h2 = jnp.tanh(acc2 + b2_ref[...]).reshape(TB, T2, C)      # (TB, T2, C)

    # ---- dropout(p=0.55): identity (inference / eval semantics) ----
    # TODO(synk): train-mode dropout RNG masking is intentionally not modeled.

    # ---- maxpool(k=2) : one vectorized max over the whole batch tile ----
    # pairmax[:, 2i, :] == max(h2[:, 2i, :], h2[:, 2i+1, :]); odd rows are unused.
    pairmax = jnp.maximum(h2[:, :T2 - 1, :], h2[:, 1:, :])    # (TB, T2-1, C)

    # ---- fc1 + tanh : flatten folded into per-pool-position tap accumulation ----
    # wfc1_ref[i] is the (C_in, C_out) block for pool position i, re-laid from
    # PyTorch's channel-major flatten (index c*L + i) in the wrapper.
    zacc = jnp.dot(pairmax[:, 0, :], wfc1_ref[0], preferred_element_type=jnp.float32)
    for i in range(1, L):
        zacc = zacc + jnp.dot(pairmax[:, 2 * i, :], wfc1_ref[i],
                              preferred_element_type=jnp.float32)
    z = jnp.tanh(zacc + bfc1_ref[...])                        # (TB, C)

    # ---- fc2 + sigmoid : single whole-tile matmul, one dense store ----
    logit = jnp.dot(z, wfc2_ref[...],
                    preferred_element_type=jnp.float32) + bfc2_ref[...]
    # TODO(synk): at production TB, move the divide to pl.reciprocal(approx=True)
    # (EUP slot) and emit a lane-dense (1, TB) output block once the 1e-5 parity
    # constraint is relaxed.
    out_ref[...] = 1.0 / (1.0 + jnp.exp(-logit))              # (TB, 1)


def _round_up(n, m):
    return ((n + m - 1) // m) * m


def _batch_tiling(B):
    """Sublane-aligned batch tile; >=2 grid steps once the batch is big enough."""
    b_pad = _round_up(B, 8)
    if b_pad <= 8:
        return b_pad, b_pad
    # Fill MXU rows (cap at 128 — saturates v5e, decent on v6e/v7x) while keeping
    # >=2 grid steps so the "parallel" axis can shard across v7x's two TensorCores.
    tb = min(128, _round_up(b_pad // 2, 8))
    return _round_up(b_pad, tb), tb


def _replicated(shape):
    zeros = (0,) * len(shape)
    return pl.BlockSpec(shape, lambda i, _z=zeros: _z)


def convnet_forward(x_nct, params):
    """x_nct: (B, n_features, n_timesteps) float32, PyTorch NCW layout."""
    w1, b1, w2, b2, wfc1, bfc1, wfc2, bfc2 = params            # PyTorch shapes
    B, F, T = x_nct.shape
    T2 = T - 2 * (K - 1)
    L = T2 // 2

    # ---- re-layout (plain JAX glue; channels-last, matmul-ready operands) ----
    x_btc = jnp.transpose(x_nct, (0, 2, 1)).astype(jnp.float32)        # (B, T, F)
    # conv weights -> per-tap matmul matrices: w*_taps[k][i, o] = w*[o, i, k]
    w1_taps = jnp.transpose(w1, (2, 1, 0)).astype(jnp.float32)         # (K, F, C)
    w2_taps = jnp.transpose(w2, (2, 1, 0)).astype(jnp.float32)         # (K, C, C)
    # fc1 weight (C_out, C*L), PyTorch flatten index c*L + i -> per-pool-position
    # (C_in, C_out) blocks: wfc1_blk[i][c, o] = wfc1[o, c*L + i]
    wfc1_blk = jnp.transpose(wfc1.reshape(C, C, L), (2, 1, 0)).astype(jnp.float32)
    wfc2_k = jnp.transpose(wfc2).astype(jnp.float32)                   # (C, 1)
    b1_k = b1.reshape(1, C).astype(jnp.float32)
    b2_k = b2.reshape(1, C).astype(jnp.float32)
    bfc1_k = bfc1.reshape(1, C).astype(jnp.float32)
    bfc2_k = bfc2.reshape(1, 1).astype(jnp.float32)

    # ---- batch tiling: explicit zero padding, sublane-aligned batch tiles ----
    b_pad, TB = _batch_tiling(B)
    if b_pad != B:
        x_btc = jnp.pad(x_btc, ((0, b_pad - B), (0, 0), (0, 0)))
    grid = (b_pad // TB,)

    out = pl.pallas_call(
        convnet_kernel,
        out_shape=jax.ShapeDtypeStruct((b_pad, 1), jnp.float32),
        grid=grid,
        in_specs=[
            pl.BlockSpec((TB, T, F), lambda i: (i, 0, 0)),
            # Constant-index (replicated) weight/bias blocks. TODO(synk): mark these
            # pipeline_mode=pl.Buffered(1) to drop the redundant second buffer.
            _replicated(w1_taps.shape), _replicated(b1_k.shape),
            _replicated(w2_taps.shape), _replicated(b2_k.shape),
            _replicated(wfc1_blk.shape), _replicated(bfc1_k.shape),
            _replicated(wfc2_k.shape), _replicated(bfc2_k.shape),
        ],
        out_specs=pl.BlockSpec((TB, 1), lambda i: (i, 0)),
        compiler_params=pltpu.CompilerParams(
            dimension_semantics=("parallel",),
            # Budgeted against v7x's 64 MiB physical VMEM (~48 MiB target); raise
            # toward ~100 MiB on v5e/v6e when growing TB at production batch.
            vmem_limit_bytes=48 * 1024 * 1024,
        ),
    )(x_btc, w1_taps, b1_k, w2_taps, b2_k, wfc1_blk, bfc1_k, wfc2_k, bfc2_k)
    return out[:B]


def reference_forward(x_nct, w1, b1, w2, b2, wfc1, bfc1, wfc2, bfc2):
    """Pure-JAX reference reproducing the PyTorch forward (eval mode)."""
    B = x_nct.shape[0]
    h = jax.lax.conv_general_dilated(x_nct, w1, (1,), 'VALID',
                                     dimension_numbers=('NCH', 'OIH', 'NCH'))
    h = jnp.tanh(h + b1[None, :, None])
    h = jax.lax.conv_general_dilated(h, w2, (1,), 'VALID',
                                     dimension_numbers=('NCH', 'OIH', 'NCH'))
    h = jnp.tanh(h + b2[None, :, None])
    T2 = h.shape[2]
    L = T2 // 2
    h = h[:, :, :2 * L].reshape(B, C, L, 2).max(axis=3)       # MaxPool1d(2)
    flat = h.reshape(B, C * L)                                # channel-major flatten
    z = jnp.tanh(flat @ wfc1.T + bfc1)
    return jax.nn.sigmoid(z @ wfc2.T + bfc2)


if __name__ == "__main__":
    B, n_features, n_timesteps = 2, 4, 16
    T2 = n_timesteps - 4
    L = T2 // 2
    flat_size = C * L

    key = jax.random.PRNGKey(0)
    ks = jax.random.split(key, 9)
    x = jax.random.normal(ks[0], (B, n_features, n_timesteps), jnp.float32)
    # Deterministic synthetic parameters (PyTorch shapes).
    w1 = jax.random.normal(ks[1], (C, n_features, K), jnp.float32) * 0.1
    b1 = jax.random.normal(ks[2], (C,), jnp.float32) * 0.1
    w2 = jax.random.normal(ks[3], (C, C, K), jnp.float32) * 0.05
    b2 = jax.random.normal(ks[4], (C,), jnp.float32) * 0.1
    wfc1 = jax.random.normal(ks[5], (C, flat_size), jnp.float32) * 0.05
    bfc1 = jax.random.normal(ks[6], (C,), jnp.float32) * 0.1
    wfc2 = jax.random.normal(ks[7], (1, C), jnp.float32) * 0.1
    bfc2 = jax.random.normal(ks[8], (1,), jnp.float32) * 0.1
    params = (w1, b1, w2, b2, wfc1, bfc1, wfc2, bfc2)

    out = convnet_forward(x, params)
    out = jax.block_until_ready(out)

    ref = reference_forward(x, *params)
    assert out.shape == (B, 1), out.shape
    assert jnp.allclose(out, ref, atol=1e-5, rtol=1e-5), (out, ref)
    print("KERNEL_OK")
</pallas_src>

<mosaic_0001>
module attributes {stable_mosaic.version = 11 : i64} {
  func.func @convnet_kernel(%arg0: i32, %arg1: memref<8x16x4xf32, #tpu.memory_space<vmem>>, %arg2: memref<3x4x64xf32, #tpu.memory_space<vmem>>, %arg3: memref<1x64xf32, #tpu.memory_space<vmem>>, %arg4: memref<3x64x64xf32, #tpu.memory_space<vmem>>, %arg5: memref<1x64xf32, #tpu.memory_space<vmem>>, %arg6: memref<6x64x64xf32, #tpu.memory_space<vmem>>, %arg7: memref<1x64xf32, #tpu.memory_space<vmem>>, %arg8: memref<64x1xf32, #tpu.memory_space<vmem>>, %arg9: memref<1x1xf32, #tpu.memory_space<vmem>>, %arg10: memref<8x1xf32, #tpu.memory_space<vmem>>) attributes {dimension_semantics = [#tpu.dimension_semantics<parallel>], iteration_bounds = array<i64: 1>, scalar_prefetch = 0 : i64, scratch_operands = 0 : i64, tpu.core_type = #tpu.core_type<tc>, window_params = [{transform_indices = @transform_0, window_bounds = array<i64: 8, 16, 4>}, {pipeline_mode = #tpu.pipeline_mode<synchronous>, transform_indices = @transform_1, window_bounds = array<i64: 3, 4, 64>}, {pipeline_mode = #tpu.pipeline_mode<synchronous>, transform_indices = @transform_2, window_bounds = array<i64: 1, 64>}, {pipeline_mode = #tpu.pipeline_mode<synchronous>, transform_indices = @transform_3, window_bounds = array<i64: 3, 64, 64>}, {pipeline_mode = #tpu.pipeline_mode<synchronous>, transform_indices = @transform_4, window_bounds = array<i64: 1, 64>}, {pipeline_mode = #tpu.pipeline_mode<synchronous>, transform_indices = @transform_5, window_bounds = array<i64: 6, 64, 64>}, {pipeline_mode = #tpu.pipeline_mode<synchronous>, transform_indices = @transform_6, window_bounds = array<i64: 1, 64>}, {pipeline_mode = #tpu.pipeline_mode<synchronous>, transform_indices = @transform_7, window_bounds = array<i64: 64, 1>}, {pipeline_mode = #tpu.pipeline_mode<synchronous>, transform_indices = @transform_8, window_bounds = array<i64: 1, 1>}, {transform_indices = @transform_9, window_bounds = array<i64: 8, 1>}]} {
    %c0 = arith.constant 0 : index
    %c0_0 = arith.constant 0 : index
    %c0_1 = arith.constant 0 : index
    %0 = vector.load %arg1[%c0, %c0_0, %c0_1] : memref<8x16x4xf32, #tpu.memory_space<vmem>>, vector<8x16x4xf32>
    %1 = vector.extract_strided_slice %0 {offsets = [0, 0, 0], sizes = [8, 14, 4], strides = [1, 1, 1]} : vector<8x16x4xf32> to vector<8x14x4xf32>
    %2 = vector.shape_cast %1 : vector<8x14x4xf32> to vector<112x4xf32>
    %c0_2 = arith.constant 0 : index
    %c0_3 = arith.constant 0 : index
    %c0_4 = arith.constant 0 : index
    %3 = vector.load %arg2[%c0_2, %c0_3, %c0_4] : memref<3x4x64xf32, #tpu.memory_space<vmem>>, vector<1x4x64xf32>
    %4 = vector.shape_cast %3 : vector<1x4x64xf32> to vector<4x64xf32>
    %cst = arith.constant dense<0.000000e+00> : vector<112x64xf32>
    %5 = tpu.matmul %2, %4, %cst {dimension_numbers = #tpu.dot_dimension_numbers<[1], [0], [0], [1], [0, 0, 1, 1], [], []>} : vector<112x4xf32>, vector<4x64xf32>, vector<112x64xf32> -> vector<112x64xf32>
    %6 = vector.extract_strided_slice %0 {offsets = [0, 1, 0], sizes = [8, 14, 4], strides = [1, 1, 1]} : vector<8x16x4xf32> to vector<8x14x4xf32>
    %7 = vector.shape_cast %6 : vector<8x14x4xf32> to vector<112x4xf32>
    %c1 = arith.constant 1 : index
    %c0_5 = arith.constant 0 : index
    %c0_6 = arith.constant 0 : index
    %8 = vector.load %arg2[%c1, %c0_5, %c0_6] : memref<3x4x64xf32, #tpu.memory_space<vmem>>, vector<1x4x64xf32>
    %9 = vector.shape_cast %8 : vector<1x4x64xf32> to vector<4x64xf32>
    %cst_7 = arith.constant dense<0.000000e+00> : vector<112x64xf32>
    %10 = tpu.matmul %7, %9, %cst_7 {dimension_numbers = #tpu.dot_dimension_numbers<[1], [0], [0], [1], [0, 0, 1, 1], [], []>} : vector<112x4xf32>, vector<4x64xf32>, vector<112x64xf32> -> vector<112x64xf32>
    %11 = arith.addf %5, %10 : vector<112x64xf32>
    %12 = vector.extract_strided_slice %0 {offsets = [0, 2, 0], sizes = [8, 14, 4], strides = [1, 1, 1]} : vector<8x16x4xf32> to vector<8x14x4xf32>
    %13 = vector.shape_cast %12 : vector<8x14x4xf32> to vector<112x4xf32>
    %c2 = arith.constant 2 : index
    %c0_8 = arith.constant 0 : index
    %c0_9 = arith.constant 0 : index
    %14 = vector.load %arg2[%c2, %c0_8, %c0_9] : memref<3x4x64xf32, #tpu.memory_space<vmem>>, vector<1x4x64xf32>
    %15 = vector.shape_cast %14 : vector<1x4x64xf32> to vector<4x64xf32>
    %cst_10 = arith.constant dense<0.000000e+00> : vector<112x64xf32>
    %16 = tpu.matmul %13, %15, %cst_10 {dimension_numbers = #tpu.dot_dimension_numbers<[1], [0], [0], [1], [0, 0, 1, 1], [], []>} : vector<112x4xf32>, vector<4x64xf32>, vector<112x64xf32> -> vector<112x64xf32>
    %17 = arith.addf %11, %16 : vector<112x64xf32>
    %c0_11 = arith.constant 0 : index
    %c0_12 = arith.constant 0 : index
    %18 = vector.load %arg3[%c0_11, %c0_12] : memref<1x64xf32, #tpu.memory_space<vmem>>, vector<1x64xf32>
    %19 = vector.broadcast %18 : vector<1x64xf32> to vector<112x64xf32>
    %20 = arith.addf %17, %19 : vector<112x64xf32>
    %21 = math.tanh %20 : vector<112x64xf32>
    %22 = vector.shape_cast %21 : vector<112x64xf32> to vector<8x14x64xf32>
    %23 = vector.extract_strided_slice %22 {offsets = [0, 0, 0], sizes = [8, 12, 64], strides = [1, 1, 1]} : vector<8x14x64xf32> to vector<8x12x64xf32>
    %24 = vector.shape_cast %23 : vector<8x12x64xf32> to vector<96x64xf32>
    %c0_13 = arith.constant 0 : index
    %c0_14 = arith.constant 0 : index
    %c0_15 = arith.constant 0 : index
    %25 = vector.load %arg4[%c0_13, %c0_14, %c0_15] : memref<3x64x64xf32, #tpu.memory_space<vmem>>, vector<1x64x64xf32>
    %26 = vector.shape_cast %25 : vector<1x64x64xf32> to vector<64x64xf32>
    %cst_16 = arith.constant dense<0.000000e+00> : vector<96x64xf32>
    %27 = tpu.matmul %24, %26, %cst_16 {dimension_numbers = #tpu.dot_dimension_numbers<[1], [0], [0], [1], [0, 0, 1, 1], [], []>} : vector<96x64xf32>, vector<64x64xf32>, vector<96x64xf32> -> vector<96x64xf32>
    %28 = vector.extract_strided_slice %22 {offsets = [0, 1, 0], sizes = [8, 12, 64], strides = [1, 1, 1]} : vector<8x14x64xf32> to vector<8x12x64xf32>
    %29 = vector.shape_cast %28 : vector<8x12x64xf32> to vector<96x64xf32>
    %c1_17 = arith.constant 1 : index
    %c0_18 = arith.constant 0 : index
    %c0_19 = arith.constant 0 : index
    %30 = vector.load %arg4[%c1_17, %c0_18, %c0_19] : memref<3x64x64xf32, #tpu.memory_space<vmem>>, vector<1x64x64xf32>
    %31 = vector.shape_cast %30 : vector<1x64x64xf32> to vector<64x64xf32>
    %cst_20 = arith.constant dense<0.000000e+00> : vector<96x64xf32>
    %32 = tpu.matmul %29, %31, %cst_20 {dimension_numbers = #tpu.dot_dimension_numbers<[1], [0], [0], [1], [0, 0, 1, 1], [], []>} : vector<96x64xf32>, vector<64x64xf32>, vector<96x64xf32> -> vector<96x64xf32>
    %33 = arith.addf %27, %32 : vector<96x64xf32>
    %34 = vector.extract_strided_slice %22 {offsets = [0, 2, 0], sizes = [8, 12, 64], strides = [1, 1, 1]} : vector<8x14x64xf32> to vector<8x12x64xf32>
    %35 = vector.shape_cast %34 : vector<8x12x64xf32> to vector<96x64xf32>
    %c2_21 = arith.constant 2 : index
    %c0_22 = arith.constant 0 : index
    %c0_23 = arith.constant 0 : index
    %36 = vector.load %arg4[%c2_21, %c0_22, %c0_23] : memref<3x64x64xf32, #tpu.memory_space<vmem>>, vector<1x64x64xf32>
    %37 = vector.shape_cast %36 : vector<1x64x64xf32> to vector<64x64xf32>
    %cst_24 = arith.constant dense<0.000000e+00> : vector<96x64xf32>
    %38 = tpu.matmul %35, %37, %cst_24 {dimension_numbers = #tpu.dot_dimension_numbers<[1], [0], [0], [1], [0, 0, 1, 1], [], []>} : vector<96x64xf32>, vector<64x64xf32>, vector<96x64xf32> -> vector<96x64xf32>
    %39 = arith.addf %33, %38 : vector<96x64xf32>
    %c0_25 = arith.constant 0 : index
    %c0_26 = arith.constant 0 : index
    %40 = vector.load %arg5[%c0_25, %c0_26] : memref<1x64xf32, #tpu.memory_space<vmem>>, vector<1x64xf32>
    %41 = vector.broadcast %40 : vector<1x64xf32> to vector<96x64xf32>
    %42 = arith.addf %39, %41 : vector<96x64xf32>
    %43 = math.tanh %42 : vector<96x64xf32>
    %44 = vector.shape_cast %43 : vector<96x64xf32> to vector<8x12x64xf32>
    %45 = vector.extract_strided_slice %44 {offsets = [0, 0, 0], sizes = [8, 11, 64], strides = [1, 1, 1]} : vector<8x12x64xf32> to vector<8x11x64xf32>
    %46 = vector.extract_strided_slice %44 {offsets = [0, 1, 0], sizes = [8, 11, 64], strides = [1, 1, 1]} : vector<8x12x64xf32> to vector<8x11x64xf32>
    %47 = arith.maximumf %45, %46 : vector<8x11x64xf32>
    %48 = vector.extract_strided_slice %47 {offsets = [0, 0, 0], sizes = [8, 1, 64], strides = [1, 1, 1]} : vector<8x11x64xf32> to vector<8x1x64xf32>
    %49 = vector.shape_cast %48 : vector<8x1x64xf32> to vector<8x64xf32>
    %c0_27 = arith.constant 0 : index
    %c0_28 = arith.constant 0 : index
    %c0_29 = arith.constant 0 : index
    %50 = vector.load %arg6[%c0_27, %c0_28, %c0_29] : memref<6x64x64xf32, #tpu.memory_space<vmem>>, vector<1x64x64xf32>
    %51 = vector.shape_cast %50 : vector<1x64x64xf32> to vector<64x64xf32>
    %cst_30 = arith.constant dense<0.000000e+00> : vector<8x64xf32>
    %52 = tpu.matmul %49, %51, %cst_30 {dimension_numbers = #tpu.dot_dimension_numbers<[1], [0], [0], [1], [0, 0, 1, 1], [], []>} : vector<8x64xf32>, vector<64x64xf32>, vector<8x64xf32> -> vector<8x64xf32>
    %53 = vector.extract_strided_slice %47 {offsets = [0, 2, 0], sizes = [8, 1, 64], strides = [1, 1, 1]} : vector<8x11x64xf32> to vector<8x1x64xf32>
    %54 = vector.shape_cast %53 : vector<8x1x64xf32> to vector<8x64xf32>
    %c1_31 = arith.constant 1 : index
    %c0_32 = arith.constant 0 : index
    %c0_33 = arith.constant 0 : index
    %55 = vector.load %arg6[%c1_31, %c0_32, %c0_33] : memref<6x64x64xf32, #tpu.memory_space<vmem>>, vector<1x64x64xf32>
    %56 = vector.shape_cast %55 : vector<1x64x64xf32> to vector<64x64xf32>
    %cst_34 = arith.constant dense<0.000000e+00> : vector<8x64xf32>
    %57 = tpu.matmul %54, %56, %cst_34 {dimension_numbers = #tpu.dot_dimension_numbers<[1], [0], [0], [1], [0, 0, 1, 1], [], []>} : vector<8x64xf32>, vector<64x64xf32>, vector<8x64xf32> -> vector<8x64xf32>
    %58 = arith.addf %52, %57 : vector<8x64xf32>
    %59 = vector.extract_strided_slice %47 {offsets = [0, 4, 0], sizes = [8, 1, 64], strides = [1, 1, 1]} : vector<8x11x64xf32> to vector<8x1x64xf32>
    %60 = vector.shape_cast %59 : vector<8x1x64xf32> to vector<8x64xf32>
    %c2_35 = arith.constant 2 : index
    %c0_36 = arith.constant 0 : index
    %c0_37 = arith.constant 0 : index
    %61 = vector.load %arg6[%c2_35, %c0_36, %c0_37] : memref<6x64x64xf32, #tpu.memory_space<vmem>>, vector<1x64x64xf32>
    %62 = vector.shape_cast %61 : vector<1x64x64xf32> to vector<64x64xf32>
    %cst_38 = arith.constant dense<0.000000e+00> : vector<8x64xf32>
    %63 = tpu.matmul %60, %62, %cst_38 {dimension_numbers = #tpu.dot_dimension_numbers<[1], [0], [0], [1], [0, 0, 1, 1], [], []>} : vector<8x64xf32>, vector<64x64xf32>, vector<8x64xf32> -> vector<8x64xf32>
    %64 = arith.addf %58, %63 : vector<8x64xf32>
    %65 = vector.extract_strided_slice %47 {offsets = [0, 6, 0], sizes = [8, 1, 64], strides = [1, 1, 1]} : vector<8x11x64xf32> to vector<8x1x64xf32>
    %66 = vector.shape_cast %65 : vector<8x1x64xf32> to vector<8x64xf32>
    %c3 = arith.constant 3 : index
    %c0_39 = arith.constant 0 : index
    %c0_40 = arith.constant 0 : index
    %67 = vector.load %arg6[%c3, %c0_39, %c0_40] : memref<6x64x64xf32, #tpu.memory_space<vmem>>, vector<1x64x64xf32>
    %68 = vector.shape_cast %67 : vector<1x64x64xf32> to vector<64x64xf32>
    %cst_41 = arith.constant dense<0.000000e+00> : vector<8x64xf32>
    %69 = tpu.matmul %66, %68, %cst_41 {dimension_numbers = #tpu.dot_dimension_numbers<[1], [0], [0], [1], [0, 0, 1, 1], [], []>} : vector<8x64xf32>, vector<64x64xf32>, vector<8x64xf32> -> vector<8x64xf32>
    %70 = arith.addf %64, %69 : vector<8x64xf32>
    %71 = vector.extract_strided_slice %47 {offsets = [0, 8, 0], sizes = [8, 1, 64], strides = [1, 1, 1]} : vector<8x11x64xf32> to vector<8x1x64xf32>
    %72 = vector.shape_cast %71 : vector<8x1x64xf32> to vector<8x64xf32>
    %c4 = arith.constant 4 : index
    %c0_42 = arith.constant 0 : index
    %c0_43 = arith.constant 0 : index
    %73 = vector.load %arg6[%c4, %c0_42, %c0_43] : memref<6x64x64xf32, #tpu.memory_space<vmem>>, vector<1x64x64xf32>
    %74 = vector.shape_cast %73 : vector<1x64x64xf32> to vector<64x64xf32>
    %cst_44 = arith.constant dense<0.000000e+00> : vector<8x64xf32>
    %75 = tpu.matmul %72, %74, %cst_44 {dimension_numbers = #tpu.dot_dimension_numbers<[1], [0], [0], [1], [0, 0, 1, 1], [], []>} : vector<8x64xf32>, vector<64x64xf32>, vector<8x64xf32> -> vector<8x64xf32>
    %76 = arith.addf %70, %75 : vector<8x64xf32>
    %77 = vector.extract_strided_slice %47 {offsets = [0, 10, 0], sizes = [8, 1, 64], strides = [1, 1, 1]} : vector<8x11x64xf32> to vector<8x1x64xf32>
    %78 = vector.shape_cast %77 : vector<8x1x64xf32> to vector<8x64xf32>
    %c5 = arith.constant 5 : index
    %c0_45 = arith.constant 0 : index
    %c0_46 = arith.constant 0 : index
    %79 = vector.load %arg6[%c5, %c0_45, %c0_46] : memref<6x64x64xf32, #tpu.memory_space<vmem>>, vector<1x64x64xf32>
    %80 = vector.shape_cast %79 : vector<1x64x64xf32> to vector<64x64xf32>
    %cst_47 = arith.constant dense<0.000000e+00> : vector<8x64xf32>
    %81 = tpu.matmul %78, %80, %cst_47 {dimension_numbers = #tpu.dot_dimension_numbers<[1], [0], [0], [1], [0, 0, 1, 1], [], []>} : vector<8x64xf32>, vector<64x64xf32>, vector<8x64xf32> -> vector<8x64xf32>
    %82 = arith.addf %76, %81 : vector<8x64xf32>
    %c0_48 = arith.constant 0 : index
    %c0_49 = arith.constant 0 : index
    %83 = vector.load %arg7[%c0_48, %c0_49] : memref<1x64xf32, #tpu.memory_space<vmem>>, vector<1x64xf32>
    %84 = vector.broadcast %83 : vector<1x64xf32> to vector<8x64xf32>
    %85 = arith.addf %82, %84 : vector<8x64xf32>
    %86 = math.tanh %85 : vector<8x64xf32>
    %c0_50 = arith.constant 0 : index
    %c0_51 = arith.constant 0 : index
    %87 = vector.load %arg8[%c0_50, %c0_51] : memref<64x1xf32, #tpu.memory_space<vmem>>, vector<64x1xf32>
    %cst_52 = arith.constant dense<0.000000e+00> : vector<8x1xf32>
    %88 = tpu.matmul %86, %87, %cst_52 {dimension_numbers = #tpu.dot_dimension_numbers<[1], [0], [0], [1], [0, 0, 1, 1], [], []>} : vector<8x64xf32>, vector<64x1xf32>, vector<8x1xf32> -> vector<8x1xf32>
    %c0_53 = arith.constant 0 : index
    %c0_54 = arith.constant 0 : index
    %89 = vector.load %arg9[%c0_53, %c0_54] : memref<1x1xf32, #tpu.memory_space<vmem>>, vector<1x1xf32>
    %90 = vector.broadcast %89 : vector<1x1xf32> to vector<8x1xf32>
    %91 = arith.addf %88, %90 : vector<8x1xf32>
    %cst_55 = arith.constant 0.000000e+00 : f32
    %92 = vector.broadcast %cst_55 : f32 to vector<8x1xf32>
    %93 = arith.subf %92, %91 : vector<8x1xf32>
    %94 = math.exp %93 : vector<8x1xf32>
    %cst_56 = arith.constant 1.000000e+00 : f32
    %95 = vector.broadcast %cst_56 : f32 to vector<8x1xf32>
    %96 = arith.addf %95, %94 : vector<8x1xf32>
    %cst_57 = arith.constant 1.000000e+00 : f32
    %97 = vector.broadcast %cst_57 : f32 to vector<8x1xf32>
    %98 = arith.divf %97, %96 : vector<8x1xf32>
    %c0_58 = arith.constant 0 : index
    %c0_59 = arith.constant 0 : index
    %99 = vector.load %arg10[%c0_58, %c0_59] : memref<8x1xf32, #tpu.memory_space<vmem>>, vector<8x1xf32>
    tpu.vector_store %arg10[%c0_58, %c0_59], %98 {strides = array<i32>} : memref<8x1xf32, #tpu.memory_space<vmem>>, vector<8x1xf32>,
    return
  }
  func.func @transform_0(%arg0: i32) -> (i32, i32, i32) {
    %c0_i32 = arith.constant 0 : i32
    %c0_i32_0 = arith.constant 0 : i32
    %c0_i32_1 = arith.constant 0 : i32
    return %arg0, %c0_i32, %c0_i32_0 : i32, i32, i32
  }
  func.func @transform_1(%arg0: i32) -> (i32, i32, i32) {
    %c0_i32 = arith.constant 0 : i32
    %c0_i32_0 = arith.constant 0 : i32
    %c0_i32_1 = arith.constant 0 : i32
    %c0_i32_2 = arith.constant 0 : i32
    return %c0_i32, %c0_i32_0, %c0_i32_1 : i32, i32, i32
  }
  func.func @transform_2(%arg0: i32) -> (i32, i32) {
    %c0_i32 = arith.constant 0 : i32
    %c0_i32_0 = arith.constant 0 : i32
    %c0_i32_1 = arith.constant 0 : i32
    return %c0_i32, %c0_i32_0 : i32, i32
  }
  func.func @transform_3(%arg0: i32) -> (i32, i32, i32) {
    %c0_i32 = arith.constant 0 : i32
    %c0_i32_0 = arith.constant 0 : i32
    %c0_i32_1 = arith.constant 0 : i32
    %c0_i32_2 = arith.constant 0 : i32
    return %c0_i32, %c0_i32_0, %c0_i32_1 : i32, i32, i32
  }
  func.func @transform_4(%arg0: i32) -> (i32, i32) {
    %c0_i32 = arith.constant 0 : i32
    %c0_i32_0 = arith.constant 0 : i32
    %c0_i32_1 = arith.constant 0 : i32
    return %c0_i32, %c0_i32_0 : i32, i32
  }
  func.func @transform_5(%arg0: i32) -> (i32, i32, i32) {
    %c0_i32 = arith.constant 0 : i32
    %c0_i32_0 = arith.constant 0 : i32
    %c0_i32_1 = arith.constant 0 : i32
    %c0_i32_2 = arith.constant 0 : i32
    return %c0_i32, %c0_i32_0, %c0_i32_1 : i32, i32, i32
  }
  func.func @transform_6(%arg0: i32) -> (i32, i32) {
    %c0_i32 = arith.constant 0 : i32
    %c0_i32_0 = arith.constant 0 : i32
    %c0_i32_1 = arith.constant 0 : i32
    return %c0_i32, %c0_i32_0 : i32, i32
  }
  func.func @transform_7(%arg0: i32) -> (i32, i32) {
    %c0_i32 = arith.constant 0 : i32
    %c0_i32_0 = arith.constant 0 : i32
    %c0_i32_1 = arith.constant 0 : i32
    return %c0_i32, %c0_i32_0 : i32, i32
  }
  func.func @transform_8(%arg0: i32) -> (i32, i32) {
    %c0_i32 = arith.constant 0 : i32
    %c0_i32_0 = arith.constant 0 : i32
    %c0_i32_1 = arith.constant 0 : i32
    return %c0_i32, %c0_i32_0 : i32, i32
  }
  func.func @transform_9(%arg0: i32) -> (i32, i32) {
    %c0_i32 = arith.constant 0 : i32
    %c0_i32_0 = arith.constant 0 : i32
    return %arg0, %c0_i32 : i32, i32
  }
}

</mosaic_0001>

<llo_original>
// kernel: tpu_custom_call.1
$region0: #{tpu_custom_call.1}
  #allocation0 [shape = 'u32[]', space=smem, size = 0x4, offset = 0x4, fixed_abs, tag = 'smem constant byte address 0x4 - core index']
  #allocation1 [shape = 'u32[144,128]{1,0:T(1,128)}', space=vmem, size = 0x12000, scoped, tag = 'internal scratch']
  #allocation2 [shape = 'f32[1,1]{1,0:T(1,128)S(1)}', space=vmem, size = 0x200, scoped, tag = 'scoped memory for tpu_custom_call.1']
  %s0 = inlined_call_operand.vmem [shape: f32[8,16,4], index: 0, kind: input, shape index: {}]
  %s1 = inlined_call_operand.vmem [shape: f32[3,4,64], index: 1, kind: input, shape index: {}]
  %s2 = inlined_call_operand.vmem [shape: f32[1,64], index: 2, kind: input, shape index: {}]
  %s3 = inlined_call_operand.vmem [shape: f32[3,64,64], index: 3, kind: input, shape index: {}]
  %s4 = inlined_call_operand.vmem [shape: f32[1,64], index: 4, kind: input, shape index: {}]
  %s5 = inlined_call_operand.hbm [shape: f32[6,64,64], index: 5, kind: input, shape index: {}]
  %s6 = inlined_call_operand.vmem [shape: f32[1,64], index: 6, kind: input, shape index: {}]
  %s7 = inlined_call_operand.vmem [shape: f32[64,1], index: 7, kind: input, shape index: {}]
  %s8 = inlined_call_operand.<no memory space> [shape: f32[1,1], index: 8, kind: input, shape index: {}]
  %s9 = inlined_call_operand.vmem [shape: f32[8,1], index: 9, kind: output, shape index: {}]
  %s10 = sld [smem:[#allocation0]]
  $region50: #{tpu_custom_call.1} parent=0
    _
  %s12 = ssub.s32 1, %s10
  %s13 = scalar_select 0, %s12, %s10
  %v14 = vstv %s8
  %15 = vst [vmem:[#allocation2] sm:$0x1] %v14
  $region1: #{tpu_custom_call.1} parent=0
    #allocation3 [shape = 'u8[196608]{0}', space=vmem, size = 0x30000, scoped, tag = 'input window, operand 5, single buffered']
    #allocation4 [shape = 's32[1]{0}', space=sflag, size = 0x4, scoped, tag = 'scoped memory for tpu_custom_call.1']
    %16 = vsyncpa [#allocation4], 0
    // Predicated region
    $region2: #{tpu_custom_call.1} parent=1 // pred_check
      _
    $region3: #{tpu_custom_call.1} parent=1 // pred_check_branch
      %18 = sbr.rel (0) target = $region5
    $region4: #{tpu_custom_call.1} parent=1 // pred_region
      _
    $region5: #{tpu_custom_call.1} parent=1 // pred_fallthru
      _
    // Predicated region
    $region6: #{tpu_custom_call.1} parent=1 // pred_check
      _
    $region7: #{tpu_custom_call.1} parent=1 // pred_check_branch
      %20 = sbr.rel (0) target = $region9
    $region8: #{tpu_custom_call.1} parent=1 // pred_region
      _
    $region9: #{tpu_custom_call.1} parent=1 // pred_fallthru
      _
    // Predicated region
    $region10: #{tpu_custom_call.1} parent=1 // pred_check
      _
    $region11: #{tpu_custom_call.1} parent=1 // pred_check_branch
      %22 = sbr.rel (0) target = $region13
    $region12: #{tpu_custom_call.1} parent=1 // pred_region
      _
    $region13: #{tpu_custom_call.1} parent=1 // pred_fallthru
      _
    // Predicated region
    $region14: #{tpu_custom_call.1} parent=1 // pred_check
      _
    $region15: #{tpu_custom_call.1} parent=1 // pred_check_branch
      %24 = sbr.rel (0) target = $region17
    $region16: #{tpu_custom_call.1} parent=1 // pred_region
      _
    $region17: #{tpu_custom_call.1} parent=1 // pred_fallthru
      _
    // Predicated region
    $region18: #{tpu_custom_call.1} parent=1 // pred_check
      _
    $region19: #{tpu_custom_call.1} parent=1 // pred_check_branch
      %26 = sbr.rel (0) target = $region21
    $region20: #{tpu_custom_call.1} parent=1 // pred_region
      _
    $region21: #{tpu_custom_call.1} parent=1 // pred_fallthru
      _
    // Predicated region
    $region22: #{tpu_custom_call.1} parent=1 // pred_check
      _
    $region23: #{tpu_custom_call.1} parent=1 // pred_check_branch
      %28 = sbr.rel (0) target = $region25
    $region24: #{tpu_custom_call.1} parent=1 // pred_region
      %s30 = ssub.s32 6144, 6144
      %31 = vsyncadd [#allocation4], %s30
      %s32 = sshll.u32 [#allocation3], 4
      %s33 = int_to_ptr.vmem [resolvable:$true] %s32
      %38 = dma.hbm_to_vmem [thread:$0]  %s5, 6144, %s33, [#allocation4], 128, 128, 8
    $region25: #{tpu_custom_call.1} parent=1 // pred_fallthru
      _
    // Predicated region
    $region26: #{tpu_custom_call.1} parent=1 // pred_check
      _
    $region27: #{tpu_custom_call.1} parent=1 // pred_check_branch
      %40 = sbr.rel (0) target = $region29
    $region28: #{tpu_custom_call.1} parent=1 // pred_region
      _
    $region29: #{tpu_custom_call.1} parent=1 // pred_fallthru
      _
    // Predicated region
    $region30: #{tpu_custom_call.1} parent=1 // pred_check
      _
    $region31: #{tpu_custom_call.1} parent=1 // pred_check_branch
      %42 = sbr.rel (0) target = $region33
    $region32: #{tpu_custom_call.1} parent=1 // pred_region
      _
    $region33: #{tpu_custom_call.1} parent=1 // pred_fallthru
      _
    // Predicated region
    $region34: #{tpu_custom_call.1} parent=1 // pred_check
      _
    $region35: #{tpu_custom_call.1} parent=1 // pred_check_branch
      %44 = sbr.rel (0) target = $region37
    $region36: #{tpu_custom_call.1} parent=1 // pred_region
      _
    $region37: #{tpu_custom_call.1} parent=1 // pred_fallthru
      _
    // Predicated region
    $region38: #{tpu_custom_call.1} parent=1 // pred_check
      _
    $region39: #{tpu_custom_call.1} parent=1 // pred_check_branch
      %46 = sbr.rel (0) target = $region41
    $region40: #{tpu_custom_call.1} parent=1 // pred_region
      %47 = dma.done [#allocation4], 6144
    $region41: #{tpu_custom_call.1} parent=1 // pred_fallthru
      _
    %v48 = vld [vmem:[%s0] sm:$0xff]
    %v49 = vld [vmem:[%s0 + $0x8] sm:$0xff]
    %v50 = vld [vmem:[%s0 + $0x10] sm:$0xff]
    %v51 = vld [vmem:[%s0 + $0x18] sm:$0xff]
    %v52 = vld [vmem:[%s0 + $0x20] sm:$0xff]
    %v53 = vld [vmem:[%s0 + $0x28] sm:$0xff]
    %v54 = vld [vmem:[%s0 + $0x30] sm:$0xff]
    %v55 = vld [vmem:[%s0 + $0x38] sm:$0xff]
    %v56 = vld [vmem:[%s0 + $0x40] sm:$0xff]
    %v57 = vld [vmem:[%s0 + $0x48] sm:$0xff]
    %v58 = vld [vmem:[%s0 + $0x50] sm:$0xff]
    %v59 = vld [vmem:[%s0 + $0x58] sm:$0xff]
    %v60 = vld [vmem:[%s0 + $0x60] sm:$0xff]
    %v61 = vld [vmem:[%s0 + $0x68] sm:$0xff]
    %v62 = vld [vmem:[%s0 + $0x70] sm:$0xff]
    %v63 = vld [vmem:[%s0 + $0x78] sm:$0xff]
    %v80 = vcombine.high %v48, %v48
    %v82 = vunpack.c.l.s4 1983009808
    %v83 = vunpack.c.0.s8 %v82
    %v84 = vlaneseq
    %v85 = vshrl.u32 %v84, 7
    %v86 = vsub.s32 %v83, %v85
    %v87 = vrot.slane %v48, %v86
    %v89 = vunpack.c.l.s4 1983009808
    %v90 = vunpack.c.0.s8 %v89
    %v91 = vlaneseq
    %v92 = vshrl.u32 %v91, 7
    %v93 = vsub.s32 %v90, %v92
    %v94 = vrot.slane %v80, %v93
    %v95 = vcombine.high %v87, %v87
    %v96 = vcombine.high %v94, %v94
    %v97 = vcombine.high %v49, %v49
    %v99 = vunpack.c.l.s4 1983009808
    %v100 = vunpack.c.0.s8 %v99
    %v101 = vlaneseq
    %v102 = vshrl.u32 %v101, 7
    %v103 = vsub.s32 %v100, %v102
    %v104 = vrot.slane %v49, %v103
    %v106 = vunpack.c.l.s4 1983009808
    %v107 = vunpack.c.0.s8 %v106
    %v108 = vlaneseq
    %v109 = vshrl.u32 %v108, 7
    %v110 = vsub.s32 %v107, %v109
    %v111 = vrot.slane %v97, %v110
    %v112 = vcombine.high %v104, %v104
    %v113 = vcombine.high %v50, %v50
    %v115 = vunpack.c.l.s4 1983009808
    %v116 = vunpack.c.0.s8 %v115
    %v117 = vlaneseq
    %v118 = vshrl.u32 %v117, 7
    %v119 = vsub.s32 %v116, %v118
    %v120 = vrot.slane %v50, %v119
    %v122 = vunpack.c.l.s4 1983009808
    %v123 = vunpack.c.0.s8 %v122
    %v124 = vlaneseq
    %v125 = vshrl.u32 %v124, 7
    %v126 = vsub.s32 %v123, %v125
    %v127 = vrot.slane %v113, %v126
    %v128 = vcombine.high %v120, %v120
    %v129 = vcombine.high %v127, %v127
    %v130 = vcombine.high %v51, %v51
    %v132 = vunpack.c.l.s4 1983009808
    %v133 = vunpack.c.0.s8 %v132
    %v134 = vlaneseq
    %v135 = vshrl.u32 %v134, 7
    %v136 = vsub.s32 %v133, %v135
    %v137 = vrot.slane %v51, %v136
    %v139 = vunpack.c.l.s4 1983009808
    %v140 = vunpack.c.0.s8 %v139
    %v141 = vlaneseq
    %v142 = vshrl.u32 %v141, 7
    %v143 = vsub.s32 %v140, %v142
    %v144 = vrot.slane %v130, %v143
    %v145 = vcombine.high %v137, %v137
    %v146 = vcombine.high %v52, %v52
    %v148 = vunpack.c.l.s4 1983009808
    %v149 = vunpack.c.0.s8 %v148
    %v150 = vlaneseq
    %v151 = vshrl.u32 %v150, 7
    %v152 = vsub.s32 %v149, %v151
    %v153 = vrot.slane %v52, %v152
    %v155 = vunpack.c.l.s4 1983009808
    %v156 = vunpack.c.0.s8 %v155
    %v157 = vlaneseq
    %v158 = vshrl.u32 %v157, 7
    %v159 = vsub.s32 %v156, %v158
    %v160 = vrot.slane %v146, %v159
    %v161 = vcombine.high %v153, %v153
    %v162 = vcombine.high %v160, %v160
    %v163 = vcombine.high %v53, %v53
    %v165 = vunpack.c.l.s4 1983009808
    %v166 = vunpack.c.0.s8 %v165
    %v167 = vlaneseq
    %v168 = vshrl.u32 %v167, 7
    %v169 = vsub.s32 %v166, %v168
    %v170 = vrot.slane %v53, %v169
    %v172 = vunpack.c.l.s4 1983009808
    %v173 = vunpack.c.0.s8 %v172
    %v174 = vlaneseq
    %v175 = vshrl.u32 %v174, 7
    %v176 = vsub.s32 %v173, %v175
    %v177 = vrot.slane %v163, %v176
    %v178 = vcombine.high %v170, %v170
    %v179 = vcombine.high %v54, %v54
    %v181 = vunpack.c.l.s4 1983009808
    %v182 = vunpack.c.0.s8 %v181
    %v183 = vlaneseq
    %v184 = vshrl.u32 %v183, 7
    %v185 = vsub.s32 %v182, %v184
    %v186 = vrot.slane %v54, %v185
    %v188 = vunpack.c.l.s4 1983009808
    %v189 = vunpack.c.0.s8 %v188
    %v190 = vlaneseq
    %v191 = vshrl.u32 %v190, 7
    %v192 = vsub.s32 %v189, %v191
    %v193 = vrot.slane %v179, %v192
    %v194 = vcombine.high %v186, %v186
    %v195 = vcombine.high %v193, %v193
    %v196 = vcombine.high %v55, %v55
    %v198 = vunpack.c.l.s4 1983009808
    %v199 = vunpack.c.0.s8 %v198
    %v200 = vlaneseq
    %v201 = vshrl.u32 %v200, 7
    %v202 = vsub.s32 %v199, %v201
    %v203 = vrot.slane %v55, %v202
    %v205 = vunpack.c.l.s4 1983009808
    %v206 = vunpack.c.0.s8 %v205
    %v207 = vlaneseq
    %v208 = vshrl.u32 %v207, 7
    %v209 = vsub.s32 %v206, %v208
    %v210 = vrot.slane %v196, %v209
    %v211 = vcombine.high %v203, %v203
    %v212 = vcombine.high %v56, %v56
    %v214 = vunpack.c.l.s4 1983009808
    %v215 = vunpack.c.0.s8 %v214
    %v216 = vlaneseq
    %v217 = vshrl.u32 %v216, 7
    %v218 = vsub.s32 %v215, %v217
    %v219 = vrot.slane %v56, %v218
    %v221 = vunpack.c.l.s4 1983009808
    %v222 = vunpack.c.0.s8 %v221
    %v223 = vlaneseq
    %v224 = vshrl.u32 %v223, 7
    %v225 = vsub.s32 %v222, %v224
    %v226 = vrot.slane %v212, %v225
    %v227 = vcombine.high %v219, %v219
    %v228 = vcombine.high %v226, %v226
    %v229 = vcombine.high %v57, %v57
    %v231 = vunpack.c.l.s4 1983009808
    %v232 = vunpack.c.0.s8 %v231
    %v233 = vlaneseq
    %v234 = vshrl.u32 %v233, 7
    %v235 = vsub.s32 %v232, %v234
    %v236 = vrot.slane %v57, %v235
    %v238 = vunpack.c.l.s4 1983009808
    %v239 = vunpack.c.0.s8 %v238
    %v240 = vlaneseq
    %v241 = vshrl.u32 %v240, 7
    %v242 = vsub.s32 %v239, %v241
    %v243 = vrot.slane %v229, %v242
    %v244 = vcombine.high %v236, %v236
    %v245 = vcombine.high %v58, %v58
    %v247 = vunpack.c.l.s4 1983009808
    %v248 = vunpack.c.0.s8 %v247
    %v249 = vlaneseq
    %v250 = vshrl.u32 %v249, 7
    %v251 = vsub.s32 %v248, %v250
    %v252 = vrot.slane %v58, %v251
    %v254 = vunpack.c.l.s4 1983009808
    %v255 = vunpack.c.0.s8 %v254
    %v256 = vlaneseq
    %v257 = vshrl.u32 %v256, 7
    %v258 = vsub.s32 %v255, %v257
    %v259 = vrot.slane %v245, %v258
    %v260 = vcombine.high %v252, %v252
    %v261 = vcombine.high %v259, %v259
    %v262 = vcombine.high %v59, %v59
    %v264 = vunpack.c.l.s4 1983009808
    %v265 = vunpack.c.0.s8 %v264
    %v266 = vlaneseq
    %v267 = vshrl.u32 %v266, 7
    %v268 = vsub.s32 %v265, %v267
    %v269 = vrot.slane %v59, %v268
    %v271 = vunpack.c.l.s4 1983009808
    %v272 = vunpack.c.0.s8 %v271
    %v273 = vlaneseq
    %v274 = vshrl.u32 %v273, 7
    %v275 = vsub.s32 %v272, %v274
    %v276 = vrot.slane %v262, %v275
    %v277 = vcombine.high %v269, %v269
    %v278 = vcombine.high %v60, %v60
    %v280 = vunpack.c.l.s4 1983009808
    %v281 = vunpack.c.0.s8 %v280
    %v282 = vlaneseq
    %v283 = vshrl.u32 %v282, 7
    %v284 = vsub.s32 %v281, %v283
    %v285 = vrot.slane %v60, %v284
    %v287 = vunpack.c.l.s4 1983009808
    %v288 = vunpack.c.0.s8 %v287
    %v289 = vlaneseq
    %v290 = vshrl.u32 %v289, 7
    %v291 = vsub.s32 %v288, %v290
    %v292 = vrot.slane %v278, %v291
    %v293 = vcombine.high %v285, %v285
    %v294 = vcombine.high %v292, %v292
    %v295 = vcombine.high %v61, %v61
    %v297 = vunpack.c.l.s4 1983009808
    %v298 = vunpack.c.0.s8 %v297
    %v299 = vlaneseq
    %v300 = vshrl.u32 %v299, 7
    %v301 = vsub.s32 %v298, %v300
    %v302 = vrot.slane %v61, %v301
    %v304 = vunpack.c.l.s4 1983009808
    %v305 = vunpack.c.0.s8 %v304
    %v306 = vlaneseq
    %v307 = vshrl.u32 %v306, 7
    %v308 = vsub.s32 %v305, %v307
    %v309 = vrot.slane %v295, %v308
    %v310 = vcombine.high %v302, %v302
    %v311 = vcombine.high %v62, %v62
    %v313 = vunpack.c.l.s4 1983009808
    %v314 = vunpack.c.0.s8 %v313
    %v315 = vlaneseq
    %v316 = vshrl.u32 %v315, 7
    %v317 = vsub.s32 %v314, %v316
    %v318 = vrot.slane %v62, %v317
    %v320 = vunpack.c.l.s4 1983009808
    %v321 = vunpack.c.0.s8 %v320
    %v322 = vlaneseq
    %v323 = vshrl.u32 %v322, 7
    %v324 = vsub.s32 %v321, %v323
    %v325 = vrot.slane %v311, %v324
    %v326 = vcombine.high %v318, %v318
    %v327 = vcombine.high %v325, %v325
    %v328 = vcombine.high %v63, %v63
    %v330 = vunpack.c.l.s4 1983009808
    %v331 = vunpack.c.0.s8 %v330
    %v332 = vlaneseq
    %v333 = vshrl.u32 %v332, 7
    %v334 = vsub.s32 %v331, %v333
    %v335 = vrot.slane %v63, %v334
    %v337 = vunpack.c.l.s4 1983009808
    %v338 = vunpack.c.0.s8 %v337
    %v339 = vlaneseq
    %v340 = vshrl.u32 %v339, 7
    %v341 = vsub.s32 %v338, %v340
    %v342 = vrot.slane %v328, %v341
    %v343 = vcombine.high %v335, %v335
    %v344 = vld [vmem:[%s1] sm:$0xf]
    %v345 = vcombine.high %v111, %v111
    %v346 = vcombine.high %v144, %v144
    %v347 = vcombine.high %v177, %v177
    %v348 = vcombine.high %v210, %v210
    %v349 = vcombine.high %v243, %v243
    %v350 = vcombine.high %v276, %v276
    %v351 = vcombine.high %v309, %v309
    %v352 = vcombine.high %v342, %v342
    %vm353 = vcmask 1040384
    %vm354 = vcmask 1042434
    %vm355 = vmor %vm353, %vm354
    %vm356 = vcmask 1044484
    %vm357 = vmor %vm355, %vm356
    %vm358 = vcmask 1046534
    %vm359 = vmor %vm357, %vm358
    %v360 = vrot.slane %v87, 7
    %v361 = vrot.slane %v360, 2
    %v362 = vrot.slane %v95, 7
    %v363 = vsel %vm359, %v361, %v362
    %v364 = vrot.slane %v362, 2
    %v365 = vrot.slane %v94, 7
    %v366 = vsel %vm359, %v364, %v365
    %v367 = vrot.slane %v365, 2
    %v368 = vrot.slane %v96, 7
    %v369 = vsel %vm359, %v367, %v368
    %v370 = vrot.slane %v368, 2
    %v371 = vrot.slane %v104, 7
    %v372 = vsel %vm359, %v370, %v371
    %v373 = vrot.slane %v371, 2
    %v374 = vrot.slane %v112, 7
    %v375 = vsel %vm359, %v373, %v374
    %v376 = vrot.slane %v374, 2
    %v377 = vrot.slane %v111, 7
    %v378 = vsel %vm359, %v376, %v377
    %v379 = vrot.slane %v377, 2
    %v380 = vrot.slane %v345, 7
    %v381 = vsel %vm359, %v379, %v380
    %v382 = vrot.slane %v120, 7
    %v383 = vrot.slane %v382, 2
    %v384 = vrot.slane %v128, 7
    %v385 = vsel %vm359, %v383, %v384
    %v386 = vrot.slane %v384, 2
    %v387 = vrot.slane %v127, 7
    %v388 = vsel %vm359, %v386, %v387
    %v389 = vrot.slane %v387, 2
    %v390 = vrot.slane %v129, 7
    %v391 = vsel %vm359, %v389, %v390
    %v392 = vrot.slane %v390, 2
    %v393 = vrot.slane %v137, 7
    %v394 = vsel %vm359, %v392, %v393
    %v395 = vrot.slane %v393, 2
    %v396 = vrot.slane %v145, 7
    %v397 = vsel %vm359, %v395, %v396
    %v398 = vrot.slane %v396, 2
    %v399 = vrot.slane %v144, 7
    %v400 = vsel %vm359, %v398, %v399
    %v401 = vrot.slane %v399, 2
    %v402 = vrot.slane %v346, 7
    %v403 = vsel %vm359, %v401, %v402
    %v404 = vrot.slane %v153, 7
    %v405 = vrot.slane %v404, 2
    %v406 = vrot.slane %v161, 7
    %v407 = vsel %vm359, %v405, %v406
    %v408 = vrot.slane %v406, 2
    %v409 = vrot.slane %v160, 7
    %v410 = vsel %vm359, %v408, %v409
    %v411 = vrot.slane %v409, 2
    %v412 = vrot.slane %v162, 7
    %v413 = vsel %vm359, %v411, %v412
    %v414 = vrot.slane %v412, 2
    %v415 = vrot.slane %v170, 7
    %v416 = vsel %vm359, %v414, %v415
    %v417 = vrot.slane %v415, 2
    %v418 = vrot.slane %v178, 7
    %v419 = vsel %vm359, %v417, %v418
    %v420 = vrot.slane %v418, 2
    %v421 = vrot.slane %v177, 7
    %v422 = vsel %vm359, %v420, %v421
    %v423 = vrot.slane %v421, 2
    %v424 = vrot.slane %v347, 7
    %v425 = vsel %vm359, %v423, %v424
    %v426 = vrot.slane %v186, 7
    %v427 = vrot.slane %v426, 2
    %v428 = vrot.slane %v194, 7
    %v429 = vsel %vm359, %v427, %v428
    %v430 = vrot.slane %v428, 2
    %v431 = vrot.slane %v193, 7
    %v432 = vsel %vm359, %v430, %v431
    %v433 = vrot.slane %v431, 2
    %v434 = vrot.slane %v195, 7
    %v435 = vsel %vm359, %v433, %v434
    %v436 = vrot.slane %v434, 2
    %v437 = vrot.slane %v203, 7
    %v438 = vsel %vm359, %v436, %v437
    %v439 = vrot.slane %v437, 2
    %v440 = vrot.slane %v211, 7
    %v441 = vsel %vm359, %v439, %v440
    %v442 = vrot.slane %v440, 2
    %v443 = vrot.slane %v210, 7
    %v444 = vsel %vm359, %v442, %v443
    %v445 = vrot.slane %v443, 2
    %v446 = vrot.slane %v348, 7
    %v447 = vsel %vm359, %v445, %v446
    %v448 = vrot.slane %v219, 7
    %v449 = vrot.slane %v448, 2
    %v450 = vrot.slane %v227, 7
    %v451 = vsel %vm359, %v449, %v450
    %v452 = vrot.slane %v450, 2
    %v453 = vrot.slane %v226, 7
    %v454 = vsel %vm359, %v452, %v453
    %v455 = vrot.slane %v453, 2
    %v456 = vrot.slane %v228, 7
    %v457 = vsel %vm359, %v455, %v456
    %v458 = vrot.slane %v456, 2
    %v459 = vrot.slane %v236, 7
    %v460 = vsel %vm359, %v458, %v459
    %v461 = vrot.slane %v459, 2
    %v462 = vrot.slane %v244, 7
    %v463 = vsel %vm359, %v461, %v462
    %v464 = vrot.slane %v462, 2
    %v465 = vrot.slane %v243, 7
    %v466 = vsel %vm359, %v464, %v465
    %v467 = vrot.slane %v465, 2
    %v468 = vrot.slane %v349, 7
    %v469 = vsel %vm359, %v467, %v468
    %v470 = vrot.slane %v252, 7
    %v471 = vrot.slane %v470, 2
    %v472 = vrot.slane %v260, 7
    %v473 = vsel %vm359, %v471, %v472
    %v474 = vrot.slane %v472, 2
    %v475 = vrot.slane %v259, 7
    %v476 = vsel %vm359, %v474, %v475
    %v477 = vrot.slane %v475, 2
    %v478 = vrot.slane %v261, 7
    %v479 = vsel %vm359, %v477, %v478
    %v480 = vrot.slane %v478, 2
    %v481 = vrot.slane %v269, 7
    %v482 = vsel %vm359, %v480, %v481
    %v483 = vrot.slane %v481, 2
    %v484 = vrot.slane %v277, 7
    %v485 = vsel %vm359, %v483, %v484
    %v486 = vrot.slane %v484, 2
    %v487 = vrot.slane %v276, 7
    %v488 = vsel %vm359, %v486, %v487
    %v489 = vrot.slane %v487, 2
    %v490 = vrot.slane %v350, 7
    %v491 = vsel %vm359, %v489, %v490
    %v492 = vrot.slane %v285, 7
    %v493 = vrot.slane %v492, 2
    %v494 = vrot.slane %v293, 7
    %v495 = vsel %vm359, %v493, %v494
    %v496 = vrot.slane %v494, 2
    %v497 = vrot.slane %v292, 7
    %v498 = vsel %vm359, %v496, %v497
    %v499 = vrot.slane %v497, 2
    %v500 = vrot.slane %v294, 7
    %v501 = vsel %vm359, %v499, %v500
    %v502 = vrot.slane %v500, 2
    %v503 = vrot.slane %v302, 7
    %v504 = vsel %vm359, %v502, %v503
    %v505 = vrot.slane %v503, 2
    %v506 = vrot.slane %v310, 7
    %v507 = vsel %vm359, %v505, %v506
    %v508 = vrot.slane %v506, 2
    %v509 = vrot.slane %v309, 7
    %v510 = vsel %vm359, %v508, %v509
    %v511 = vrot.slane %v509, 2
    %v512 = vrot.slane %v351, 7
    %v513 = vsel %vm359, %v511, %v512
    %v514 = vrot.slane %v318, 7
    %v515 = vrot.slane %v514, 2
    %v516 = vrot.slane %v326, 7
    %v517 = vsel %vm359, %v515, %v516
    %v518 = vrot.slane %v516, 2
    %v519 = vrot.slane %v325, 7
    %v520 = vsel %vm359, %v518, %v519
    %v521 = vrot.slane %v519, 2
    %v522 = vrot.slane %v327, 7
    %v523 = vsel %vm359, %v521, %v522
    %v524 = vrot.slane %v522, 2
    %v525 = vrot.slane %v335, 7
    %v526 = vsel %vm359, %v524, %v525
    %v527 = vrot.slane %v525, 2
    %v528 = vrot.slane %v343, 7
    %v529 = vsel %vm359, %v527, %v528
    %v530 = vrot.slane %v528, 2
    %v531 = vrot.slane %v342, 7
    %v532 = vsel %vm359, %v530, %v531
    %v533 = vrot.slane %v531, 2
    %v534 = vrot.slane %v352, 7
    %v535 = vsel %vm359, %v533, %v534
    %s536 = scalar_lea.vmem %s1, 4
    %v537 = vld [vmem:[%s536] sm:$0xf]
    %v538 = vcombine.low %v363, %v366
    %v539 = vcombine.low %v369, %v372
    %v541 = vunpack.c.l.s4 1983009808
    %v542 = vunpack.c.0.s8 %v541
    %v543 = vlaneseq
    %v544 = vshrl.u32 %v543, 7
    %v545 = vsub.s32 %v542, %v544
    %v546 = vrot.slane %v538, %v545
    %v548 = vunpack.c.l.s4 1983009808
    %v549 = vunpack.c.0.s8 %v548
    %v550 = vlaneseq
    %v551 = vshrl.u32 %v550, 7
    %v552 = vsub.s32 %v549, %v551
    %v553 = vrot.slane %v539, %v552
    %v554 = vcombine.low %v546, %v553
    %v555 = vcombine.low %v375, %v378
    %v556 = vcombine.low %v381, %v385
    %v558 = vunpack.c.l.s4 1983009808
    %v559 = vunpack.c.0.s8 %v558
    %v560 = vlaneseq
    %v561 = vshrl.u32 %v560, 7
    %v562 = vsub.s32 %v559, %v561
    %v563 = vrot.slane %v555, %v562
    %v565 = vunpack.c.l.s4 1983009808
    %v566 = vunpack.c.0.s8 %v565
    %v567 = vlaneseq
    %v568 = vshrl.u32 %v567, 7
    %v569 = vsub.s32 %v566, %v568
    %v570 = vrot.slane %v556, %v569
    %v571 = vcombine.low %v563, %v570
    %v572 = vcombine.low %v388, %v391
    %v573 = vcombine.low %v394, %v397
    %v575 = vunpack.c.l.s4 1983009808
    %v576 = vunpack.c.0.s8 %v575
    %v577 = vlaneseq
    %v578 = vshrl.u32 %v577, 7
    %v579 = vsub.s32 %v576, %v578
    %v580 = vrot.slane %v572, %v579
    %v582 = vunpack.c.l.s4 1983009808
    %v583 = vunpack.c.0.s8 %v582
    %v584 = vlaneseq
    %v585 = vshrl.u32 %v584, 7
    %v586 = vsub.s32 %v583, %v585
    %v587 = vrot.slane %v573, %v586
    %v588 = vcombine.low %v580, %v587
    %v589 = vcombine.low %v400, %v403
    %v590 = vcombine.low %v407, %v410
    %v592 = vunpack.c.l.s4 1983009808
    %v593 = vunpack.c.0.s8 %v592
    %v594 = vlaneseq
    %v595 = vshrl.u32 %v594, 7
    %v596 = vsub.s32 %v593, %v595
    %v597 = vrot.slane %v589, %v596
    %v599 = vunpack.c.l.s4 1983009808
    %v600 = vunpack.c.0.s8 %v599
    %v601 = vlaneseq
    %v602 = vshrl.u32 %v601, 7
    %v603 = vsub.s32 %v600, %v602
    %v604 = vrot.slane %v590, %v603
    %v605 = vcombine.low %v597, %v604
    %v606 = vcombine.low %v413, %v416
    %v607 = vcombine.low %v419, %v422
    %v609 = vunpack.c.l.s4 1983009808
    %v610 = vunpack.c.0.s8 %v609
    %v611 = vlaneseq
    %v612 = vshrl.u32 %v611, 7
    %v613 = vsub.s32 %v610, %v612
    %v614 = vrot.slane %v606, %v613
    %v616 = vunpack.c.l.s4 1983009808
    %v617 = vunpack.c.0.s8 %v616
    %v618 = vlaneseq
    %v619 = vshrl.u32 %v618, 7
    %v620 = vsub.s32 %v617, %v619
    %v621 = vrot.slane %v607, %v620
    %v622 = vcombine.low %v614, %v621
    %v623 = vcombine.low %v425, %v429
    %v624 = vcombine.low %v432, %v435
    %v626 = vunpack.c.l.s4 1983009808
    %v627 = vunpack.c.0.s8 %v626
    %v628 = vlaneseq
    %v629 = vshrl.u32 %v628, 7
    %v630 = vsub.s32 %v627, %v629
    %v631 = vrot.slane %v623, %v630
    %v633 = vunpack.c.l.s4 1983009808
    %v634 = vunpack.c.0.s8 %v633
    %v635 = vlaneseq
    %v636 = vshrl.u32 %v635, 7
    %v637 = vsub.s32 %v634, %v636
    %v638 = vrot.slane %v624, %v637
    %v639 = vcombine.low %v631, %v638
    %v640 = vcombine.low %v438, %v441
    %v641 = vcombine.low %v444, %v447
    %v643 = vunpack.c.l.s4 1983009808
    %v644 = vunpack.c.0.s8 %v643
    %v645 = vlaneseq
    %v646 = vshrl.u32 %v645, 7
    %v647 = vsub.s32 %v644, %v646
    %v648 = vrot.slane %v640, %v647
    %v650 = vunpack.c.l.s4 1983009808
    %v651 = vunpack.c.0.s8 %v650
    %v652 = vlaneseq
    %v653 = vshrl.u32 %v652, 7
    %v654 = vsub.s32 %v651, %v653
    %v655 = vrot.slane %v641, %v654
    %v656 = vcombine.low %v648, %v655
    %v657 = vcombine.low %v451, %v454
    %v658 = vcombine.low %v457, %v460
    %v660 = vunpack.c.l.s4 1983009808
    %v661 = vunpack.c.0.s8 %v660
    %v662 = vlaneseq
    %v663 = vshrl.u32 %v662, 7
    %v664 = vsub.s32 %v661, %v663
    %v665 = vrot.slane %v657, %v664
    %v667 = vunpack.c.l.s4 1983009808
    %v668 = vunpack.c.0.s8 %v667
    %v669 = vlaneseq
    %v670 = vshrl.u32 %v669, 7
    %v671 = vsub.s32 %v668, %v670
    %v672 = vrot.slane %v658, %v671
    %v673 = vcombine.low %v665, %v672
    %v674 = vcombine.low %v463, %v466
    %v675 = vcombine.low %v469, %v473
    %v677 = vunpack.c.l.s4 1983009808
    %v678 = vunpack.c.0.s8 %v677
    %v679 = vlaneseq
    %v680 = vshrl.u32 %v679, 7
    %v681 = vsub.s32 %v678, %v680
    %v682 = vrot.slane %v674, %v681
    %v684 = vunpack.c.l.s4 1983009808
    %v685 = vunpack.c.0.s8 %v684
    %v686 = vlaneseq
    %v687 = vshrl.u32 %v686, 7
    %v688 = vsub.s32 %v685, %v687
    %v689 = vrot.slane %v675, %v688
    %v690 = vcombine.low %v682, %v689
    %v691 = vcombine.low %v476, %v479
    %v692 = vcombine.low %v482, %v485
    %v694 = vunpack.c.l.s4 1983009808
    %v695 = vunpack.c.0.s8 %v694
    %v696 = vlaneseq
    %v697 = vshrl.u32 %v696, 7
    %v698 = vsub.s32 %v695, %v697
    %v699 = vrot.slane %v691, %v698
    %v701 = vunpack.c.l.s4 1983009808
    %v702 = vunpack.c.0.s8 %v701
    %v703 = vlaneseq
    %v704 = vshrl.u32 %v703, 7
    %v705 = vsub.s32 %v702, %v704
    %v706 = vrot.slane %v692, %v705
    %v707 = vcombine.low %v699, %v706
    %v708 = vcombine.low %v488, %v491
    %v709 = vcombine.low %v495, %v498
    %v711 = vunpack.c.l.s4 1983009808
    %v712 = vunpack.c.0.s8 %v711
    %v713 = vlaneseq
    %v714 = vshrl.u32 %v713, 7
    %v715 = vsub.s32 %v712, %v714
    %v716 = vrot.slane %v708, %v715
    %v718 = vunpack.c.l.s4 1983009808
    %v719 = vunpack.c.0.s8 %v718
    %v720 = vlaneseq
    %v721 = vshrl.u32 %v720, 7
    %v722 = vsub.s32 %v719, %v721
    %v723 = vrot.slane %v709, %v722
    %v724 = vcombine.low %v716, %v723
    %v725 = vcombine.low %v501, %v504
    %v726 = vcombine.low %v507, %v510
    %v728 = vunpack.c.l.s4 1983009808
    %v729 = vunpack.c.0.s8 %v728
    %v730 = vlaneseq
    %v731 = vshrl.u32 %v730, 7
    %v732 = vsub.s32 %v729, %v731
    %v733 = vrot.slane %v725, %v732
    %v735 = vunpack.c.l.s4 1983009808
    %v736 = vunpack.c.0.s8 %v735
    %v737 = vlaneseq
    %v738 = vshrl.u32 %v737, 7
    %v739 = vsub.s32 %v736, %v738
    %v740 = vrot.slane %v726, %v739
    %v741 = vcombine.low %v733, %v740
    %v742 = vcombine.low %v513, %v517
    %v743 = vcombine.low %v520, %v523
    %v745 = vunpack.c.l.s4 1983009808
    %v746 = vunpack.c.0.s8 %v745
    %v747 = vlaneseq
    %v748 = vshrl.u32 %v747, 7
    %v749 = vsub.s32 %v746, %v748
    %v750 = vrot.slane %v742, %v749
    %v752 = vunpack.c.l.s4 1983009808
    %v753 = vunpack.c.0.s8 %v752
    %v754 = vlaneseq
    %v755 = vshrl.u32 %v754, 7
    %v756 = vsub.s32 %v753, %v755
    %v757 = vrot.slane %v743, %v756
    %v758 = vcombine.low %v750, %v757
    %v759 = vcombine.low %v526, %v529
    %v760 = vcombine.low %v532, %v535
    %v762 = vunpack.c.l.s4 1983009808
    %v763 = vunpack.c.0.s8 %v762
    %v764 = vlaneseq
    %v765 = vshrl.u32 %v764, 7
    %v766 = vsub.s32 %v763, %v765
    %v767 = vrot.slane %v759, %v766
    %v769 = vunpack.c.l.s4 1983009808
    %v770 = vunpack.c.0.s8 %v769
    %v771 = vlaneseq
    %v772 = vshrl.u32 %v771, 7
    %v773 = vsub.s32 %v770, %v772
    %v774 = vrot.slane %v760, %v773
    %v775 = vcombine.low %v767, %v774
    %vm776 = vcmask 31744
    %v777 = vsel %vm776, %v554, 0
    %v779 = vsel %vm776, %v571, 0
    %v781 = vsel %vm776, %v588, 0
    %v783 = vsel %vm776, %v605, 0
    %v785 = vsel %vm776, %v622, 0
    %v787 = vsel %vm776, %v639, 0
    %v789 = vsel %vm776, %v656, 0
    %v791 = vsel %vm776, %v673, 0
    %v793 = vsel %vm776, %v690, 0
    %v795 = vsel %vm776, %v707, 0
    %v797 = vsel %vm776, %v724, 0
    %v799 = vsel %vm776, %v741, 0
    %v801 = vsel %vm776, %v758, 0
    %v803 = vsel %vm776, %v775, 0
    %vm805 = vcmask 1043456
    %v807 = vsel %vm805, %v537, 0
    %809 = vmatprep.subr.mxu0 0.0
    %810 = vmatpush1.msra.mxu0 0.0
    %811 = vmatprep.subr.mxu0 0.0
    %812 = vmatpush1.msra.mxu0 0.0
    %813 = vmatprep.subr.mxu0 0.0
    %814 = vmatpush1.msra.mxu0 0.0
    %815 = vmatprep.subr.mxu0 0.0
    %816 = vmatpush1.msra.mxu0 0.0
    %817 = vmatprep.subr.mxu0 0.0
    %818 = vmatpush1.msra.mxu0 0.0
    %819 = vmatprep.subr.mxu0 0.0
    %820 = vmatpush1.msra.mxu0 0.0
    %821 = vmatprep.subr.mxu0 0.0
    %822 = vmatpush1.msra.mxu0 0.0
    %823 = vmatprep.subr.mxu0 0.0
    %824 = vmatpush1.msra.mxu0 0.0
    %825 = vmatprep.subr.mxu0 0.0
    %826 = vmatpush1.msra.mxu0 0.0
    %827 = vmatprep.subr.mxu0 0.0
    %828 = vmatpush1.msra.mxu0 0.0
    %829 = vmatprep.subr.mxu0 0.0
    %830 = vmatpush1.msra.mxu0 0.0
    %831 = vmatprep.subr.mxu0 0.0
    %832 = vmatpush1.msra.mxu0 0.0
    %833 = vmatprep.subr.mxu0 0.0
    %834 = vmatpush1.msra.mxu0 0.0
    %835 = vmatprep.subr.mxu0 0.0
    %836 = vmatpush1.msra.mxu0 0.0
    %837 = vmatprep.subr.mxu0 0.0
    %838 = vmatpush1.msra.mxu0 0.0
    %839 = vmatprep.subr.mxu0 0.0
    %840 = vmatpush1.msra.mxu0 %v807
    %841 = vmatprep.subr.mxu0 0.0
    %842 = vmatpush2.msra.mxu0 0.0
    %843 = vmatprep.subr.mxu0 0.0
    %844 = vmatpush2.msra.mxu0 0.0
    %845 = vmatprep.subr.mxu0 0.0
    %846 = vmatpush2.msra.mxu0 0.0
    %847 = vmatprep.subr.mxu0 0.0
    %848 = vmatpush2.msra.mxu0 0.0
    %849 = vmatprep.subr.mxu0 0.0
    %850 = vmatpush2.msra.mxu0 0.0
    %851 = vmatprep.subr.mxu0 0.0
    %852 = vmatpush2.msra.mxu0 0.0
    %853 = vmatprep.subr.mxu0 0.0
    %854 = vmatpush2.msra.mxu0 0.0
    %855 = vmatprep.subr.mxu0 0.0
    %856 = vmatpush2.msra.mxu0 0.0
    %857 = vmatprep.subr.mxu0 0.0
    %858 = vmatpush2.msra.mxu0 0.0
    %859 = vmatprep.subr.mxu0 0.0
    %860 = vmatpush2.msra.mxu0 0.0
    %861 = vmatprep.subr.mxu0 0.0
    %862 = vmatpush2.msra.mxu0 0.0
    %863 = vmatprep.subr.mxu0 0.0
    %864 = vmatpush2.msra.mxu0 0.0
    %865 = vmatprep.subr.mxu0 0.0
    %866 = vmatpush2.msra.mxu0 0.0
    %867 = vmatprep.subr.mxu0 0.0
    %868 = vmatpush2.msra.mxu0 0.0
    %869 = vmatprep.subr.mxu0 0.0
    %870 = vmatpush2.msra.mxu0 0.0
    %871 = vmatprep.subr.mxu0 0.0
    %872 = vmatpush2.msra.mxu0 0.0
    %873 = vmatprep.mubr.f32.mxu0 0.0
    %874 = vmatmul.mubr.f32.gmra.mxu0 %v777
    %v875 = vpop.f32.mrf.mxu0
    %v876 = vadd.f32 0.0, %v875
    %v877 = vpop.f32.mrf.mxu0
    %878 = vmatprep.mubr.f32.mxu0 0.0
    %879 = vmatmul.mubr.f32.gmra.mxu0 %v779
    %v880 = vpop.f32.mrf.mxu0
    %v881 = vadd.f32 0.0, %v880
    %v882 = vpop.f32.mrf.mxu0
    %883 = vmatprep.mubr.f32.mxu0 0.0
    %884 = vmatmul.mubr.f32.gmra.mxu0 %v781
    %v885 = vpop.f32.mrf.mxu0
    %v886 = vadd.f32 0.0, %v885
    %v887 = vpop.f32.mrf.mxu0
    %888 = vmatprep.mubr.f32.mxu0 0.0
    %889 = vmatmul.mubr.f32.gmra.mxu0 %v783
    %v890 = vpop.f32.mrf.mxu0
    %v891 = vadd.f32 0.0, %v890
    %v892 = vpop.f32.mrf.mxu0
    %893 = vmatprep.mubr.f32.mxu0 0.0
    %894 = vmatmul.mubr.f32.gmra.mxu0 %v785
    %v895 = vpop.f32.mrf.mxu0
    %v896 = vadd.f32 0.0, %v895
    %v897 = vpop.f32.mrf.mxu0
    %898 = vmatprep.mubr.f32.mxu0 0.0
    %899 = vmatmul.mubr.f32.gmra.mxu0 %v787
    %v900 = vpop.f32.mrf.mxu0
    %v901 = vadd.f32 0.0, %v900
    %v902 = vpop.f32.mrf.mxu0
    %903 = vmatprep.mubr.f32.mxu0 0.0
    %904 = vmatmul.mubr.f32.gmra.mxu0 %v789
    %v905 = vpop.f32.mrf.mxu0
    %v906 = vadd.f32 0.0, %v905
    %v907 = vpop.f32.mrf.mxu0
    %908 = vmatprep.mubr.f32.mxu0 0.0
    %909 = vmatmul.mubr.f32.gmra.mxu0 %v791
    %v910 = vpop.f32.mrf.mxu0
    %v911 = vadd.f32 0.0, %v910
    %v912 = vpop.f32.mrf.mxu0
    %913 = vmatprep.mubr.f32.mxu0 0.0
    %914 = vmatmul.mubr.f32.gmra.mxu0 %v793
    %v915 = vpop.f32.mrf.mxu0
    %v916 = vadd.f32 0.0, %v915
    %v917 = vpop.f32.mrf.mxu0
    %918 = vmatprep.mubr.f32.mxu0 0.0
    %919 = vmatmul.mubr.f32.gmra.mxu0 %v795
    %v920 = vpop.f32.mrf.mxu0
    %v921 = vadd.f32 0.0, %v920
    %v922 = vpop.f32.mrf.mxu0
    %923 = vmatprep.mubr.f32.mxu0 0.0
    %924 = vmatmul.mubr.f32.gmra.mxu0 %v797
    %v925 = vpop.f32.mrf.mxu0
    %v926 = vadd.f32 0.0, %v925
    %v927 = vpop.f32.mrf.mxu0
    %928 = vmatprep.mubr.f32.mxu0 0.0
    %929 = vmatmul.mubr.f32.gmra.mxu0 %v799
    %v930 = vpop.f32.mrf.mxu0
    %v931 = vadd.f32 0.0, %v930
    %v932 = vpop.f32.mrf.mxu0
    %933 = vmatprep.mubr.f32.mxu0 0.0
    %934 = vmatmul.mubr.f32.gmra.mxu0 %v801
    %v935 = vpop.f32.mrf.mxu0
    %v936 = vadd.f32 0.0, %v935
    %v937 = vpop.f32.mrf.mxu0
    %938 = vmatprep.mubr.f32.mxu0 0.0
    %939 = vmatmul.mubr.f32.gmra.mxu0 %v803
    %v940 = vpop.f32.mrf.mxu0
    %v941 = vadd.f32 0.0, %v940
    %v942 = vpop.f32.mrf.mxu0
    %943 = vdwg.mxu0
    %v944 = vcombine.low %v87, %v95
    %v945 = vcombine.low %v94, %v96
    %v947 = vunpack.c.l.s4 1983009808
    %v948 = vunpack.c.0.s8 %v947
    %v949 = vlaneseq
    %v950 = vshrl.u32 %v949, 7
    %v951 = vsub.s32 %v948, %v950
    %v952 = vrot.slane %v944, %v951
    %v954 = vunpack.c.l.s4 1983009808
    %v955 = vunpack.c.0.s8 %v954
    %v956 = vlaneseq
    %v957 = vshrl.u32 %v956, 7
    %v958 = vsub.s32 %v955, %v957
    %v959 = vrot.slane %v945, %v958
    %v960 = vcombine.low %v952, %v959
    %v961 = vcombine.low %v104, %v112
    %v962 = vcombine.low %v111, %v120
    %v964 = vunpack.c.l.s4 1983009808
    %v965 = vunpack.c.0.s8 %v964
    %v966 = vlaneseq
    %v967 = vshrl.u32 %v966, 7
    %v968 = vsub.s32 %v965, %v967
    %v969 = vrot.slane %v961, %v968
    %v971 = vunpack.c.l.s4 1983009808
    %v972 = vunpack.c.0.s8 %v971
    %v973 = vlaneseq
    %v974 = vshrl.u32 %v973, 7
    %v975 = vsub.s32 %v972, %v974
    %v976 = vrot.slane %v962, %v975
    %v977 = vcombine.low %v969, %v976
    %v978 = vcombine.low %v128, %v127
    %v979 = vcombine.low %v129, %v137
    %v981 = vunpack.c.l.s4 1983009808
    %v982 = vunpack.c.0.s8 %v981
    %v983 = vlaneseq
    %v984 = vshrl.u32 %v983, 7
    %v985 = vsub.s32 %v982, %v984
    %v986 = vrot.slane %v978, %v985
    %v988 = vunpack.c.l.s4 1983009808
    %v989 = vunpack.c.0.s8 %v988
    %v990 = vlaneseq
    %v991 = vshrl.u32 %v990, 7
    %v992 = vsub.s32 %v989, %v991
    %v993 = vrot.slane %v979, %v992
    %v994 = vcombine.low %v986, %v993
    %v995 = vcombine.low %v145, %v144
    %v996 = vcombine.low %v153, %v161
    %v998 = vunpack.c.l.s4 1983009808
    %v999 = vunpack.c.0.s8 %v998
    %v1000 = vlaneseq
    %v1001 = vshrl.u32 %v1000, 7
    %v1002 = vsub.s32 %v999, %v1001
    %v1003 = vrot.slane %v995, %v1002
    %v1005 = vunpack.c.l.s4 1983009808
    %v1006 = vunpack.c.0.s8 %v1005
    %v1007 = vlaneseq
    %v1008 = vshrl.u32 %v1007, 7
    %v1009 = vsub.s32 %v1006, %v1008
    %v1010 = vrot.slane %v996, %v1009
    %v1011 = vcombine.low %v1003, %v1010
    %v1012 = vcombine.low %v160, %v162
    %v1013 = vcombine.low %v170, %v178
    %v1015 = vunpack.c.l.s4 1983009808
    %v1016 = vunpack.c.0.s8 %v1015
    %v1017 = vlaneseq
    %v1018 = vshrl.u32 %v1017, 7
    %v1019 = vsub.s32 %v1016, %v1018
    %v1020 = vrot.slane %v1012, %v1019
    %v1022 = vunpack.c.l.s4 1983009808
    %v1023 = vunpack.c.0.s8 %v1022
    %v1024 = vlaneseq
    %v1025 = vshrl.u32 %v1024, 7
    %v1026 = vsub.s32 %v1023, %v1025
    %v1027 = vrot.slane %v1013, %v1026
    %v1028 = vcombine.low %v1020, %v1027
    %v1029 = vcombine.low %v177, %v186
    %v1030 = vcombine.low %v194, %v193
    %v1032 = vunpack.c.l.s4 1983009808
    %v1033 = vunpack.c.0.s8 %v1032
    %v1034 = vlaneseq
    %v1035 = vshrl.u32 %v1034, 7
    %v1036 = vsub.s32 %v1033, %v1035
    %v1037 = vrot.slane %v1029, %v1036
    %v1039 = vunpack.c.l.s4 1983009808
    %v1040 = vunpack.c.0.s8 %v1039
    %v1041 = vlaneseq
    %v1042 = vshrl.u32 %v1041, 7
    %v1043 = vsub.s32 %v1040, %v1042
    %v1044 = vrot.slane %v1030, %v1043
    %v1045 = vcombine.low %v1037, %v1044
    %v1046 = vcombine.low %v195, %v203
    %v1047 = vcombine.low %v211, %v210
    %v1049 = vunpack.c.l.s4 1983009808
    %v1050 = vunpack.c.0.s8 %v1049
    %v1051 = vlaneseq
    %v1052 = vshrl.u32 %v1051, 7
    %v1053 = vsub.s32 %v1050, %v1052
    %v1054 = vrot.slane %v1046, %v1053
    %v1056 = vunpack.c.l.s4 1983009808
    %v1057 = vunpack.c.0.s8 %v1056
    %v1058 = vlaneseq
    %v1059 = vshrl.u32 %v1058, 7
    %v1060 = vsub.s32 %v1057, %v1059
    %v1061 = vrot.slane %v1047, %v1060
    %v1062 = vcombine.low %v1054, %v1061
    %v1063 = vcombine.low %v219, %v227
    %v1064 = vcombine.low %v226, %v228
    %v1066 = vunpack.c.l.s4 1983009808
    %v1067 = vunpack.c.0.s8 %v1066
    %v1068 = vlaneseq
    %v1069 = vshrl.u32 %v1068, 7
    %v1070 = vsub.s32 %v1067, %v1069
    %v1071 = vrot.slane %v1063, %v1070
    %v1073 = vunpack.c.l.s4 1983009808
    %v1074 = vunpack.c.0.s8 %v1073
    %v1075 = vlaneseq
    %v1076 = vshrl.u32 %v1075, 7
    %v1077 = vsub.s32 %v1074, %v1076
    %v1078 = vrot.slane %v1064, %v1077
    %v1079 = vcombine.low %v1071, %v1078
    %v1080 = vcombine.low %v236, %v244
    %v1081 = vcombine.low %v243, %v252
    %v1083 = vunpack.c.l.s4 1983009808
    %v1084 = vunpack.c.0.s8 %v1083
    %v1085 = vlaneseq
    %v1086 = vshrl.u32 %v1085, 7
    %v1087 = vsub.s32 %v1084, %v1086
    %v1088 = vrot.slane %v1080, %v1087
    %v1090 = vunpack.c.l.s4 1983009808
    %v1091 = vunpack.c.0.s8 %v1090
    %v1092 = vlaneseq
    %v1093 = vshrl.u32 %v1092, 7
    %v1094 = vsub.s32 %v1091, %v1093
    %v1095 = vrot.slane %v1081, %v1094
    %v1096 = vcombine.low %v1088, %v1095
    %v1097 = vcombine.low %v260, %v259
    %v1098 = vcombine.low %v261, %v269
    %v1100 = vunpack.c.l.s4 1983009808
    %v1101 = vunpack.c.0.s8 %v1100
    %v1102 = vlaneseq
    %v1103 = vshrl.u32 %v1102, 7
    %v1104 = vsub.s32 %v1101, %v1103
    %v1105 = vrot.slane %v1097, %v1104
    %v1107 = vunpack.c.l.s4 1983009808
    %v1108 = vunpack.c.0.s8 %v1107
    %v1109 = vlaneseq
    %v1110 = vshrl.u32 %v1109, 7
    %v1111 = vsub.s32 %v1108, %v1110
    %v1112 = vrot.slane %v1098, %v1111
    %v1113 = vcombine.low %v1105, %v1112
    %v1114 = vcombine.low %v277, %v276
    %v1115 = vcombine.low %v285, %v293
    %v1117 = vunpack.c.l.s4 1983009808
    %v1118 = vunpack.c.0.s8 %v1117
    %v1119 = vlaneseq
    %v1120 = vshrl.u32 %v1119, 7
    %v1121 = vsub.s32 %v1118, %v1120
    %v1122 = vrot.slane %v1114, %v1121
    %v1124 = vunpack.c.l.s4 1983009808
    %v1125 = vunpack.c.0.s8 %v1124
    %v1126 = vlaneseq
    %v1127 = vshrl.u32 %v1126, 7
    %v1128 = vsub.s32 %v1125, %v1127
    %v1129 = vrot.slane %v1115, %v1128
    %v1130 = vcombine.low %v1122, %v1129
    %v1131 = vcombine.low %v292, %v294
    %v1132 = vcombine.low %v302, %v310
    %v1134 = vunpack.c.l.s4 1983009808
    %v1135 = vunpack.c.0.s8 %v1134
    %v1136 = vlaneseq
    %v1137 = vshrl.u32 %v1136, 7
    %v1138 = vsub.s32 %v1135, %v1137
    %v1139 = vrot.slane %v1131, %v1138
    %v1141 = vunpack.c.l.s4 1983009808
    %v1142 = vunpack.c.0.s8 %v1141
    %v1143 = vlaneseq
    %v1144 = vshrl.u32 %v1143, 7
    %v1145 = vsub.s32 %v1142, %v1144
    %v1146 = vrot.slane %v1132, %v1145
    %v1147 = vcombine.low %v1139, %v1146
    %v1148 = vcombine.low %v309, %v318
    %v1149 = vcombine.low %v326, %v325
    %v1151 = vunpack.c.l.s4 1983009808
    %v1152 = vunpack.c.0.s8 %v1151
    %v1153 = vlaneseq
    %v1154 = vshrl.u32 %v1153, 7
    %v1155 = vsub.s32 %v1152, %v1154
    %v1156 = vrot.slane %v1148, %v1155
    %v1158 = vunpack.c.l.s4 1983009808
    %v1159 = vunpack.c.0.s8 %v1158
    %v1160 = vlaneseq
    %v1161 = vshrl.u32 %v1160, 7
    %v1162 = vsub.s32 %v1159, %v1161
    %v1163 = vrot.slane %v1149, %v1162
    %v1164 = vcombine.low %v1156, %v1163
    %v1165 = vcombine.low %v327, %v335
    %v1166 = vcombine.low %v343, %v342
    %v1168 = vunpack.c.l.s4 1983009808
    %v1169 = vunpack.c.0.s8 %v1168
    %v1170 = vlaneseq
    %v1171 = vshrl.u32 %v1170, 7
    %v1172 = vsub.s32 %v1169, %v1171
    %v1173 = vrot.slane %v1165, %v1172
    %v1175 = vunpack.c.l.s4 1983009808
    %v1176 = vunpack.c.0.s8 %v1175
    %v1177 = vlaneseq
    %v1178 = vshrl.u32 %v1177, 7
    %v1179 = vsub.s32 %v1176, %v1178
    %v1180 = vrot.slane %v1166, %v1179
    %v1181 = vcombine.low %v1173, %v1180
    %v1182 = vsel %vm776, %v960, 0
    %v1184 = vsel %vm776, %v977, 0
    %v1186 = vsel %vm776, %v994, 0
    %v1188 = vsel %vm776, %v1011, 0
    %v1190 = vsel %vm776, %v1028, 0
    %v1192 = vsel %vm776, %v1045, 0
    %v1194 = vsel %vm776, %v1062, 0
    %v1196 = vsel %vm776, %v1079, 0
    %v1198 = vsel %vm776, %v1096, 0
    %v1200 = vsel %vm776, %v1113, 0
    %v1202 = vsel %vm776, %v1130, 0
    %v1204 = vsel %vm776, %v1147, 0
    %v1206 = vsel %vm776, %v1164, 0
    %v1208 = vsel %vm776, %v1181, 0
    %v1211 = vsel %vm805, %v344, 0
    %1213 = vmatprep.subr.mxu0 0.0
    %1214 = vmatpush1.msra.mxu0 0.0
    %1215 = vmatprep.subr.mxu0 0.0
    %1216 = vmatpush1.msra.mxu0 0.0
    %1217 = vmatprep.subr.mxu0 0.0
    %1218 = vmatpush1.msra.mxu0 0.0
    %1219 = vmatprep.subr.mxu0 0.0
    %1220 = vmatpush1.msra.mxu0 0.0
    %1221 = vmatprep.subr.mxu0 0.0
    %1222 = vmatpush1.msra.mxu0 0.0
    %1223 = vmatprep.subr.mxu0 0.0
    %1224 = vmatpush1.msra.mxu0 0.0
    %1225 = vmatprep.subr.mxu0 0.0
    %1226 = vmatpush1.msra.mxu0 0.0
    %1227 = vmatprep.subr.mxu0 0.0
    %1228 = vmatpush1.msra.mxu0 0.0
    %1229 = vmatprep.subr.mxu0 0.0
    %1230 = vmatpush1.msra.mxu0 0.0
    %1231 = vmatprep.subr.mxu0 0.0
    %1232 = vmatpush1.msra.mxu0 0.0
    %1233 = vmatprep.subr.mxu0 0.0
    %1234 = vmatpush1.msra.mxu0 0.0
    %1235 = vmatprep.subr.mxu0 0.0
    %1236 = vmatpush1.msra.mxu0 0.0
    %1237 = vmatprep.subr.mxu0 0.0
    %1238 = vmatpush1.msra.mxu0 0.0
    %1239 = vmatprep.subr.mxu0 0.0
    %1240 = vmatpush1.msra.mxu0 0.0
    %1241 = vmatprep.subr.mxu0 0.0
    %1242 = vmatpush1.msra.mxu0 0.0
    %1243 = vmatprep.subr.mxu0 0.0
    %1244 = vmatpush1.msra.mxu0 %v1211
    %1245 = vmatprep.subr.mxu0 0.0
    %1246 = vmatpush2.msra.mxu0 0.0
    %1247 = vmatprep.subr.mxu0 0.0
    %1248 = vmatpush2.msra.mxu0 0.0
    %1249 = vmatprep.subr.mxu0 0.0
    %1250 = vmatpush2.msra.mxu0 0.0
    %1251 = vmatprep.subr.mxu0 0.0
    %1252 = vmatpush2.msra.mxu0 0.0
    %1253 = vmatprep.subr.mxu0 0.0
    %1254 = vmatpush2.msra.mxu0 0.0
    %1255 = vmatprep.subr.mxu0 0.0
    %1256 = vmatpush2.msra.mxu0 0.0
    %1257 = vmatprep.subr.mxu0 0.0
    %1258 = vmatpush2.msra.mxu0 0.0
    %1259 = vmatprep.subr.mxu0 0.0
    %1260 = vmatpush2.msra.mxu0 0.0
    %1261 = vmatprep.subr.mxu0 0.0
    %1262 = vmatpush2.msra.mxu0 0.0
    %1263 = vmatprep.subr.mxu0 0.0
    %1264 = vmatpush2.msra.mxu0 0.0
    %1265 = vmatprep.subr.mxu0 0.0
    %1266 = vmatpush2.msra.mxu0 0.0
    %1267 = vmatprep.subr.mxu0 0.0
    %1268 = vmatpush2.msra.mxu0 0.0
    %1269 = vmatprep.subr.mxu0 0.0
    %1270 = vmatpush2.msra.mxu0 0.0
    %1271 = vmatprep.subr.mxu0 0.0
    %1272 = vmatpush2.msra.mxu0 0.0
    %1273 = vmatprep.subr.mxu0 0.0
    %1274 = vmatpush2.msra.mxu0 0.0
    %1275 = vmatprep.subr.mxu0 0.0
    %1276 = vmatpush2.msra.mxu0 0.0
    %1277 = vmatprep.mubr.f32.mxu0 0.0
    %1278 = vmatmul.mubr.f32.gmra.mxu0 %v1182
    %v1279 = vpop.f32.mrf.mxu0
    %v1280 = vadd.f32 %v876, %v1279
    %v1281 = vpop.f32.mrf.mxu0
    %1282 = vmatprep.mubr.f32.mxu0 0.0
    %1283 = vmatmul.mubr.f32.gmra.mxu0 %v1184
    %v1284 = vpop.f32.mrf.mxu0
    %v1285 = vadd.f32 %v881, %v1284
    %v1286 = vpop.f32.mrf.mxu0
    %1287 = vmatprep.mubr.f32.mxu0 0.0
    %1288 = vmatmul.mubr.f32.gmra.mxu0 %v1186
    %v1289 = vpop.f32.mrf.mxu0
    %v1290 = vadd.f32 %v886, %v1289
    %v1291 = vpop.f32.mrf.mxu0
    %1292 = vmatprep.mubr.f32.mxu0 0.0
    %1293 = vmatmul.mubr.f32.gmra.mxu0 %v1188
    %v1294 = vpop.f32.mrf.mxu0
    %v1295 = vadd.f32 %v891, %v1294
    %v1296 = vpop.f32.mrf.mxu0
    %1297 = vmatprep.mubr.f32.mxu0 0.0
    %1298 = vmatmul.mubr.f32.gmra.mxu0 %v1190
    %v1299 = vpop.f32.mrf.mxu0
    %v1300 = vadd.f32 %v896, %v1299
    %v1301 = vpop.f32.mrf.mxu0
    %1302 = vmatprep.mubr.f32.mxu0 0.0
    %1303 = vmatmul.mubr.f32.gmra.mxu0 %v1192
    %v1304 = vpop.f32.mrf.mxu0
    %v1305 = vadd.f32 %v901, %v1304
    %v1306 = vpop.f32.mrf.mxu0
    %1307 = vmatprep.mubr.f32.mxu0 0.0
    %1308 = vmatmul.mubr.f32.gmra.mxu0 %v1194
    %v1309 = vpop.f32.mrf.mxu0
    %v1310 = vadd.f32 %v906, %v1309
    %v1311 = vpop.f32.mrf.mxu0
    %1312 = vmatprep.mubr.f32.mxu0 0.0
    %1313 = vmatmul.mubr.f32.gmra.mxu0 %v1196
    %v1314 = vpop.f32.mrf.mxu0
    %v1315 = vadd.f32 %v911, %v1314
    %v1316 = vpop.f32.mrf.mxu0
    %1317 = vmatprep.mubr.f32.mxu0 0.0
    %1318 = vmatmul.mubr.f32.gmra.mxu0 %v1198
    %v1319 = vpop.f32.mrf.mxu0
    %v1320 = vadd.f32 %v916, %v1319
    %v1321 = vpop.f32.mrf.mxu0
    %1322 = vmatprep.mubr.f32.mxu0 0.0
    %1323 = vmatmul.mubr.f32.gmra.mxu0 %v1200
    %v1324 = vpop.f32.mrf.mxu0
    %v1325 = vadd.f32 %v921, %v1324
    %v1326 = vpop.f32.mrf.mxu0
    %1327 = vmatprep.mubr.f32.mxu0 0.0
    %1328 = vmatmul.mubr.f32.gmra.mxu0 %v1202
    %v1329 = vpop.f32.mrf.mxu0
    %v1330 = vadd.f32 %v926, %v1329
    %v1331 = vpop.f32.mrf.mxu0
    %1332 = vmatprep.mubr.f32.mxu0 0.0
    %1333 = vmatmul.mubr.f32.gmra.mxu0 %v1204
    %v1334 = vpop.f32.mrf.mxu0
    %v1335 = vadd.f32 %v931, %v1334
    %v1336 = vpop.f32.mrf.mxu0
    %1337 = vmatprep.mubr.f32.mxu0 0.0
    %1338 = vmatmul.mubr.f32.gmra.mxu0 %v1206
    %v1339 = vpop.f32.mrf.mxu0
    %v1340 = vadd.f32 %v936, %v1339
    %v1341 = vpop.f32.mrf.mxu0
    %1342 = vmatprep.mubr.f32.mxu0 0.0
    %1343 = vmatmul.mubr.f32.gmra.mxu0 %v1208
    %v1344 = vpop.f32.mrf.mxu0
    %v1345 = vadd.f32 %v941, %v1344
    %v1346 = vpop.f32.mrf.mxu0
    %1347 = vdwg.mxu0
    %s1348 = scalar_lea.vmem %s1, 8
    %v1349 = vld [vmem:[%s1348] sm:$0xf]
    %v1350 = vcombine.low %v95, %v94
    %v1351 = vcombine.low %v96, %v104
    %v1353 = vunpack.c.l.s4 1983009808
    %v1354 = vunpack.c.0.s8 %v1353
    %v1355 = vlaneseq
    %v1356 = vshrl.u32 %v1355, 7
    %v1357 = vsub.s32 %v1354, %v1356
    %v1358 = vrot.slane %v1350, %v1357
    %v1360 = vunpack.c.l.s4 1983009808
    %v1361 = vunpack.c.0.s8 %v1360
    %v1362 = vlaneseq
    %v1363 = vshrl.u32 %v1362, 7
    %v1364 = vsub.s32 %v1361, %v1363
    %v1365 = vrot.slane %v1351, %v1364
    %v1366 = vcombine.low %v1358, %v1365
    %v1367 = vcombine.low %v112, %v111
    %v1368 = vcombine.low %v345, %v128
    %v1370 = vunpack.c.l.s4 1983009808
    %v1371 = vunpack.c.0.s8 %v1370
    %v1372 = vlaneseq
    %v1373 = vshrl.u32 %v1372, 7
    %v1374 = vsub.s32 %v1371, %v1373
    %v1375 = vrot.slane %v1367, %v1374
    %v1377 = vunpack.c.l.s4 1983009808
    %v1378 = vunpack.c.0.s8 %v1377
    %v1379 = vlaneseq
    %v1380 = vshrl.u32 %v1379, 7
    %v1381 = vsub.s32 %v1378, %v1380
    %v1382 = vrot.slane %v1368, %v1381
    %v1383 = vcombine.low %v1375, %v1382
    %v1384 = vcombine.low %v127, %v129
    %v1385 = vcombine.low %v137, %v145
    %v1387 = vunpack.c.l.s4 1983009808
    %v1388 = vunpack.c.0.s8 %v1387
    %v1389 = vlaneseq
    %v1390 = vshrl.u32 %v1389, 7
    %v1391 = vsub.s32 %v1388, %v1390
    %v1392 = vrot.slane %v1384, %v1391
    %v1394 = vunpack.c.l.s4 1983009808
    %v1395 = vunpack.c.0.s8 %v1394
    %v1396 = vlaneseq
    %v1397 = vshrl.u32 %v1396, 7
    %v1398 = vsub.s32 %v1395, %v1397
    %v1399 = vrot.slane %v1385, %v1398
    %v1400 = vcombine.low %v1392, %v1399
    %v1401 = vcombine.low %v144, %v346
    %v1402 = vcombine.low %v161, %v160
    %v1404 = vunpack.c.l.s4 1983009808
    %v1405 = vunpack.c.0.s8 %v1404
    %v1406 = vlaneseq
    %v1407 = vshrl.u32 %v1406, 7
    %v1408 = vsub.s32 %v1405, %v1407
    %v1409 = vrot.slane %v1401, %v1408
    %v1411 = vunpack.c.l.s4 1983009808
    %v1412 = vunpack.c.0.s8 %v1411
    %v1413 = vlaneseq
    %v1414 = vshrl.u32 %v1413, 7
    %v1415 = vsub.s32 %v1412, %v1414
    %v1416 = vrot.slane %v1402, %v1415
    %v1417 = vcombine.low %v1409, %v1416
    %v1418 = vcombine.low %v162, %v170
    %v1419 = vcombine.low %v178, %v177
    %v1421 = vunpack.c.l.s4 1983009808
    %v1422 = vunpack.c.0.s8 %v1421
    %v1423 = vlaneseq
    %v1424 = vshrl.u32 %v1423, 7
    %v1425 = vsub.s32 %v1422, %v1424
    %v1426 = vrot.slane %v1418, %v1425
    %v1428 = vunpack.c.l.s4 1983009808
    %v1429 = vunpack.c.0.s8 %v1428
    %v1430 = vlaneseq
    %v1431 = vshrl.u32 %v1430, 7
    %v1432 = vsub.s32 %v1429, %v1431
    %v1433 = vrot.slane %v1419, %v1432
    %v1434 = vcombine.low %v1426, %v1433
    %v1435 = vcombine.low %v347, %v194
    %v1436 = vcombine.low %v193, %v195
    %v1438 = vunpack.c.l.s4 1983009808
    %v1439 = vunpack.c.0.s8 %v1438
    %v1440 = vlaneseq
    %v1441 = vshrl.u32 %v1440, 7
    %v1442 = vsub.s32 %v1439, %v1441
    %v1443 = vrot.slane %v1435, %v1442
    %v1445 = vunpack.c.l.s4 1983009808
    %v1446 = vunpack.c.0.s8 %v1445
    %v1447 = vlaneseq
    %v1448 = vshrl.u32 %v1447, 7
    %v1449 = vsub.s32 %v1446, %v1448
    %v1450 = vrot.slane %v1436, %v1449
    %v1451 = vcombine.low %v1443, %v1450
    %v1452 = vcombine.low %v203, %v211
    %v1453 = vcombine.low %v210, %v348
    %v1455 = vunpack.c.l.s4 1983009808
    %v1456 = vunpack.c.0.s8 %v1455
    %v1457 = vlaneseq
    %v1458 = vshrl.u32 %v1457, 7
    %v1459 = vsub.s32 %v1456, %v1458
    %v1460 = vrot.slane %v1452, %v1459
    %v1462 = vunpack.c.l.s4 1983009808
    %v1463 = vunpack.c.0.s8 %v1462
    %v1464 = vlaneseq
    %v1465 = vshrl.u32 %v1464, 7
    %v1466 = vsub.s32 %v1463, %v1465
    %v1467 = vrot.slane %v1453, %v1466
    %v1468 = vcombine.low %v1460, %v1467
    %v1469 = vcombine.low %v227, %v226
    %v1470 = vcombine.low %v228, %v236
    %v1472 = vunpack.c.l.s4 1983009808
    %v1473 = vunpack.c.0.s8 %v1472
    %v1474 = vlaneseq
    %v1475 = vshrl.u32 %v1474, 7
    %v1476 = vsub.s32 %v1473, %v1475
    %v1477 = vrot.slane %v1469, %v1476
    %v1479 = vunpack.c.l.s4 1983009808
    %v1480 = vunpack.c.0.s8 %v1479
    %v1481 = vlaneseq
    %v1482 = vshrl.u32 %v1481, 7
    %v1483 = vsub.s32 %v1480, %v1482
    %v1484 = vrot.slane %v1470, %v1483
    %v1485 = vcombine.low %v1477, %v1484
    %v1486 = vcombine.low %v244, %v243
    %v1487 = vcombine.low %v349, %v260
    %v1489 = vunpack.c.l.s4 1983009808
    %v1490 = vunpack.c.0.s8 %v1489
    %v1491 = vlaneseq
    %v1492 = vshrl.u32 %v1491, 7
    %v1493 = vsub.s32 %v1490, %v1492
    %v1494 = vrot.slane %v1486, %v1493
    %v1496 = vunpack.c.l.s4 1983009808
    %v1497 = vunpack.c.0.s8 %v1496
    %v1498 = vlaneseq
    %v1499 = vshrl.u32 %v1498, 7
    %v1500 = vsub.s32 %v1497, %v1499
    %v1501 = vrot.slane %v1487, %v1500
    %v1502 = vcombine.low %v1494, %v1501
    %v1503 = vcombine.low %v259, %v261
    %v1504 = vcombine.low %v269, %v277
    %v1506 = vunpack.c.l.s4 1983009808
    %v1507 = vunpack.c.0.s8 %v1506
    %v1508 = vlaneseq
    %v1509 = vshrl.u32 %v1508, 7
    %v1510 = vsub.s32 %v1507, %v1509
    %v1511 = vrot.slane %v1503, %v1510
    %v1513 = vunpack.c.l.s4 1983009808
    %v1514 = vunpack.c.0.s8 %v1513
    %v1515 = vlaneseq
    %v1516 = vshrl.u32 %v1515, 7
    %v1517 = vsub.s32 %v1514, %v1516
    %v1518 = vrot.slane %v1504, %v1517
    %v1519 = vcombine.low %v1511, %v1518
    %v1520 = vcombine.low %v276, %v350
    %v1521 = vcombine.low %v293, %v292
    %v1523 = vunpack.c.l.s4 1983009808
    %v1524 = vunpack.c.0.s8 %v1523
    %v1525 = vlaneseq
    %v1526 = vshrl.u32 %v1525, 7
    %v1527 = vsub.s32 %v1524, %v1526
    %v1528 = vrot.slane %v1520, %v1527
    %v1530 = vunpack.c.l.s4 1983009808
    %v1531 = vunpack.c.0.s8 %v1530
    %v1532 = vlaneseq
    %v1533 = vshrl.u32 %v1532, 7
    %v1534 = vsub.s32 %v1531, %v1533
    %v1535 = vrot.slane %v1521, %v1534
    %v1536 = vcombine.low %v1528, %v1535
    %v1537 = vcombine.low %v294, %v302
    %v1538 = vcombine.low %v310, %v309
    %v1540 = vunpack.c.l.s4 1983009808
    %v1541 = vunpack.c.0.s8 %v1540
    %v1542 = vlaneseq
    %v1543 = vshrl.u32 %v1542, 7
    %v1544 = vsub.s32 %v1541, %v1543
    %v1545 = vrot.slane %v1537, %v1544
    %v1547 = vunpack.c.l.s4 1983009808
    %v1548 = vunpack.c.0.s8 %v1547
    %v1549 = vlaneseq
    %v1550 = vshrl.u32 %v1549, 7
    %v1551 = vsub.s32 %v1548, %v1550
    %v1552 = vrot.slane %v1538, %v1551
    %v1553 = vcombine.low %v1545, %v1552
    %v1554 = vcombine.low %v351, %v326
    %v1555 = vcombine.low %v325, %v327
    %v1557 = vunpack.c.l.s4 1983009808
    %v1558 = vunpack.c.0.s8 %v1557
    %v1559 = vlaneseq
    %v1560 = vshrl.u32 %v1559, 7
    %v1561 = vsub.s32 %v1558, %v1560
    %v1562 = vrot.slane %v1554, %v1561
    %v1564 = vunpack.c.l.s4 1983009808
    %v1565 = vunpack.c.0.s8 %v1564
    %v1566 = vlaneseq
    %v1567 = vshrl.u32 %v1566, 7
    %v1568 = vsub.s32 %v1565, %v1567
    %v1569 = vrot.slane %v1555, %v1568
    %v1570 = vcombine.low %v1562, %v1569
    %v1571 = vcombine.low %v335, %v343
    %v1572 = vcombine.low %v342, %v352
    %v1574 = vunpack.c.l.s4 1983009808
    %v1575 = vunpack.c.0.s8 %v1574
    %v1576 = vlaneseq
    %v1577 = vshrl.u32 %v1576, 7
    %v1578 = vsub.s32 %v1575, %v1577
    %v1579 = vrot.slane %v1571, %v1578
    %v1581 = vunpack.c.l.s4 1983009808
    %v1582 = vunpack.c.0.s8 %v1581
    %v1583 = vlaneseq
    %v1584 = vshrl.u32 %v1583, 7
    %v1585 = vsub.s32 %v1582, %v1584
    %v1586 = vrot.slane %v1572, %v1585
    %v1587 = vcombine.low %v1579, %v1586
    %v1588 = vsel %vm776, %v1366, 0
    %v1590 = vsel %vm776, %v1383, 0
    %v1592 = vsel %vm776, %v1400, 0
    %v1594 = vsel %vm776, %v1417, 0
    %v1596 = vsel %vm776, %v1434, 0
    %v1598 = vsel %vm776, %v1451, 0
    %v1600 = vsel %vm776, %v1468, 0
    %v1602 = vsel %vm776, %v1485, 0
    %v1604 = vsel %vm776, %v1502, 0
    %v1606 = vsel %vm776, %v1519, 0
    %v1608 = vsel %vm776, %v1536, 0
    %v1610 = vsel %vm776, %v1553, 0
    %v1612 = vsel %vm776, %v1570, 0
    %v1614 = vsel %vm776, %v1587, 0
    %v1617 = vsel %vm805, %v1349, 0
    %1619 = vmatprep.subr.mxu0 0.0
    %1620 = vmatpush1.msra.mxu0 0.0
    %1621 = vmatprep.subr.mxu0 0.0
    %1622 = vmatpush1.msra.mxu0 0.0
    %1623 = vmatprep.subr.mxu0 0.0
    %1624 = vmatpush1.msra.mxu0 0.0
    %1625 = vmatprep.subr.mxu0 0.0
    %1626 = vmatpush1.msra.mxu0 0.0
    %1627 = vmatprep.subr.mxu0 0.0
    %1628 = vmatpush1.msra.mxu0 0.0
    %1629 = vmatprep.subr.mxu0 0.0
    %1630 = vmatpush1.msra.mxu0 0.0
    %1631 = vmatprep.subr.mxu0 0.0
    %1632 = vmatpush1.msra.mxu0 0.0
    %1633 = vmatprep.subr.mxu0 0.0
    %1634 = vmatpush1.msra.mxu0 0.0
    %1635 = vmatprep.subr.mxu0 0.0
    %1636 = vmatpush1.msra.mxu0 0.0
    %1637 = vmatprep.subr.mxu0 0.0
    %1638 = vmatpush1.msra.mxu0 0.0
    %1639 = vmatprep.subr.mxu0 0.0
    %1640 = vmatpush1.msra.mxu0 0.0
    %1641 = vmatprep.subr.mxu0 0.0
    %1642 = vmatpush1.msra.mxu0 0.0
    %1643 = vmatprep.subr.mxu0 0.0
    %1644 = vmatpush1.msra.mxu0 0.0
    %1645 = vmatprep.subr.mxu0 0.0
    %1646 = vmatpush1.msra.mxu0 0.0
    %1647 = vmatprep.subr.mxu0 0.0
    %1648 = vmatpush1.msra.mxu0 0.0
    %1649 = vmatprep.subr.mxu0 0.0
    %1650 = vmatpush1.msra.mxu0 %v1617
    %1651 = vmatprep.subr.mxu0 0.0
    %1652 = vmatpush2.msra.mxu0 0.0
    %1653 = vmatprep.subr.mxu0 0.0
    %1654 = vmatpush2.msra.mxu0 0.0
    %1655 = vmatprep.subr.mxu0 0.0
    %1656 = vmatpush2.msra.mxu0 0.0
    %1657 = vmatprep.subr.mxu0 0.0
    %1658 = vmatpush2.msra.mxu0 0.0
    %1659 = vmatprep.subr.mxu0 0.0
    %1660 = vmatpush2.msra.mxu0 0.0
    %1661 = vmatprep.subr.mxu0 0.0
    %1662 = vmatpush2.msra.mxu0 0.0
    %1663 = vmatprep.subr.mxu0 0.0
    %1664 = vmatpush2.msra.mxu0 0.0
    %1665 = vmatprep.subr.mxu0 0.0
    %1666 = vmatpush2.msra.mxu0 0.0
    %1667 = vmatprep.subr.mxu0 0.0
    %1668 = vmatpush2.msra.mxu0 0.0
    %1669 = vmatprep.subr.mxu0 0.0
    %1670 = vmatpush2.msra.mxu0 0.0
    %1671 = vmatprep.subr.mxu0 0.0
    %1672 = vmatpush2.msra.mxu0 0.0
    %1673 = vmatprep.subr.mxu0 0.0
    %1674 = vmatpush2.msra.mxu0 0.0
    %1675 = vmatprep.subr.mxu0 0.0
    %1676 = vmatpush2.msra.mxu0 0.0
    %1677 = vmatprep.subr.mxu0 0.0
    %1678 = vmatpush2.msra.mxu0 0.0
    %1679 = vmatprep.subr.mxu0 0.0
    %1680 = vmatpush2.msra.mxu0 0.0
    %1681 = vmatprep.subr.mxu0 0.0
    %1682 = vmatpush2.msra.mxu0 0.0
    %1683 = vmatprep.mubr.f32.mxu0 0.0
    %1684 = vmatmul.mubr.f32.gmra.mxu0 %v1588
    %v1685 = vpop.f32.mrf.mxu0
    %v1686 = vadd.f32 0.0, %v1685
    %v1687 = vpop.f32.mrf.mxu0
    %1688 = vmatprep.mubr.f32.mxu0 0.0
    %1689 = vmatmul.mubr.f32.gmra.mxu0 %v1590
    %v1690 = vpop.f32.mrf.mxu0
    %v1691 = vadd.f32 0.0, %v1690
    %v1692 = vpop.f32.mrf.mxu0
    %1693 = vmatprep.mubr.f32.mxu0 0.0
    %1694 = vmatmul.mubr.f32.gmra.mxu0 %v1592
    %v1695 = vpop.f32.mrf.mxu0
    %v1696 = vadd.f32 0.0, %v1695
    %v1697 = vpop.f32.mrf.mxu0
    %1698 = vmatprep.mubr.f32.mxu0 0.0
    %1699 = vmatmul.mubr.f32.gmra.mxu0 %v1594
    %v1700 = vpop.f32.mrf.mxu0
    %v1701 = vadd.f32 0.0, %v1700
    %v1702 = vpop.f32.mrf.mxu0
    %1703 = vmatprep.mubr.f32.mxu0 0.0
    %1704 = vmatmul.mubr.f32.gmra.mxu0 %v1596
    %v1705 = vpop.f32.mrf.mxu0
    %v1706 = vadd.f32 0.0, %v1705
    %v1707 = vpop.f32.mrf.mxu0
    %1708 = vmatprep.mubr.f32.mxu0 0.0
    %1709 = vmatmul.mubr.f32.gmra.mxu0 %v1598
    %v1710 = vpop.f32.mrf.mxu0
    %v1711 = vadd.f32 0.0, %v1710
    %v1712 = vpop.f32.mrf.mxu0
    %1713 = vmatprep.mubr.f32.mxu0 0.0
    %1714 = vmatmul.mubr.f32.gmra.mxu0 %v1600
    %v1715 = vpop.f32.mrf.mxu0
    %v1716 = vadd.f32 0.0, %v1715
    %v1717 = vpop.f32.mrf.mxu0
    %1718 = vmatprep.mubr.f32.mxu0 0.0
    %1719 = vmatmul.mubr.f32.gmra.mxu0 %v1602
    %v1720 = vpop.f32.mrf.mxu0
    %v1721 = vadd.f32 0.0, %v1720
    %v1722 = vpop.f32.mrf.mxu0
    %1723 = vmatprep.mubr.f32.mxu0 0.0
    %1724 = vmatmul.mubr.f32.gmra.mxu0 %v1604
    %v1725 = vpop.f32.mrf.mxu0
    %v1726 = vadd.f32 0.0, %v1725
    %v1727 = vpop.f32.mrf.mxu0
    %1728 = vmatprep.mubr.f32.mxu0 0.0
    %1729 = vmatmul.mubr.f32.gmra.mxu0 %v1606
    %v1730 = vpop.f32.mrf.mxu0
    %v1731 = vadd.f32 0.0, %v1730
    %v1732 = vpop.f32.mrf.mxu0
    %1733 = vmatprep.mubr.f32.mxu0 0.0
    %1734 = vmatmul.mubr.f32.gmra.mxu0 %v1608
    %v1735 = vpop.f32.mrf.mxu0
    %v1736 = vadd.f32 0.0, %v1735
    %v1737 = vpop.f32.mrf.mxu0
    %1738 = vmatprep.mubr.f32.mxu0 0.0
    %1739 = vmatmul.mubr.f32.gmra.mxu0 %v1610
    %v1740 = vpop.f32.mrf.mxu0
    %v1741 = vadd.f32 0.0, %v1740
    %v1742 = vpop.f32.mrf.mxu0
    %1743 = vmatprep.mubr.f32.mxu0 0.0
    %1744 = vmatmul.mubr.f32.gmra.mxu0 %v1612
    %v1745 = vpop.f32.mrf.mxu0
    %v1746 = vadd.f32 0.0, %v1745
    %v1747 = vpop.f32.mrf.mxu0
    %1748 = vmatprep.mubr.f32.mxu0 0.0
    %1749 = vmatmul.mubr.f32.gmra.mxu0 %v1614
    %v1750 = vpop.f32.mrf.mxu0
    %v1751 = vadd.f32 0.0, %v1750
    %v1752 = vpop.f32.mrf.mxu0
    %1753 = vdwg.mxu0
    %v1754 = vadd.f32 %v1280, %v1686
    %v1755 = vadd.f32 %v1285, %v1691
    %v1756 = vadd.f32 %v1290, %v1696
    %v1757 = vadd.f32 %v1295, %v1701
    %v1758 = vadd.f32 %v1300, %v1706
    %v1759 = vadd.f32 %v1305, %v1711
    %v1760 = vadd.f32 %v1310, %v1716
    %v1761 = vadd.f32 %v1315, %v1721
    %v1762 = vadd.f32 %v1320, %v1726
    %v1763 = vadd.f32 %v1325, %v1731
    %v1764 = vadd.f32 %v1330, %v1736
    %v1765 = vadd.f32 %v1335, %v1741
    %v1766 = vadd.f32 %v1340, %v1746
    %v1767 = vadd.f32 %v1345, %v1751
    %v1768 = vld [vmem:[%s2] sm:$0x1]
    %v1770 = vlaneseq
    %v1771 = vshrl.u32 %v1770, 7
    %v1772 = vsub.s32 0, %v1771
    %v1773 = vrot.slane %v1768, %v1772
    %v1775 = vadd.f32 %v1754, %v1773
    %v1776 = vadd.f32 %v1755, %v1773
    %v1777 = vadd.f32 %v1756, %v1773
    %v1778 = vadd.f32 %v1757, %v1773
    %v1779 = vadd.f32 %v1758, %v1773
    %v1780 = vadd.f32 %v1759, %v1773
    %v1781 = vadd.f32 %v1760, %v1773
    %v1782 = vadd.f32 %v1761, %v1773
    %v1783 = vadd.f32 %v1762, %v1773
    %v1784 = vadd.f32 %v1763, %v1773
    %v1785 = vadd.f32 %v1764, %v1773
    %v1786 = vadd.f32 %v1765, %v1773
    %v1787 = vadd.f32 %v1766, %v1773
    %v1788 = vadd.f32 %v1767, %v1773
    %v1789 = vtanh.pop %v1775
    %v1790 = vtanh.pop %v1776
    %v1791 = vtanh.pop %v1777
    %v1792 = vtanh.pop %v1778
    %v1793 = vtanh.pop %v1779
    %v1794 = vtanh.pop %v1780
    %v1795 = vtanh.pop %v1781
    %v1796 = vtanh.pop %v1782
    %v1797 = vtanh.pop %v1783
    %v1798 = vtanh.pop %v1784
    %v1799 = vtanh.pop %v1785
    %v1800 = vtanh.pop %v1786
    %v1801 = vtanh.pop %v1787
    %v1802 = vtanh.pop %v1788
    %v1817 = vcombine.high %v1789, %v1789
    %v1819 = vunpack.c.l.s4 1983009808
    %v1820 = vunpack.c.0.s8 %v1819
    %v1821 = vlaneseq
    %v1822 = vshrl.u32 %v1821, 7
    %v1823 = vsub.s32 %v1820, %v1822
    %v1824 = vrot.slane %v1789, %v1823
    %v1826 = vunpack.c.l.s4 1983009808
    %v1827 = vunpack.c.0.s8 %v1826
    %v1828 = vlaneseq
    %v1829 = vshrl.u32 %v1828, 7
    %v1830 = vsub.s32 %v1827, %v1829
    %v1831 = vrot.slane %v1817, %v1830
    %v1832 = vcombine.high %v1824, %v1824
    %v1833 = vcombine.high %v1831, %v1831
    %v1834 = vcombine.high %v1790, %v1790
    %v1836 = vunpack.c.l.s4 1983009808
    %v1837 = vunpack.c.0.s8 %v1836
    %v1838 = vlaneseq
    %v1839 = vshrl.u32 %v1838, 7
    %v1840 = vsub.s32 %v1837, %v1839
    %v1841 = vrot.slane %v1790, %v1840
    %v1843 = vunpack.c.l.s4 1983009808
    %v1844 = vunpack.c.0.s8 %v1843
    %v1845 = vlaneseq
    %v1846 = vshrl.u32 %v1845, 7
    %v1847 = vsub.s32 %v1844, %v1846
    %v1848 = vrot.slane %v1834, %v1847
    %v1849 = vcombine.high %v1841, %v1841
    %v1850 = vcombine.high %v1848, %v1848
    %v1851 = vcombine.high %v1791, %v1791
    %v1853 = vunpack.c.l.s4 1983009808
    %v1854 = vunpack.c.0.s8 %v1853
    %v1855 = vlaneseq
    %v1856 = vshrl.u32 %v1855, 7
    %v1857 = vsub.s32 %v1854, %v1856
    %v1858 = vrot.slane %v1791, %v1857
    %v1860 = vunpack.c.l.s4 1983009808
    %v1861 = vunpack.c.0.s8 %v1860
    %v1862 = vlaneseq
    %v1863 = vshrl.u32 %v1862, 7
    %v1864 = vsub.s32 %v1861, %v1863
    %v1865 = vrot.slane %v1851, %v1864
    %v1866 = vcombine.high %v1858, %v1858
    %v1867 = vcombine.high %v1865, %v1865
    %v1868 = vcombine.high %v1792, %v1792
    %v1870 = vunpack.c.l.s4 1983009808
    %v1871 = vunpack.c.0.s8 %v1870
    %v1872 = vlaneseq
    %v1873 = vshrl.u32 %v1872, 7
    %v1874 = vsub.s32 %v1871, %v1873
    %v1875 = vrot.slane %v1792, %v1874
    %v1877 = vunpack.c.l.s4 1983009808
    %v1878 = vunpack.c.0.s8 %v1877
    %v1879 = vlaneseq
    %v1880 = vshrl.u32 %v1879, 7
    %v1881 = vsub.s32 %v1878, %v1880
    %v1882 = vrot.slane %v1868, %v1881
    %v1883 = vcombine.high %v1875, %v1875
    %v1884 = vcombine.high %v1882, %v1882
    %v1885 = vcombine.high %v1793, %v1793
    %v1887 = vunpack.c.l.s4 1983009808
    %v1888 = vunpack.c.0.s8 %v1887
    %v1889 = vlaneseq
    %v1890 = vshrl.u32 %v1889, 7
    %v1891 = vsub.s32 %v1888, %v1890
    %v1892 = vrot.slane %v1793, %v1891
    %v1894 = vunpack.c.l.s4 1983009808
    %v1895 = vunpack.c.0.s8 %v1894
    %v1896 = vlaneseq
    %v1897 = vshrl.u32 %v1896, 7
    %v1898 = vsub.s32 %v1895, %v1897
    %v1899 = vrot.slane %v1885, %v1898
    %v1900 = vcombine.high %v1892, %v1892
    %v1901 = vcombine.high %v1899, %v1899
    %v1902 = vcombine.high %v1794, %v1794
    %v1904 = vunpack.c.l.s4 1983009808
    %v1905 = vunpack.c.0.s8 %v1904
    %v1906 = vlaneseq
    %v1907 = vshrl.u32 %v1906, 7
    %v1908 = vsub.s32 %v1905, %v1907
    %v1909 = vrot.slane %v1794, %v1908
    %v1911 = vunpack.c.l.s4 1983009808
    %v1912 = vunpack.c.0.s8 %v1911
    %v1913 = vlaneseq
    %v1914 = vshrl.u32 %v1913, 7
    %v1915 = vsub.s32 %v1912, %v1914
    %v1916 = vrot.slane %v1902, %v1915
    %v1917 = vcombine.high %v1909, %v1909
    %v1918 = vcombine.high %v1916, %v1916
    %v1919 = vcombine.high %v1795, %v1795
    %v1921 = vunpack.c.l.s4 1983009808
    %v1922 = vunpack.c.0.s8 %v1921
    %v1923 = vlaneseq
    %v1924 = vshrl.u32 %v1923, 7
    %v1925 = vsub.s32 %v1922, %v1924
    %v1926 = vrot.slane %v1795, %v1925
    %v1928 = vunpack.c.l.s4 1983009808
    %v1929 = vunpack.c.0.s8 %v1928
    %v1930 = vlaneseq
    %v1931 = vshrl.u32 %v1930, 7
    %v1932 = vsub.s32 %v1929, %v1931
    %v1933 = vrot.slane %v1919, %v1932
    %v1934 = vcombine.high %v1926, %v1926
    %v1935 = vcombine.high %v1933, %v1933
    %v1936 = vcombine.high %v1796, %v1796
    %v1938 = vunpack.c.l.s4 1983009808
    %v1939 = vunpack.c.0.s8 %v1938
    %v1940 = vlaneseq
    %v1941 = vshrl.u32 %v1940, 7
    %v1942 = vsub.s32 %v1939, %v1941
    %v1943 = vrot.slane %v1796, %v1942
    %v1945 = vunpack.c.l.s4 1983009808
    %v1946 = vunpack.c.0.s8 %v1945
    %v1947 = vlaneseq
    %v1948 = vshrl.u32 %v1947, 7
    %v1949 = vsub.s32 %v1946, %v1948
    %v1950 = vrot.slane %v1936, %v1949
    %v1951 = vcombine.high %v1943, %v1943
    %v1952 = vcombine.high %v1950, %v1950
    %v1953 = vcombine.high %v1797, %v1797
    %v1955 = vunpack.c.l.s4 1983009808
    %v1956 = vunpack.c.0.s8 %v1955
    %v1957 = vlaneseq
    %v1958 = vshrl.u32 %v1957, 7
    %v1959 = vsub.s32 %v1956, %v1958
    %v1960 = vrot.slane %v1797, %v1959
    %v1962 = vunpack.c.l.s4 1983009808
    %v1963 = vunpack.c.0.s8 %v1962
    %v1964 = vlaneseq
    %v1965 = vshrl.u32 %v1964, 7
    %v1966 = vsub.s32 %v1963, %v1965
    %v1967 = vrot.slane %v1953, %v1966
    %v1968 = vcombine.high %v1960, %v1960
    %v1969 = vcombine.high %v1967, %v1967
    %v1970 = vcombine.high %v1798, %v1798
    %v1972 = vunpack.c.l.s4 1983009808
    %v1973 = vunpack.c.0.s8 %v1972
    %v1974 = vlaneseq
    %v1975 = vshrl.u32 %v1974, 7
    %v1976 = vsub.s32 %v1973, %v1975
    %v1977 = vrot.slane %v1798, %v1976
    %v1979 = vunpack.c.l.s4 1983009808
    %v1980 = vunpack.c.0.s8 %v1979
    %v1981 = vlaneseq
    %v1982 = vshrl.u32 %v1981, 7
    %v1983 = vsub.s32 %v1980, %v1982
    %v1984 = vrot.slane %v1970, %v1983
    %v1985 = vcombine.high %v1977, %v1977
    %v1986 = vcombine.high %v1984, %v1984
    %v1987 = vcombine.high %v1799, %v1799
    %v1989 = vunpack.c.l.s4 1983009808
    %v1990 = vunpack.c.0.s8 %v1989
    %v1991 = vlaneseq
    %v1992 = vshrl.u32 %v1991, 7
    %v1993 = vsub.s32 %v1990, %v1992
    %v1994 = vrot.slane %v1799, %v1993
    %v1996 = vunpack.c.l.s4 1983009808
    %v1997 = vunpack.c.0.s8 %v1996
    %v1998 = vlaneseq
    %v1999 = vshrl.u32 %v1998, 7
    %v2000 = vsub.s32 %v1997, %v1999
    %v2001 = vrot.slane %v1987, %v2000
    %v2002 = vcombine.high %v1994, %v1994
    %v2003 = vcombine.high %v2001, %v2001
    %v2004 = vcombine.high %v1800, %v1800
    %v2006 = vunpack.c.l.s4 1983009808
    %v2007 = vunpack.c.0.s8 %v2006
    %v2008 = vlaneseq
    %v2009 = vshrl.u32 %v2008, 7
    %v2010 = vsub.s32 %v2007, %v2009
    %v2011 = vrot.slane %v1800, %v2010
    %v2013 = vunpack.c.l.s4 1983009808
    %v2014 = vunpack.c.0.s8 %v2013
    %v2015 = vlaneseq
    %v2016 = vshrl.u32 %v2015, 7
    %v2017 = vsub.s32 %v2014, %v2016
    %v2018 = vrot.slane %v2004, %v2017
    %v2019 = vcombine.high %v2011, %v2011
    %v2020 = vcombine.high %v2018, %v2018
    %v2021 = vcombine.high %v1801, %v1801
    %v2023 = vunpack.c.l.s4 1983009808
    %v2024 = vunpack.c.0.s8 %v2023
    %v2025 = vlaneseq
    %v2026 = vshrl.u32 %v2025, 7
    %v2027 = vsub.s32 %v2024, %v2026
    %v2028 = vrot.slane %v1801, %v2027
    %v2030 = vunpack.c.l.s4 1983009808
    %v2031 = vunpack.c.0.s8 %v2030
    %v2032 = vlaneseq
    %v2033 = vshrl.u32 %v2032, 7
    %v2034 = vsub.s32 %v2031, %v2033
    %v2035 = vrot.slane %v2021, %v2034
    %v2036 = vcombine.high %v2028, %v2028
    %v2037 = vcombine.high %v2035, %v2035
    %v2038 = vcombine.high %v1802, %v1802
    %v2040 = vunpack.c.l.s4 1983009808
    %v2041 = vunpack.c.0.s8 %v2040
    %v2042 = vlaneseq
    %v2043 = vshrl.u32 %v2042, 7
    %v2044 = vsub.s32 %v2041, %v2043
    %v2045 = vrot.slane %v1802, %v2044
    %v2047 = vunpack.c.l.s4 1983009808
    %v2048 = vunpack.c.0.s8 %v2047
    %v2049 = vlaneseq
    %v2050 = vshrl.u32 %v2049, 7
    %v2051 = vsub.s32 %v2048, %v2050
    %v2052 = vrot.slane %v2038, %v2051
    %v2053 = vcombine.high %v2045, %v2045
    %v2054 = vcombine.high %v2052, %v2052
    %v2055 = vld [vmem:[%s3] sm:$0xff]
    %v2056 = vld [vmem:[%s3 + $0x8] sm:$0xff]
    %v2057 = vld [vmem:[%s3 + $0x10] sm:$0xff]
    %v2058 = vld [vmem:[%s3 + $0x18] sm:$0xff]
    %v2059 = vld [vmem:[%s3 + $0x20] sm:$0xff]
    %v2060 = vld [vmem:[%s3 + $0x28] sm:$0xff]
    %v2061 = vld [vmem:[%s3 + $0x30] sm:$0xff]
    %v2062 = vld [vmem:[%s3 + $0x38] sm:$0xff]
    %v2063 = vrot.slane %v1824, 7
    %v2064 = vrot.slane %v2063, 2
    %v2065 = vrot.slane %v1832, 7
    %v2066 = vsel %vm359, %v2064, %v2065
    %v2067 = vrot.slane %v2065, 2
    %v2068 = vrot.slane %v1831, 7
    %v2069 = vsel %vm359, %v2067, %v2068
    %v2070 = vrot.slane %v2068, 2
    %v2071 = vrot.slane %v1833, 7
    %v2072 = vsel %vm359, %v2070, %v2071
    %v2073 = vrot.slane %v2071, 2
    %v2074 = vrot.slane %v1841, 7
    %v2075 = vsel %vm359, %v2073, %v2074
    %v2076 = vrot.slane %v2074, 2
    %v2077 = vrot.slane %v1849, 7
    %v2078 = vsel %vm359, %v2076, %v2077
    %v2079 = vrot.slane %v2077, 2
    %v2080 = vrot.slane %v1848, 7
    %v2081 = vsel %vm359, %v2079, %v2080
    %v2082 = vrot.slane %v1850, 7
    %v2083 = vrot.slane %v2082, 2
    %v2084 = vrot.slane %v1858, 7
    %v2085 = vsel %vm359, %v2083, %v2084
    %v2086 = vrot.slane %v2084, 2
    %v2087 = vrot.slane %v1866, 7
    %v2088 = vsel %vm359, %v2086, %v2087
    %v2089 = vrot.slane %v2087, 2
    %v2090 = vrot.slane %v1865, 7
    %v2091 = vsel %vm359, %v2089, %v2090
    %v2092 = vrot.slane %v2090, 2
    %v2093 = vrot.slane %v1867, 7
    %v2094 = vsel %vm359, %v2092, %v2093
    %v2095 = vrot.slane %v2093, 2
    %v2096 = vrot.slane %v1875, 7
    %v2097 = vsel %vm359, %v2095, %v2096
    %v2098 = vrot.slane %v2096, 2
    %v2099 = vrot.slane %v1883, 7
    %v2100 = vsel %vm359, %v2098, %v2099
    %v2101 = vrot.slane %v1882, 7
    %v2102 = vrot.slane %v2101, 2
    %v2103 = vrot.slane %v1884, 7
    %v2104 = vsel %vm359, %v2102, %v2103
    %v2105 = vrot.slane %v2103, 2
    %v2106 = vrot.slane %v1892, 7
    %v2107 = vsel %vm359, %v2105, %v2106
    %v2108 = vrot.slane %v2106, 2
    %v2109 = vrot.slane %v1900, 7
    %v2110 = vsel %vm359, %v2108, %v2109
    %v2111 = vrot.slane %v2109, 2
    %v2112 = vrot.slane %v1899, 7
    %v2113 = vsel %vm359, %v2111, %v2112
    %v2114 = vrot.slane %v2112, 2
    %v2115 = vrot.slane %v1901, 7
    %v2116 = vsel %vm359, %v2114, %v2115
    %v2117 = vrot.slane %v2115, 2
    %v2118 = vrot.slane %v1909, 7
    %v2119 = vsel %vm359, %v2117, %v2118
    %v2120 = vrot.slane %v1917, 7
    %v2121 = vrot.slane %v2120, 2
    %v2122 = vrot.slane %v1916, 7
    %v2123 = vsel %vm359, %v2121, %v2122
    %v2124 = vrot.slane %v2122, 2
    %v2125 = vrot.slane %v1918, 7
    %v2126 = vsel %vm359, %v2124, %v2125
    %v2127 = vrot.slane %v2125, 2
    %v2128 = vrot.slane %v1926, 7
    %v2129 = vsel %vm359, %v2127, %v2128
    %v2130 = vrot.slane %v2128, 2
    %v2131 = vrot.slane %v1934, 7
    %v2132 = vsel %vm359, %v2130, %v2131
    %v2133 = vrot.slane %v2131, 2
    %v2134 = vrot.slane %v1933, 7
    %v2135 = vsel %vm359, %v2133, %v2134
    %v2136 = vrot.slane %v2134, 2
    %v2137 = vrot.slane %v1935, 7
    %v2138 = vsel %vm359, %v2136, %v2137
    %v2139 = vrot.slane %v1943, 7
    %v2140 = vrot.slane %v2139, 2
    %v2141 = vrot.slane %v1951, 7
    %v2142 = vsel %vm359, %v2140, %v2141
    %v2143 = vrot.slane %v2141, 2
    %v2144 = vrot.slane %v1950, 7
    %v2145 = vsel %vm359, %v2143, %v2144
    %v2146 = vrot.slane %v2144, 2
    %v2147 = vrot.slane %v1952, 7
    %v2148 = vsel %vm359, %v2146, %v2147
    %v2149 = vrot.slane %v2147, 2
    %v2150 = vrot.slane %v1960, 7
    %v2151 = vsel %vm359, %v2149, %v2150
    %v2152 = vrot.slane %v2150, 2
    %v2153 = vrot.slane %v1968, 7
    %v2154 = vsel %vm359, %v2152, %v2153
    %v2155 = vrot.slane %v2153, 2
    %v2156 = vrot.slane %v1967, 7
    %v2157 = vsel %vm359, %v2155, %v2156
    %v2158 = vrot.slane %v1969, 7
    %v2159 = vrot.slane %v2158, 2
    %v2160 = vrot.slane %v1977, 7
    %v2161 = vsel %vm359, %v2159, %v2160
    %v2162 = vrot.slane %v2160, 2
    %v2163 = vrot.slane %v1985, 7
    %v2164 = vsel %vm359, %v2162, %v2163
    %v2165 = vrot.slane %v2163, 2
    %v2166 = vrot.slane %v1984, 7
    %v2167 = vsel %vm359, %v2165, %v2166
    %v2168 = vrot.slane %v2166, 2
    %v2169 = vrot.slane %v1986, 7
    %v2170 = vsel %vm359, %v2168, %v2169
    %v2171 = vrot.slane %v2169, 2
    %v2172 = vrot.slane %v1994, 7
    %v2173 = vsel %vm359, %v2171, %v2172
    %v2174 = vrot.slane %v2172, 2
    %v2175 = vrot.slane %v2002, 7
    %v2176 = vsel %vm359, %v2174, %v2175
    %v2177 = vrot.slane %v2001, 7
    %v2178 = vrot.slane %v2177, 2
    %v2179 = vrot.slane %v2003, 7
    %v2180 = vsel %vm359, %v2178, %v2179
    %v2181 = vrot.slane %v2179, 2
    %v2182 = vrot.slane %v2011, 7
    %v2183 = vsel %vm359, %v2181, %v2182
    %v2184 = vrot.slane %v2182, 2
    %v2185 = vrot.slane %v2019, 7
    %v2186 = vsel %vm359, %v2184, %v2185
    %v2187 = vrot.slane %v2185, 2
    %v2188 = vrot.slane %v2018, 7
    %v2189 = vsel %vm359, %v2187, %v2188
    %v2190 = vrot.slane %v2188, 2
    %v2191 = vrot.slane %v2020, 7
    %v2192 = vsel %vm359, %v2190, %v2191
    %v2193 = vrot.slane %v2191, 2
    %v2194 = vrot.slane %v2028, 7
    %v2195 = vsel %vm359, %v2193, %v2194
    %v2196 = vrot.slane %v2036, 7
    %v2197 = vrot.slane %v2196, 2
    %v2198 = vrot.slane %v2035, 7
    %v2199 = vsel %vm359, %v2197, %v2198
    %v2200 = vrot.slane %v2198, 2
    %v2201 = vrot.slane %v2037, 7
    %v2202 = vsel %vm359, %v2200, %v2201
    %v2203 = vrot.slane %v2201, 2
    %v2204 = vrot.slane %v2045, 7
    %v2205 = vsel %vm359, %v2203, %v2204
    %v2206 = vrot.slane %v2204, 2
    %v2207 = vrot.slane %v2053, 7
    %v2208 = vsel %vm359, %v2206, %v2207
    %v2209 = vrot.slane %v2207, 2
    %v2210 = vrot.slane %v2052, 7
    %v2211 = vsel %vm359, %v2209, %v2210
    %v2212 = vrot.slane %v2210, 2
    %v2213 = vrot.slane %v2054, 7
    %v2214 = vsel %vm359, %v2212, %v2213
    %s2215 = scalar_lea.vmem %s3, 64
    %v2216 = vld [vmem:[%s2215] sm:$0xff]
    %v2217 = vld [vmem:[%s2215 + $0x8] sm:$0xff]
    %v2218 = vld [vmem:[%s2215 + $0x10] sm:$0xff]
    %v2219 = vld [vmem:[%s2215 + $0x18] sm:$0xff]
    %v2220 = vld [vmem:[%s2215 + $0x20] sm:$0xff]
    %v2221 = vld [vmem:[%s2215 + $0x28] sm:$0xff]
    %v2222 = vld [vmem:[%s2215 + $0x30] sm:$0xff]
    %v2223 = vld [vmem:[%s2215 + $0x38] sm:$0xff]
    %v2224 = vcombine.low %v2066, %v2069
    %v2225 = vcombine.low %v2072, %v2075
    %v2227 = vunpack.c.l.s4 1983009808
    %v2228 = vunpack.c.0.s8 %v2227
    %v2229 = vlaneseq
    %v2230 = vshrl.u32 %v2229, 7
    %v2231 = vsub.s32 %v2228, %v2230
    %v2232 = vrot.slane %v2224, %v2231
    %v2234 = vunpack.c.l.s4 1983009808
    %v2235 = vunpack.c.0.s8 %v2234
    %v2236 = vlaneseq
    %v2237 = vshrl.u32 %v2236, 7
    %v2238 = vsub.s32 %v2235, %v2237
    %v2239 = vrot.slane %v2225, %v2238
    %v2240 = vcombine.low %v2232, %v2239
    %v2241 = vcombine.low %v2078, %v2081
    %v2242 = vcombine.low %v2085, %v2088
    %v2244 = vunpack.c.l.s4 1983009808
    %v2245 = vunpack.c.0.s8 %v2244
    %v2246 = vlaneseq
    %v2247 = vshrl.u32 %v2246, 7
    %v2248 = vsub.s32 %v2245, %v2247
    %v2249 = vrot.slane %v2241, %v2248
    %v2251 = vunpack.c.l.s4 1983009808
    %v2252 = vunpack.c.0.s8 %v2251
    %v2253 = vlaneseq
    %v2254 = vshrl.u32 %v2253, 7
    %v2255 = vsub.s32 %v2252, %v2254
    %v2256 = vrot.slane %v2242, %v2255
    %v2257 = vcombine.low %v2249, %v2256
    %v2258 = vcombine.low %v2091, %v2094
    %v2259 = vcombine.low %v2097, %v2100
    %v2261 = vunpack.c.l.s4 1983009808
    %v2262 = vunpack.c.0.s8 %v2261
    %v2263 = vlaneseq
    %v2264 = vshrl.u32 %v2263, 7
    %v2265 = vsub.s32 %v2262, %v2264
    %v2266 = vrot.slane %v2258, %v2265
    %v2268 = vunpack.c.l.s4 1983009808
    %v2269 = vunpack.c.0.s8 %v2268
    %v2270 = vlaneseq
    %v2271 = vshrl.u32 %v2270, 7
    %v2272 = vsub.s32 %v2269, %v2271
    %v2273 = vrot.slane %v2259, %v2272
    %v2274 = vcombine.low %v2266, %v2273
    %v2275 = vcombine.low %v2104, %v2107
    %v2276 = vcombine.low %v2110, %v2113
    %v2278 = vunpack.c.l.s4 1983009808
    %v2279 = vunpack.c.0.s8 %v2278
    %v2280 = vlaneseq
    %v2281 = vshrl.u32 %v2280, 7
    %v2282 = vsub.s32 %v2279, %v2281
    %v2283 = vrot.slane %v2275, %v2282
    %v2285 = vunpack.c.l.s4 1983009808
    %v2286 = vunpack.c.0.s8 %v2285
    %v2287 = vlaneseq
    %v2288 = vshrl.u32 %v2287, 7
    %v2289 = vsub.s32 %v2286, %v2288
    %v2290 = vrot.slane %v2276, %v2289
    %v2291 = vcombine.low %v2283, %v2290
    %v2292 = vcombine.low %v2116, %v2119
    %v2293 = vcombine.low %v2123, %v2126
    %v2295 = vunpack.c.l.s4 1983009808
    %v2296 = vunpack.c.0.s8 %v2295
    %v2297 = vlaneseq
    %v2298 = vshrl.u32 %v2297, 7
    %v2299 = vsub.s32 %v2296, %v2298
    %v2300 = vrot.slane %v2292, %v2299
    %v2302 = vunpack.c.l.s4 1983009808
    %v2303 = vunpack.c.0.s8 %v2302
    %v2304 = vlaneseq
    %v2305 = vshrl.u32 %v2304, 7
    %v2306 = vsub.s32 %v2303, %v2305
    %v2307 = vrot.slane %v2293, %v2306
    %v2308 = vcombine.low %v2300, %v2307
    %v2309 = vcombine.low %v2129, %v2132
    %v2310 = vcombine.low %v2135, %v2138
    %v2312 = vunpack.c.l.s4 1983009808
    %v2313 = vunpack.c.0.s8 %v2312
    %v2314 = vlaneseq
    %v2315 = vshrl.u32 %v2314, 7
    %v2316 = vsub.s32 %v2313, %v2315
    %v2317 = vrot.slane %v2309, %v2316
    %v2319 = vunpack.c.l.s4 1983009808
    %v2320 = vunpack.c.0.s8 %v2319
    %v2321 = vlaneseq
    %v2322 = vshrl.u32 %v2321, 7
    %v2323 = vsub.s32 %v2320, %v2322
    %v2324 = vrot.slane %v2310, %v2323
    %v2325 = vcombine.low %v2317, %v2324
    %v2326 = vcombine.low %v2142, %v2145
    %v2327 = vcombine.low %v2148, %v2151
    %v2329 = vunpack.c.l.s4 1983009808
    %v2330 = vunpack.c.0.s8 %v2329
    %v2331 = vlaneseq
    %v2332 = vshrl.u32 %v2331, 7
    %v2333 = vsub.s32 %v2330, %v2332
    %v2334 = vrot.slane %v2326, %v2333
    %v2336 = vunpack.c.l.s4 1983009808
    %v2337 = vunpack.c.0.s8 %v2336
    %v2338 = vlaneseq
    %v2339 = vshrl.u32 %v2338, 7
    %v2340 = vsub.s32 %v2337, %v2339
    %v2341 = vrot.slane %v2327, %v2340
    %v2342 = vcombine.low %v2334, %v2341
    %v2343 = vcombine.low %v2154, %v2157
    %v2344 = vcombine.low %v2161, %v2164
    %v2346 = vunpack.c.l.s4 1983009808
    %v2347 = vunpack.c.0.s8 %v2346
    %v2348 = vlaneseq
    %v2349 = vshrl.u32 %v2348, 7
    %v2350 = vsub.s32 %v2347, %v2349
    %v2351 = vrot.slane %v2343, %v2350
    %v2353 = vunpack.c.l.s4 1983009808
    %v2354 = vunpack.c.0.s8 %v2353
    %v2355 = vlaneseq
    %v2356 = vshrl.u32 %v2355, 7
    %v2357 = vsub.s32 %v2354, %v2356
    %v2358 = vrot.slane %v2344, %v2357
    %v2359 = vcombine.low %v2351, %v2358
    %v2360 = vcombine.low %v2167, %v2170
    %v2361 = vcombine.low %v2173, %v2176
    %v2363 = vunpack.c.l.s4 1983009808
    %v2364 = vunpack.c.0.s8 %v2363
    %v2365 = vlaneseq
    %v2366 = vshrl.u32 %v2365, 7
    %v2367 = vsub.s32 %v2364, %v2366
    %v2368 = vrot.slane %v2360, %v2367
    %v2370 = vunpack.c.l.s4 1983009808
    %v2371 = vunpack.c.0.s8 %v2370
    %v2372 = vlaneseq
    %v2373 = vshrl.u32 %v2372, 7
    %v2374 = vsub.s32 %v2371, %v2373
    %v2375 = vrot.slane %v2361, %v2374
    %v2376 = vcombine.low %v2368, %v2375
    %v2377 = vcombine.low %v2180, %v2183
    %v2378 = vcombine.low %v2186, %v2189
    %v2380 = vunpack.c.l.s4 1983009808
    %v2381 = vunpack.c.0.s8 %v2380
    %v2382 = vlaneseq
    %v2383 = vshrl.u32 %v2382, 7
    %v2384 = vsub.s32 %v2381, %v2383
    %v2385 = vrot.slane %v2377, %v2384
    %v2387 = vunpack.c.l.s4 1983009808
    %v2388 = vunpack.c.0.s8 %v2387
    %v2389 = vlaneseq
    %v2390 = vshrl.u32 %v2389, 7
    %v2391 = vsub.s32 %v2388, %v2390
    %v2392 = vrot.slane %v2378, %v2391
    %v2393 = vcombine.low %v2385, %v2392
    %v2394 = vcombine.low %v2192, %v2195
    %v2395 = vcombine.low %v2199, %v2202
    %v2397 = vunpack.c.l.s4 1983009808
    %v2398 = vunpack.c.0.s8 %v2397
    %v2399 = vlaneseq
    %v2400 = vshrl.u32 %v2399, 7
    %v2401 = vsub.s32 %v2398, %v2400
    %v2402 = vrot.slane %v2394, %v2401
    %v2404 = vunpack.c.l.s4 1983009808
    %v2405 = vunpack.c.0.s8 %v2404
    %v2406 = vlaneseq
    %v2407 = vshrl.u32 %v2406, 7
    %v2408 = vsub.s32 %v2405, %v2407
    %v2409 = vrot.slane %v2395, %v2408
    %v2410 = vcombine.low %v2402, %v2409
    %v2411 = vcombine.low %v2205, %v2208
    %v2412 = vcombine.low %v2211, %v2214
    %v2414 = vunpack.c.l.s4 1983009808
    %v2415 = vunpack.c.0.s8 %v2414
    %v2416 = vlaneseq
    %v2417 = vshrl.u32 %v2416, 7
    %v2418 = vsub.s32 %v2415, %v2417
    %v2419 = vrot.slane %v2411, %v2418
    %v2421 = vunpack.c.l.s4 1983009808
    %v2422 = vunpack.c.0.s8 %v2421
    %v2423 = vlaneseq
    %v2424 = vshrl.u32 %v2423, 7
    %v2425 = vsub.s32 %v2422, %v2424
    %v2426 = vrot.slane %v2412, %v2425
    %v2427 = vcombine.low %v2419, %v2426
    %vm2428 = vcmask 523264
    %v2429 = vsel %vm2428, %v2240, 0
    %v2431 = vsel %vm2428, %v2257, 0
    %v2433 = vsel %vm2428, %v2274, 0
    %v2435 = vsel %vm2428, %v2291, 0
    %v2437 = vsel %vm2428, %v2308, 0
    %v2439 = vsel %vm2428, %v2325, 0
    %v2441 = vsel %vm2428, %v2342, 0
    %v2443 = vsel %vm2428, %v2359, 0
    %v2445 = vsel %vm2428, %v2376, 0
    %v2447 = vsel %vm2428, %v2393, 0
    %v2449 = vsel %vm2428, %v2410, 0
    %v2451 = vsel %vm2428, %v2427, 0
    %2453 = vmatprep.subr.mxu0 0.0
    %2454 = vmatpush1.msra.mxu0 0.0
    %2455 = vmatprep.subr.mxu0 0.0
    %2456 = vmatpush1.msra.mxu0 0.0
    %2457 = vmatprep.subr.mxu0 0.0
    %2458 = vmatpush1.msra.mxu0 0.0
    %2459 = vmatprep.subr.mxu0 0.0
    %2460 = vmatpush1.msra.mxu0 0.0
    %2461 = vmatprep.subr.mxu0 0.0
    %2462 = vmatpush1.msra.mxu0 0.0
    %2463 = vmatprep.subr.mxu0 0.0
    %2464 = vmatpush1.msra.mxu0 0.0
    %2465 = vmatprep.subr.mxu0 0.0
    %2466 = vmatpush1.msra.mxu0 0.0
    %2467 = vmatprep.subr.mxu0 0.0
    %2468 = vmatpush1.msra.mxu0 0.0
    %2469 = vmatprep.subr.mxu0 0.0
    %2470 = vmatpush1.msra.mxu0 %v2223
    %2471 = vmatprep.subr.mxu0 0.0
    %2472 = vmatpush1.msra.mxu0 %v2222
    %2473 = vmatprep.subr.mxu0 0.0
    %2474 = vmatpush1.msra.mxu0 %v2221
    %2475 = vmatprep.subr.mxu0 0.0
    %2476 = vmatpush1.msra.mxu0 %v2220
    %2477 = vmatprep.subr.mxu0 0.0
    %2478 = vmatpush1.msra.mxu0 %v2219
    %2479 = vmatprep.subr.mxu0 0.0
    %2480 = vmatpush1.msra.mxu0 %v2218
    %2481 = vmatprep.subr.mxu0 0.0
    %2482 = vmatpush1.msra.mxu0 %v2217
    %2483 = vmatprep.subr.mxu0 0.0
    %2484 = vmatpush1.msra.mxu0 %v2216
    %2485 = vmatprep.subr.mxu0 0.0
    %2486 = vmatpush2.msra.mxu0 0.0
    %2487 = vmatprep.subr.mxu0 0.0
    %2488 = vmatpush2.msra.mxu0 0.0
    %2489 = vmatprep.subr.mxu0 0.0
    %2490 = vmatpush2.msra.mxu0 0.0
    %2491 = vmatprep.subr.mxu0 0.0
    %2492 = vmatpush2.msra.mxu0 0.0
    %2493 = vmatprep.subr.mxu0 0.0
    %2494 = vmatpush2.msra.mxu0 0.0
    %2495 = vmatprep.subr.mxu0 0.0
    %2496 = vmatpush2.msra.mxu0 0.0
    %2497 = vmatprep.subr.mxu0 0.0
    %2498 = vmatpush2.msra.mxu0 0.0
    %2499 = vmatprep.subr.mxu0 0.0
    %2500 = vmatpush2.msra.mxu0 0.0
    %2501 = vmatprep.subr.mxu0 0.0
    %2502 = vmatpush2.msra.mxu0 0.0
    %2503 = vmatprep.subr.mxu0 0.0
    %2504 = vmatpush2.msra.mxu0 0.0
    %2505 = vmatprep.subr.mxu0 0.0
    %2506 = vmatpush2.msra.mxu0 0.0
    %2507 = vmatprep.subr.mxu0 0.0
    %2508 = vmatpush2.msra.mxu0 0.0
    %2509 = vmatprep.subr.mxu0 0.0
    %2510 = vmatpush2.msra.mxu0 0.0
    %2511 = vmatprep.subr.mxu0 0.0
    %2512 = vmatpush2.msra.mxu0 0.0
    %2513 = vmatprep.subr.mxu0 0.0
    %2514 = vmatpush2.msra.mxu0 0.0
    %2515 = vmatprep.subr.mxu0 0.0
    %2516 = vmatpush2.msra.mxu0 0.0
    %2517 = vmatprep.mubr.f32.mxu0 0.0
    %2518 = vmatmul.mubr.f32.gmra.mxu0 %v2429
    %v2519 = vpop.f32.mrf.mxu0
    %v2520 = vadd.f32 0.0, %v2519
    %v2521 = vpop.f32.mrf.mxu0
    %2522 = vmatprep.mubr.f32.mxu0 0.0
    %2523 = vmatmul.mubr.f32.gmra.mxu0 %v2431
    %v2524 = vpop.f32.mrf.mxu0
    %v2525 = vadd.f32 0.0, %v2524
    %v2526 = vpop.f32.mrf.mxu0
    %2527 = vmatprep.mubr.f32.mxu0 0.0
    %2528 = vmatmul.mubr.f32.gmra.mxu0 %v2433
    %v2529 = vpop.f32.mrf.mxu0
    %v2530 = vadd.f32 0.0, %v2529
    %v2531 = vpop.f32.mrf.mxu0
    %2532 = vmatprep.mubr.f32.mxu0 0.0
    %2533 = vmatmul.mubr.f32.gmra.mxu0 %v2435
    %v2534 = vpop.f32.mrf.mxu0
    %v2535 = vadd.f32 0.0, %v2534
    %v2536 = vpop.f32.mrf.mxu0
    %2537 = vmatprep.mubr.f32.mxu0 0.0
    %2538 = vmatmul.mubr.f32.gmra.mxu0 %v2437
    %v2539 = vpop.f32.mrf.mxu0
    %v2540 = vadd.f32 0.0, %v2539
    %v2541 = vpop.f32.mrf.mxu0
    %2542 = vmatprep.mubr.f32.mxu0 0.0
    %2543 = vmatmul.mubr.f32.gmra.mxu0 %v2439
    %v2544 = vpop.f32.mrf.mxu0
    %v2545 = vadd.f32 0.0, %v2544
    %v2546 = vpop.f32.mrf.mxu0
    %2547 = vmatprep.mubr.f32.mxu0 0.0
    %2548 = vmatmul.mubr.f32.gmra.mxu0 %v2441
    %v2549 = vpop.f32.mrf.mxu0
    %v2550 = vadd.f32 0.0, %v2549
    %v2551 = vpop.f32.mrf.mxu0
    %2552 = vmatprep.mubr.f32.mxu0 0.0
    %2553 = vmatmul.mubr.f32.gmra.mxu0 %v2443
    %v2554 = vpop.f32.mrf.mxu0
    %v2555 = vadd.f32 0.0, %v2554
    %v2556 = vpop.f32.mrf.mxu0
    %2557 = vmatprep.mubr.f32.mxu0 0.0
    %2558 = vmatmul.mubr.f32.gmra.mxu0 %v2445
    %v2559 = vpop.f32.mrf.mxu0
    %v2560 = vadd.f32 0.0, %v2559
    %v2561 = vpop.f32.mrf.mxu0
    %2562 = vmatprep.mubr.f32.mxu0 0.0
    %2563 = vmatmul.mubr.f32.gmra.mxu0 %v2447
    %v2564 = vpop.f32.mrf.mxu0
    %v2565 = vadd.f32 0.0, %v2564
    %v2566 = vpop.f32.mrf.mxu0
    %2567 = vmatprep.mubr.f32.mxu0 0.0
    %2568 = vmatmul.mubr.f32.gmra.mxu0 %v2449
    %v2569 = vpop.f32.mrf.mxu0
    %v2570 = vadd.f32 0.0, %v2569
    %v2571 = vpop.f32.mrf.mxu0
    %2572 = vmatprep.mubr.f32.mxu0 0.0
    %2573 = vmatmul.mubr.f32.gmra.mxu0 %v2451
    %v2574 = vpop.f32.mrf.mxu0
    %v2575 = vadd.f32 0.0, %v2574
    %v2576 = vpop.f32.mrf.mxu0
    %2577 = vdwg.mxu0
    %v2578 = vcombine.low %v1824, %v1832
    %v2579 = vcombine.low %v1831, %v1833
    %v2581 = vunpack.c.l.s4 1983009808
    %v2582 = vunpack.c.0.s8 %v2581
    %v2583 = vlaneseq
    %v2584 = vshrl.u32 %v2583, 7
    %v2585 = vsub.s32 %v2582, %v2584
    %v2586 = vrot.slane %v2578, %v2585
    %v2588 = vunpack.c.l.s4 1983009808
    %v2589 = vunpack.c.0.s8 %v2588
    %v2590 = vlaneseq
    %v2591 = vshrl.u32 %v2590, 7
    %v2592 = vsub.s32 %v2589, %v2591
    %v2593 = vrot.slane %v2579, %v2592
    %v2594 = vcombine.low %v2586, %v2593
    %v2595 = vcombine.low %v1841, %v1849
    %v2596 = vcombine.low %v1850, %v1858
    %v2598 = vunpack.c.l.s4 1983009808
    %v2599 = vunpack.c.0.s8 %v2598
    %v2600 = vlaneseq
    %v2601 = vshrl.u32 %v2600, 7
    %v2602 = vsub.s32 %v2599, %v2601
    %v2603 = vrot.slane %v2595, %v2602
    %v2605 = vunpack.c.l.s4 1983009808
    %v2606 = vunpack.c.0.s8 %v2605
    %v2607 = vlaneseq
    %v2608 = vshrl.u32 %v2607, 7
    %v2609 = vsub.s32 %v2606, %v2608
    %v2610 = vrot.slane %v2596, %v2609
    %v2611 = vcombine.low %v2603, %v2610
    %v2612 = vcombine.low %v1866, %v1865
    %v2613 = vcombine.low %v1867, %v1875
    %v2615 = vunpack.c.l.s4 1983009808
    %v2616 = vunpack.c.0.s8 %v2615
    %v2617 = vlaneseq
    %v2618 = vshrl.u32 %v2617, 7
    %v2619 = vsub.s32 %v2616, %v2618
    %v2620 = vrot.slane %v2612, %v2619
    %v2622 = vunpack.c.l.s4 1983009808
    %v2623 = vunpack.c.0.s8 %v2622
    %v2624 = vlaneseq
    %v2625 = vshrl.u32 %v2624, 7
    %v2626 = vsub.s32 %v2623, %v2625
    %v2627 = vrot.slane %v2613, %v2626
    %v2628 = vcombine.low %v2620, %v2627
    %v2629 = vcombine.low %v1882, %v1884
    %v2630 = vcombine.low %v1892, %v1900
    %v2632 = vunpack.c.l.s4 1983009808
    %v2633 = vunpack.c.0.s8 %v2632
    %v2634 = vlaneseq
    %v2635 = vshrl.u32 %v2634, 7
    %v2636 = vsub.s32 %v2633, %v2635
    %v2637 = vrot.slane %v2629, %v2636
    %v2639 = vunpack.c.l.s4 1983009808
    %v2640 = vunpack.c.0.s8 %v2639
    %v2641 = vlaneseq
    %v2642 = vshrl.u32 %v2641, 7
    %v2643 = vsub.s32 %v2640, %v2642
    %v2644 = vrot.slane %v2630, %v2643
    %v2645 = vcombine.low %v2637, %v2644
    %v2646 = vcombine.low %v1899, %v1901
    %v2647 = vcombine.low %v1917, %v1916
    %v2649 = vunpack.c.l.s4 1983009808
    %v2650 = vunpack.c.0.s8 %v2649
    %v2651 = vlaneseq
    %v2652 = vshrl.u32 %v2651, 7
    %v2653 = vsub.s32 %v2650, %v2652
    %v2654 = vrot.slane %v2646, %v2653
    %v2656 = vunpack.c.l.s4 1983009808
    %v2657 = vunpack.c.0.s8 %v2656
    %v2658 = vlaneseq
    %v2659 = vshrl.u32 %v2658, 7
    %v2660 = vsub.s32 %v2657, %v2659
    %v2661 = vrot.slane %v2647, %v2660
    %v2662 = vcombine.low %v2654, %v2661
    %v2663 = vcombine.low %v1918, %v1926
    %v2664 = vcombine.low %v1934, %v1933
    %v2666 = vunpack.c.l.s4 1983009808
    %v2667 = vunpack.c.0.s8 %v2666
    %v2668 = vlaneseq
    %v2669 = vshrl.u32 %v2668, 7
    %v2670 = vsub.s32 %v2667, %v2669
    %v2671 = vrot.slane %v2663, %v2670
    %v2673 = vunpack.c.l.s4 1983009808
    %v2674 = vunpack.c.0.s8 %v2673
    %v2675 = vlaneseq
    %v2676 = vshrl.u32 %v2675, 7
    %v2677 = vsub.s32 %v2674, %v2676
    %v2678 = vrot.slane %v2664, %v2677
    %v2679 = vcombine.low %v2671, %v2678
    %v2680 = vcombine.low %v1943, %v1951
    %v2681 = vcombine.low %v1950, %v1952
    %v2683 = vunpack.c.l.s4 1983009808
    %v2684 = vunpack.c.0.s8 %v2683
    %v2685 = vlaneseq
    %v2686 = vshrl.u32 %v2685, 7
    %v2687 = vsub.s32 %v2684, %v2686
    %v2688 = vrot.slane %v2680, %v2687
    %v2690 = vunpack.c.l.s4 1983009808
    %v2691 = vunpack.c.0.s8 %v2690
    %v2692 = vlaneseq
    %v2693 = vshrl.u32 %v2692, 7
    %v2694 = vsub.s32 %v2691, %v2693
    %v2695 = vrot.slane %v2681, %v2694
    %v2696 = vcombine.low %v2688, %v2695
    %v2697 = vcombine.low %v1960, %v1968
    %v2698 = vcombine.low %v1969, %v1977
    %v2700 = vunpack.c.l.s4 1983009808
    %v2701 = vunpack.c.0.s8 %v2700
    %v2702 = vlaneseq
    %v2703 = vshrl.u32 %v2702, 7
    %v2704 = vsub.s32 %v2701, %v2703
    %v2705 = vrot.slane %v2697, %v2704
    %v2707 = vunpack.c.l.s4 1983009808
    %v2708 = vunpack.c.0.s8 %v2707
    %v2709 = vlaneseq
    %v2710 = vshrl.u32 %v2709, 7
    %v2711 = vsub.s32 %v2708, %v2710
    %v2712 = vrot.slane %v2698, %v2711
    %v2713 = vcombine.low %v2705, %v2712
    %v2714 = vcombine.low %v1985, %v1984
    %v2715 = vcombine.low %v1986, %v1994
    %v2717 = vunpack.c.l.s4 1983009808
    %v2718 = vunpack.c.0.s8 %v2717
    %v2719 = vlaneseq
    %v2720 = vshrl.u32 %v2719, 7
    %v2721 = vsub.s32 %v2718, %v2720
    %v2722 = vrot.slane %v2714, %v2721
    %v2724 = vunpack.c.l.s4 1983009808
    %v2725 = vunpack.c.0.s8 %v2724
    %v2726 = vlaneseq
    %v2727 = vshrl.u32 %v2726, 7
    %v2728 = vsub.s32 %v2725, %v2727
    %v2729 = vrot.slane %v2715, %v2728
    %v2730 = vcombine.low %v2722, %v2729
    %v2731 = vcombine.low %v2001, %v2003
    %v2732 = vcombine.low %v2011, %v2019
    %v2734 = vunpack.c.l.s4 1983009808
    %v2735 = vunpack.c.0.s8 %v2734
    %v2736 = vlaneseq
    %v2737 = vshrl.u32 %v2736, 7
    %v2738 = vsub.s32 %v2735, %v2737
    %v2739 = vrot.slane %v2731, %v2738
    %v2741 = vunpack.c.l.s4 1983009808
    %v2742 = vunpack.c.0.s8 %v2741
    %v2743 = vlaneseq
    %v2744 = vshrl.u32 %v2743, 7
    %v2745 = vsub.s32 %v2742, %v2744
    %v2746 = vrot.slane %v2732, %v2745
    %v2747 = vcombine.low %v2739, %v2746
    %v2748 = vcombine.low %v2018, %v2020
    %v2749 = vcombine.low %v2036, %v2035
    %v2751 = vunpack.c.l.s4 1983009808
    %v2752 = vunpack.c.0.s8 %v2751
    %v2753 = vlaneseq
    %v2754 = vshrl.u32 %v2753, 7
    %v2755 = vsub.s32 %v2752, %v2754
    %v2756 = vrot.slane %v2748, %v2755
    %v2758 = vunpack.c.l.s4 1983009808
    %v2759 = vunpack.c.0.s8 %v2758
    %v2760 = vlaneseq
    %v2761 = vshrl.u32 %v2760, 7
    %v2762 = vsub.s32 %v2759, %v2761
    %v2763 = vrot.slane %v2749, %v2762
    %v2764 = vcombine.low %v2756, %v2763
    %v2765 = vcombine.low %v2037, %v2045
    %v2766 = vcombine.low %v2053, %v2052
    %v2768 = vunpack.c.l.s4 1983009808
    %v2769 = vunpack.c.0.s8 %v2768
    %v2770 = vlaneseq
    %v2771 = vshrl.u32 %v2770, 7
    %v2772 = vsub.s32 %v2769, %v2771
    %v2773 = vrot.slane %v2765, %v2772
    %v2775 = vunpack.c.l.s4 1983009808
    %v2776 = vunpack.c.0.s8 %v2775
    %v2777 = vlaneseq
    %v2778 = vshrl.u32 %v2777, 7
    %v2779 = vsub.s32 %v2776, %v2778
    %v2780 = vrot.slane %v2766, %v2779
    %v2781 = vcombine.low %v2773, %v2780
    %v2782 = vsel %vm2428, %v2594, 0
    %v2784 = vsel %vm2428, %v2611, 0
    %v2786 = vsel %vm2428, %v2628, 0
    %v2788 = vsel %vm2428, %v2645, 0
    %v2790 = vsel %vm2428, %v2662, 0
    %v2792 = vsel %vm2428, %v2679, 0
    %v2794 = vsel %vm2428, %v2696, 0
    %v2796 = vsel %vm2428, %v2713, 0
    %v2798 = vsel %vm2428, %v2730, 0
    %v2800 = vsel %vm2428, %v2747, 0
    %v2802 = vsel %vm2428, %v2764, 0
    %v2804 = vsel %vm2428, %v2781, 0
    %2806 = vmatprep.subr.mxu0 0.0
    %2807 = vmatpush1.msra.mxu0 0.0
    %2808 = vmatprep.subr.mxu0 0.0
    %2809 = vmatpush1.msra.mxu0 0.0
    %2810 = vmatprep.subr.mxu0 0.0
    %2811 = vmatpush1.msra.mxu0 0.0
    %2812 = vmatprep.subr.mxu0 0.0
    %2813 = vmatpush1.msra.mxu0 0.0
    %2814 = vmatprep.subr.mxu0 0.0
    %2815 = vmatpush1.msra.mxu0 0.0
    %2816 = vmatprep.subr.mxu0 0.0
    %2817 = vmatpush1.msra.mxu0 0.0
    %2818 = vmatprep.subr.mxu0 0.0
    %2819 = vmatpush1.msra.mxu0 0.0
    %2820 = vmatprep.subr.mxu0 0.0
    %2821 = vmatpush1.msra.mxu0 0.0
    %2822 = vmatprep.subr.mxu0 0.0
    %2823 = vmatpush1.msra.mxu0 %v2062
    %2824 = vmatprep.subr.mxu0 0.0
    %2825 = vmatpush1.msra.mxu0 %v2061
    %2826 = vmatprep.subr.mxu0 0.0
    %2827 = vmatpush1.msra.mxu0 %v2060
    %2828 = vmatprep.subr.mxu0 0.0
    %2829 = vmatpush1.msra.mxu0 %v2059
    %2830 = vmatprep.subr.mxu0 0.0
    %2831 = vmatpush1.msra.mxu0 %v2058
    %2832 = vmatprep.subr.mxu0 0.0
    %2833 = vmatpush1.msra.mxu0 %v2057
    %2834 = vmatprep.subr.mxu0 0.0
    %2835 = vmatpush1.msra.mxu0 %v2056
    %2836 = vmatprep.subr.mxu0 0.0
    %2837 = vmatpush1.msra.mxu0 %v2055
    %2838 = vmatprep.subr.mxu0 0.0
    %2839 = vmatpush2.msra.mxu0 0.0
    %2840 = vmatprep.subr.mxu0 0.0
    %2841 = vmatpush2.msra.mxu0 0.0
    %2842 = vmatprep.subr.mxu0 0.0
    %2843 = vmatpush2.msra.mxu0 0.0
    %2844 = vmatprep.subr.mxu0 0.0
    %2845 = vmatpush2.msra.mxu0 0.0
    %2846 = vmatprep.subr.mxu0 0.0
    %2847 = vmatpush2.msra.mxu0 0.0
    %2848 = vmatprep.subr.mxu0 0.0
    %2849 = vmatpush2.msra.mxu0 0.0
    %2850 = vmatprep.subr.mxu0 0.0
    %2851 = vmatpush2.msra.mxu0 0.0
    %2852 = vmatprep.subr.mxu0 0.0
    %2853 = vmatpush2.msra.mxu0 0.0
    %2854 = vmatprep.subr.mxu0 0.0
    %2855 = vmatpush2.msra.mxu0 0.0
    %2856 = vmatprep.subr.mxu0 0.0
    %2857 = vmatpush2.msra.mxu0 0.0
    %2858 = vmatprep.subr.mxu0 0.0
    %2859 = vmatpush2.msra.mxu0 0.0
    %2860 = vmatprep.subr.mxu0 0.0
    %2861 = vmatpush2.msra.mxu0 0.0
    %2862 = vmatprep.subr.mxu0 0.0
    %2863 = vmatpush2.msra.mxu0 0.0
    %2864 = vmatprep.subr.mxu0 0.0
    %2865 = vmatpush2.msra.mxu0 0.0
    %2866 = vmatprep.subr.mxu0 0.0
    %2867 = vmatpush2.msra.mxu0 0.0
    %2868 = vmatprep.subr.mxu0 0.0
    %2869 = vmatpush2.msra.mxu0 0.0
    %2870 = vmatprep.mubr.f32.mxu0 0.0
    %2871 = vmatmul.mubr.f32.gmra.mxu0 %v2782
    %v2872 = vpop.f32.mrf.mxu0
    %v2873 = vadd.f32 %v2520, %v2872
    %v2874 = vpop.f32.mrf.mxu0
    %2875 = vmatprep.mubr.f32.mxu0 0.0
    %2876 = vmatmul.mubr.f32.gmra.mxu0 %v2784
    %v2877 = vpop.f32.mrf.mxu0
    %v2878 = vadd.f32 %v2525, %v2877
    %v2879 = vpop.f32.mrf.mxu0
    %2880 = vmatprep.mubr.f32.mxu0 0.0
    %2881 = vmatmul.mubr.f32.gmra.mxu0 %v2786
    %v2882 = vpop.f32.mrf.mxu0
    %v2883 = vadd.f32 %v2530, %v2882
    %v2884 = vpop.f32.mrf.mxu0
    %2885 = vmatprep.mubr.f32.mxu0 0.0
    %2886 = vmatmul.mubr.f32.gmra.mxu0 %v2788
    %v2887 = vpop.f32.mrf.mxu0
    %v2888 = vadd.f32 %v2535, %v2887
    %v2889 = vpop.f32.mrf.mxu0
    %2890 = vmatprep.mubr.f32.mxu0 0.0
    %2891 = vmatmul.mubr.f32.gmra.mxu0 %v2790
    %v2892 = vpop.f32.mrf.mxu0
    %v2893 = vadd.f32 %v2540, %v2892
    %v2894 = vpop.f32.mrf.mxu0
    %2895 = vmatprep.mubr.f32.mxu0 0.0
    %2896 = vmatmul.mubr.f32.gmra.mxu0 %v2792
    %v2897 = vpop.f32.mrf.mxu0
    %v2898 = vadd.f32 %v2545, %v2897
    %v2899 = vpop.f32.mrf.mxu0
    %2900 = vmatprep.mubr.f32.mxu0 0.0
    %2901 = vmatmul.mubr.f32.gmra.mxu0 %v2794
    %v2902 = vpop.f32.mrf.mxu0
    %v2903 = vadd.f32 %v2550, %v2902
    %v2904 = vpop.f32.mrf.mxu0
    %2905 = vmatprep.mubr.f32.mxu0 0.0
    %2906 = vmatmul.mubr.f32.gmra.mxu0 %v2796
    %v2907 = vpop.f32.mrf.mxu0
    %v2908 = vadd.f32 %v2555, %v2907
    %v2909 = vpop.f32.mrf.mxu0
    %2910 = vmatprep.mubr.f32.mxu0 0.0
    %2911 = vmatmul.mubr.f32.gmra.mxu0 %v2798
    %v2912 = vpop.f32.mrf.mxu0
    %v2913 = vadd.f32 %v2560, %v2912
    %v2914 = vpop.f32.mrf.mxu0
    %2915 = vmatprep.mubr.f32.mxu0 0.0
    %2916 = vmatmul.mubr.f32.gmra.mxu0 %v2800
    %v2917 = vpop.f32.mrf.mxu0
    %v2918 = vadd.f32 %v2565, %v2917
    %v2919 = vpop.f32.mrf.mxu0
    %2920 = vmatprep.mubr.f32.mxu0 0.0
    %2921 = vmatmul.mubr.f32.gmra.mxu0 %v2802
    %v2922 = vpop.f32.mrf.mxu0
    %v2923 = vadd.f32 %v2570, %v2922
    %v2924 = vpop.f32.mrf.mxu0
    %2925 = vmatprep.mubr.f32.mxu0 0.0
    %2926 = vmatmul.mubr.f32.gmra.mxu0 %v2804
    %v2927 = vpop.f32.mrf.mxu0
    %v2928 = vadd.f32 %v2575, %v2927
    %v2929 = vpop.f32.mrf.mxu0
    %2930 = vdwg.mxu0
    %s2931 = scalar_lea.vmem %s3, 128
    %v2932 = vld [vmem:[%s2931] sm:$0xff]
    %v2933 = vld [vmem:[%s2931 + $0x8] sm:$0xff]
    %v2934 = vld [vmem:[%s2931 + $0x10] sm:$0xff]
    %v2935 = vld [vmem:[%s2931 + $0x18] sm:$0xff]
    %v2936 = vld [vmem:[%s2931 + $0x20] sm:$0xff]
    %v2937 = vld [vmem:[%s2931 + $0x28] sm:$0xff]
    %v2938 = vld [vmem:[%s2931 + $0x30] sm:$0xff]
    %v2939 = vld [vmem:[%s2931 + $0x38] sm:$0xff]
    %v2940 = vcombine.low %v1832, %v1831
    %v2941 = vcombine.low %v1833, %v1841
    %v2943 = vunpack.c.l.s4 1983009808
    %v2944 = vunpack.c.0.s8 %v2943
    %v2945 = vlaneseq
    %v2946 = vshrl.u32 %v2945, 7
    %v2947 = vsub.s32 %v2944, %v2946
    %v2948 = vrot.slane %v2940, %v2947
    %v2950 = vunpack.c.l.s4 1983009808
    %v2951 = vunpack.c.0.s8 %v2950
    %v2952 = vlaneseq
    %v2953 = vshrl.u32 %v2952, 7
    %v2954 = vsub.s32 %v2951, %v2953
    %v2955 = vrot.slane %v2941, %v2954
    %v2956 = vcombine.low %v2948, %v2955
    %v2957 = vcombine.low %v1849, %v1848
    %v2958 = vcombine.low %v1858, %v1866
    %v2960 = vunpack.c.l.s4 1983009808
    %v2961 = vunpack.c.0.s8 %v2960
    %v2962 = vlaneseq
    %v2963 = vshrl.u32 %v2962, 7
    %v2964 = vsub.s32 %v2961, %v2963
    %v2965 = vrot.slane %v2957, %v2964
    %v2967 = vunpack.c.l.s4 1983009808
    %v2968 = vunpack.c.0.s8 %v2967
    %v2969 = vlaneseq
    %v2970 = vshrl.u32 %v2969, 7
    %v2971 = vsub.s32 %v2968, %v2970
    %v2972 = vrot.slane %v2958, %v2971
    %v2973 = vcombine.low %v2965, %v2972
    %v2974 = vcombine.low %v1865, %v1867
    %v2975 = vcombine.low %v1875, %v1883
    %v2977 = vunpack.c.l.s4 1983009808
    %v2978 = vunpack.c.0.s8 %v2977
    %v2979 = vlaneseq
    %v2980 = vshrl.u32 %v2979, 7
    %v2981 = vsub.s32 %v2978, %v2980
    %v2982 = vrot.slane %v2974, %v2981
    %v2984 = vunpack.c.l.s4 1983009808
    %v2985 = vunpack.c.0.s8 %v2984
    %v2986 = vlaneseq
    %v2987 = vshrl.u32 %v2986, 7
    %v2988 = vsub.s32 %v2985, %v2987
    %v2989 = vrot.slane %v2975, %v2988
    %v2990 = vcombine.low %v2982, %v2989
    %v2991 = vcombine.low %v1884, %v1892
    %v2992 = vcombine.low %v1900, %v1899
    %v2994 = vunpack.c.l.s4 1983009808
    %v2995 = vunpack.c.0.s8 %v2994
    %v2996 = vlaneseq
    %v2997 = vshrl.u32 %v2996, 7
    %v2998 = vsub.s32 %v2995, %v2997
    %v2999 = vrot.slane %v2991, %v2998
    %v3001 = vunpack.c.l.s4 1983009808
    %v3002 = vunpack.c.0.s8 %v3001
    %v3003 = vlaneseq
    %v3004 = vshrl.u32 %v3003, 7
    %v3005 = vsub.s32 %v3002, %v3004
    %v3006 = vrot.slane %v2992, %v3005
    %v3007 = vcombine.low %v2999, %v3006
    %v3008 = vcombine.low %v1901, %v1909
    %v3009 = vcombine.low %v1916, %v1918
    %v3011 = vunpack.c.l.s4 1983009808
    %v3012 = vunpack.c.0.s8 %v3011
    %v3013 = vlaneseq
    %v3014 = vshrl.u32 %v3013, 7
    %v3015 = vsub.s32 %v3012, %v3014
    %v3016 = vrot.slane %v3008, %v3015
    %v3018 = vunpack.c.l.s4 1983009808
    %v3019 = vunpack.c.0.s8 %v3018
    %v3020 = vlaneseq
    %v3021 = vshrl.u32 %v3020, 7
    %v3022 = vsub.s32 %v3019, %v3021
    %v3023 = vrot.slane %v3009, %v3022
    %v3024 = vcombine.low %v3016, %v3023
    %v3025 = vcombine.low %v1926, %v1934
    %v3026 = vcombine.low %v1933, %v1935
    %v3028 = vunpack.c.l.s4 1983009808
    %v3029 = vunpack.c.0.s8 %v3028
    %v3030 = vlaneseq
    %v3031 = vshrl.u32 %v3030, 7
    %v3032 = vsub.s32 %v3029, %v3031
    %v3033 = vrot.slane %v3025, %v3032
    %v3035 = vunpack.c.l.s4 1983009808
    %v3036 = vunpack.c.0.s8 %v3035
    %v3037 = vlaneseq
    %v3038 = vshrl.u32 %v3037, 7
    %v3039 = vsub.s32 %v3036, %v3038
    %v3040 = vrot.slane %v3026, %v3039
    %v3041 = vcombine.low %v3033, %v3040
    %v3042 = vcombine.low %v1951, %v1950
    %v3043 = vcombine.low %v1952, %v1960
    %v3045 = vunpack.c.l.s4 1983009808
    %v3046 = vunpack.c.0.s8 %v3045
    %v3047 = vlaneseq
    %v3048 = vshrl.u32 %v3047, 7
    %v3049 = vsub.s32 %v3046, %v3048
    %v3050 = vrot.slane %v3042, %v3049
    %v3052 = vunpack.c.l.s4 1983009808
    %v3053 = vunpack.c.0.s8 %v3052
    %v3054 = vlaneseq
    %v3055 = vshrl.u32 %v3054, 7
    %v3056 = vsub.s32 %v3053, %v3055
    %v3057 = vrot.slane %v3043, %v3056
    %v3058 = vcombine.low %v3050, %v3057
    %v3059 = vcombine.low %v1968, %v1967
    %v3060 = vcombine.low %v1977, %v1985
    %v3062 = vunpack.c.l.s4 1983009808
    %v3063 = vunpack.c.0.s8 %v3062
    %v3064 = vlaneseq
    %v3065 = vshrl.u32 %v3064, 7
    %v3066 = vsub.s32 %v3063, %v3065
    %v3067 = vrot.slane %v3059, %v3066
    %v3069 = vunpack.c.l.s4 1983009808
    %v3070 = vunpack.c.0.s8 %v3069
    %v3071 = vlaneseq
    %v3072 = vshrl.u32 %v3071, 7
    %v3073 = vsub.s32 %v3070, %v3072
    %v3074 = vrot.slane %v3060, %v3073
    %v3075 = vcombine.low %v3067, %v3074
    %v3076 = vcombine.low %v1984, %v1986
    %v3077 = vcombine.low %v1994, %v2002
    %v3079 = vunpack.c.l.s4 1983009808
    %v3080 = vunpack.c.0.s8 %v3079
    %v3081 = vlaneseq
    %v3082 = vshrl.u32 %v3081, 7
    %v3083 = vsub.s32 %v3080, %v3082
    %v3084 = vrot.slane %v3076, %v3083
    %v3086 = vunpack.c.l.s4 1983009808
    %v3087 = vunpack.c.0.s8 %v3086
    %v3088 = vlaneseq
    %v3089 = vshrl.u32 %v3088, 7
    %v3090 = vsub.s32 %v3087, %v3089
    %v3091 = vrot.slane %v3077, %v3090
    %v3092 = vcombine.low %v3084, %v3091
    %v3093 = vcombine.low %v2003, %v2011
    %v3094 = vcombine.low %v2019, %v2018
    %v3096 = vunpack.c.l.s4 1983009808
    %v3097 = vunpack.c.0.s8 %v3096
    %v3098 = vlaneseq
    %v3099 = vshrl.u32 %v3098, 7
    %v3100 = vsub.s32 %v3097, %v3099
    %v3101 = vrot.slane %v3093, %v3100
    %v3103 = vunpack.c.l.s4 1983009808
    %v3104 = vunpack.c.0.s8 %v3103
    %v3105 = vlaneseq
    %v3106 = vshrl.u32 %v3105, 7
    %v3107 = vsub.s32 %v3104, %v3106
    %v3108 = vrot.slane %v3094, %v3107
    %v3109 = vcombine.low %v3101, %v3108
    %v3110 = vcombine.low %v2020, %v2028
    %v3111 = vcombine.low %v2035, %v2037
    %v3113 = vunpack.c.l.s4 1983009808
    %v3114 = vunpack.c.0.s8 %v3113
    %v3115 = vlaneseq
    %v3116 = vshrl.u32 %v3115, 7
    %v3117 = vsub.s32 %v3114, %v3116
    %v3118 = vrot.slane %v3110, %v3117
    %v3120 = vunpack.c.l.s4 1983009808
    %v3121 = vunpack.c.0.s8 %v3120
    %v3122 = vlaneseq
    %v3123 = vshrl.u32 %v3122, 7
    %v3124 = vsub.s32 %v3121, %v3123
    %v3125 = vrot.slane %v3111, %v3124
    %v3126 = vcombine.low %v3118, %v3125
    %v3127 = vcombine.low %v2045, %v2053
    %v3128 = vcombine.low %v2052, %v2054
    %v3130 = vunpack.c.l.s4 1983009808
    %v3131 = vunpack.c.0.s8 %v3130
    %v3132 = vlaneseq
    %v3133 = vshrl.u32 %v3132, 7
    %v3134 = vsub.s32 %v3131, %v3133
    %v3135 = vrot.slane %v3127, %v3134
    %v3137 = vunpack.c.l.s4 1983009808
    %v3138 = vunpack.c.0.s8 %v3137
    %v3139 = vlaneseq
    %v3140 = vshrl.u32 %v3139, 7
    %v3141 = vsub.s32 %v3138, %v3140
    %v3142 = vrot.slane %v3128, %v3141
    %v3143 = vcombine.low %v3135, %v3142
    %v3144 = vsel %vm2428, %v2956, 0
    %v3146 = vsel %vm2428, %v2973, 0
    %v3148 = vsel %vm2428, %v2990, 0
    %v3150 = vsel %vm2428, %v3007, 0
    %v3152 = vsel %vm2428, %v3024, 0
    %v3154 = vsel %vm2428, %v3041, 0
    %v3156 = vsel %vm2428, %v3058, 0
    %v3158 = vsel %vm2428, %v3075, 0
    %v3160 = vsel %vm2428, %v3092, 0
    %v3162 = vsel %vm2428, %v3109, 0
    %v3164 = vsel %vm2428, %v3126, 0
    %v3166 = vsel %vm2428, %v3143, 0
    %3168 = vmatprep.subr.mxu0 0.0
    %3169 = vmatpush1.msra.mxu0 0.0
    %3170 = vmatprep.subr.mxu0 0.0
    %3171 = vmatpush1.msra.mxu0 0.0
    %3172 = vmatprep.subr.mxu0 0.0
    %3173 = vmatpush1.msra.mxu0 0.0
    %3174 = vmatprep.subr.mxu0 0.0
    %3175 = vmatpush1.msra.mxu0 0.0
    %3176 = vmatprep.subr.mxu0 0.0
    %3177 = vmatpush1.msra.mxu0 0.0
    %3178 = vmatprep.subr.mxu0 0.0
    %3179 = vmatpush1.msra.mxu0 0.0
    %3180 = vmatprep.subr.mxu0 0.0
    %3181 = vmatpush1.msra.mxu0 0.0
    %3182 = vmatprep.subr.mxu0 0.0
    %3183 = vmatpush1.msra.mxu0 0.0
    %3184 = vmatprep.subr.mxu0 0.0
    %3185 = vmatpush1.msra.mxu0 %v2939
    %3186 = vmatprep.subr.mxu0 0.0
    %3187 = vmatpush1.msra.mxu0 %v2938
    %3188 = vmatprep.subr.mxu0 0.0
    %3189 = vmatpush1.msra.mxu0 %v2937
    %3190 = vmatprep.subr.mxu0 0.0
    %3191 = vmatpush1.msra.mxu0 %v2936
    %3192 = vmatprep.subr.mxu0 0.0
    %3193 = vmatpush1.msra.mxu0 %v2935
    %3194 = vmatprep.subr.mxu0 0.0
    %3195 = vmatpush1.msra.mxu0 %v2934
    %3196 = vmatprep.subr.mxu0 0.0
    %3197 = vmatpush1.msra.mxu0 %v2933
    %3198 = vmatprep.subr.mxu0 0.0
    %3199 = vmatpush1.msra.mxu0 %v2932
    %3200 = vmatprep.subr.mxu0 0.0
    %3201 = vmatpush2.msra.mxu0 0.0
    %3202 = vmatprep.subr.mxu0 0.0
    %3203 = vmatpush2.msra.mxu0 0.0
    %3204 = vmatprep.subr.mxu0 0.0
    %3205 = vmatpush2.msra.mxu0 0.0
    %3206 = vmatprep.subr.mxu0 0.0
    %3207 = vmatpush2.msra.mxu0 0.0
    %3208 = vmatprep.subr.mxu0 0.0
    %3209 = vmatpush2.msra.mxu0 0.0
    %3210 = vmatprep.subr.mxu0 0.0
    %3211 = vmatpush2.msra.mxu0 0.0
    %3212 = vmatprep.subr.mxu0 0.0
    %3213 = vmatpush2.msra.mxu0 0.0
    %3214 = vmatprep.subr.mxu0 0.0
    %3215 = vmatpush2.msra.mxu0 0.0
    %3216 = vmatprep.subr.mxu0 0.0
    %3217 = vmatpush2.msra.mxu0 0.0
    %3218 = vmatprep.subr.mxu0 0.0
    %3219 = vmatpush2.msra.mxu0 0.0
    %3220 = vmatprep.subr.mxu0 0.0
    %3221 = vmatpush2.msra.mxu0 0.0
    %3222 = vmatprep.subr.mxu0 0.0
    %3223 = vmatpush2.msra.mxu0 0.0
    %3224 = vmatprep.subr.mxu0 0.0
    %3225 = vmatpush2.msra.mxu0 0.0
    %3226 = vmatprep.subr.mxu0 0.0
    %3227 = vmatpush2.msra.mxu0 0.0
    %3228 = vmatprep.subr.mxu0 0.0
    %3229 = vmatpush2.msra.mxu0 0.0
    %3230 = vmatprep.subr.mxu0 0.0
    %3231 = vmatpush2.msra.mxu0 0.0
    %3232 = vmatprep.mubr.f32.mxu0 0.0
    %3233 = vmatmul.mubr.f32.gmra.mxu0 %v3144
    %v3234 = vpop.f32.mrf.mxu0
    %v3235 = vadd.f32 0.0, %v3234
    %v3236 = vpop.f32.mrf.mxu0
    %3237 = vmatprep.mubr.f32.mxu0 0.0
    %3238 = vmatmul.mubr.f32.gmra.mxu0 %v3146
    %v3239 = vpop.f32.mrf.mxu0
    %v3240 = vadd.f32 0.0, %v3239
    %v3241 = vpop.f32.mrf.mxu0
    %3242 = vmatprep.mubr.f32.mxu0 0.0
    %3243 = vmatmul.mubr.f32.gmra.mxu0 %v3148
    %v3244 = vpop.f32.mrf.mxu0
    %v3245 = vadd.f32 0.0, %v3244
    %v3246 = vpop.f32.mrf.mxu0
    %3247 = vmatprep.mubr.f32.mxu0 0.0
    %3248 = vmatmul.mubr.f32.gmra.mxu0 %v3150
    %v3249 = vpop.f32.mrf.mxu0
    %v3250 = vadd.f32 0.0, %v3249
    %v3251 = vpop.f32.mrf.mxu0
    %3252 = vmatprep.mubr.f32.mxu0 0.0
    %3253 = vmatmul.mubr.f32.gmra.mxu0 %v3152
    %v3254 = vpop.f32.mrf.mxu0
    %v3255 = vadd.f32 0.0, %v3254
    %v3256 = vpop.f32.mrf.mxu0
    %3257 = vmatprep.mubr.f32.mxu0 0.0
    %3258 = vmatmul.mubr.f32.gmra.mxu0 %v3154
    %v3259 = vpop.f32.mrf.mxu0
    %v3260 = vadd.f32 0.0, %v3259
    %v3261 = vpop.f32.mrf.mxu0
    %3262 = vmatprep.mubr.f32.mxu0 0.0
    %3263 = vmatmul.mubr.f32.gmra.mxu0 %v3156
    %v3264 = vpop.f32.mrf.mxu0
    %v3265 = vadd.f32 0.0, %v3264
    %v3266 = vpop.f32.mrf.mxu0
    %3267 = vmatprep.mubr.f32.mxu0 0.0
    %3268 = vmatmul.mubr.f32.gmra.mxu0 %v3158
    %v3269 = vpop.f32.mrf.mxu0
    %v3270 = vadd.f32 0.0, %v3269
    %v3271 = vpop.f32.mrf.mxu0
    %3272 = vmatprep.mubr.f32.mxu0 0.0
    %3273 = vmatmul.mubr.f32.gmra.mxu0 %v3160
    %v3274 = vpop.f32.mrf.mxu0
    %v3275 = vadd.f32 0.0, %v3274
    %v3276 = vpop.f32.mrf.mxu0
    %3277 = vmatprep.mubr.f32.mxu0 0.0
    %3278 = vmatmul.mubr.f32.gmra.mxu0 %v3162
    %v3279 = vpop.f32.mrf.mxu0
    %v3280 = vadd.f32 0.0, %v3279
    %v3281 = vpop.f32.mrf.mxu0
    %3282 = vmatprep.mubr.f32.mxu0 0.0
    %3283 = vmatmul.mubr.f32.gmra.mxu0 %v3164
    %v3284 = vpop.f32.mrf.mxu0
    %v3285 = vadd.f32 0.0, %v3284
    %v3286 = vpop.f32.mrf.mxu0
    %3287 = vmatprep.mubr.f32.mxu0 0.0
    %3288 = vmatmul.mubr.f32.gmra.mxu0 %v3166
    %v3289 = vpop.f32.mrf.mxu0
    %v3290 = vadd.f32 0.0, %v3289
    %v3291 = vpop.f32.mrf.mxu0
    %3292 = vdwg.mxu0
    %v3293 = vadd.f32 %v2873, %v3235
    %v3294 = vadd.f32 %v2878, %v3240
    %v3295 = vadd.f32 %v2883, %v3245
    %v3296 = vadd.f32 %v2888, %v3250
    %v3297 = vadd.f32 %v2893, %v3255
    %v3298 = vadd.f32 %v2898, %v3260
    %v3299 = vadd.f32 %v2903, %v3265
    %v3300 = vadd.f32 %v2908, %v3270
    %v3301 = vadd.f32 %v2913, %v3275
    %v3302 = vadd.f32 %v2918, %v3280
    %v3303 = vadd.f32 %v2923, %v3285
    %v3304 = vadd.f32 %v2928, %v3290
    %v3305 = vld [vmem:[%s4] sm:$0x1]
    %v3307 = vlaneseq
    %v3308 = vshrl.u32 %v3307, 7
    %v3309 = vsub.s32 0, %v3308
    %v3310 = vrot.slane %v3305, %v3309
    %v3312 = vadd.f32 %v3293, %v3310
    %v3313 = vadd.f32 %v3294, %v3310
    %v3314 = vadd.f32 %v3295, %v3310
    %v3315 = vadd.f32 %v3296, %v3310
    %v3316 = vadd.f32 %v3297, %v3310
    %v3317 = vadd.f32 %v3298, %v3310
    %v3318 = vadd.f32 %v3299, %v3310
    %v3319 = vadd.f32 %v3300, %v3310
    %v3320 = vadd.f32 %v3301, %v3310
    %v3321 = vadd.f32 %v3302, %v3310
    %v3322 = vadd.f32 %v3303, %v3310
    %v3323 = vadd.f32 %v3304, %v3310
    %v3324 = vtanh.pop %v3312
    %v3325 = vtanh.pop %v3313
    %v3326 = vtanh.pop %v3314
    %v3327 = vtanh.pop %v3315
    %v3328 = vtanh.pop %v3316
    %v3329 = vtanh.pop %v3317
    %v3330 = vtanh.pop %v3318
    %v3331 = vtanh.pop %v3319
    %v3332 = vtanh.pop %v3320
    %v3333 = vtanh.pop %v3321
    %v3334 = vtanh.pop %v3322
    %v3335 = vtanh.pop %v3323
    %v3348 = vcombine.high %v3324, %v3324
    %v3349 = vcombine.high %v3325, %v3325
    %v3350 = vcombine.high %v3326, %v3326
    %v3351 = vcombine.high %v3327, %v3327
    %v3352 = vcombine.high %v3328, %v3328
    %v3353 = vcombine.high %v3329, %v3329
    %v3354 = vcombine.high %v3330, %v3330
    %v3355 = vcombine.high %v3331, %v3331
    %v3356 = vcombine.high %v3332, %v3332
    %v3357 = vcombine.high %v3333, %v3333
    %v3358 = vcombine.high %v3334, %v3334
    %v3359 = vcombine.high %v3335, %v3335
    %vm3372 = vcmask 1042432
    %vm3373 = vcmask 1046532
    %vm3374 = vmor %vm3372, %vm3373
    %v3375 = vrot.slane %v3324, 5
    %v3376 = vrot.slane %v3375, 4
    %v3377 = vrot.slane %v3348, 5
    %v3378 = vsel %vm3374, %v3376, %v3377
    %v3379 = vrot.slane %v3377, 4
    %v3380 = vrot.slane %v3325, 5
    %v3381 = vsel %vm3374, %v3379, %v3380
    %v3382 = vrot.slane %v3380, 4
    %v3383 = vrot.slane %v3349, 5
    %v3384 = vrot.slane %v3383, 4
    %v3385 = vrot.slane %v3326, 5
    %v3386 = vsel %vm3374, %v3384, %v3385
    %v3387 = vrot.slane %v3385, 4
    %v3388 = vrot.slane %v3350, 5
    %v3389 = vsel %vm3374, %v3387, %v3388
    %v3390 = vrot.slane %v3388, 4
    %v3391 = vrot.slane %v3327, 5
    %v3392 = vrot.slane %v3391, 4
    %v3393 = vrot.slane %v3351, 5
    %v3394 = vsel %vm3374, %v3392, %v3393
    %v3395 = vrot.slane %v3393, 4
    %v3396 = vrot.slane %v3328, 5
    %v3397 = vsel %vm3374, %v3395, %v3396
    %v3398 = vrot.slane %v3396, 4
    %v3399 = vrot.slane %v3352, 5
    %v3400 = vrot.slane %v3399, 4
    %v3401 = vrot.slane %v3329, 5
    %v3402 = vsel %vm3374, %v3400, %v3401
    %v3403 = vrot.slane %v3401, 4
    %v3404 = vrot.slane %v3353, 5
    %v3405 = vsel %vm3374, %v3403, %v3404
    %v3406 = vrot.slane %v3404, 4
    %v3407 = vrot.slane %v3330, 5
    %v3408 = vrot.slane %v3407, 4
    %v3409 = vrot.slane %v3354, 5
    %v3410 = vsel %vm3374, %v3408, %v3409
    %v3411 = vrot.slane %v3409, 4
    %v3412 = vrot.slane %v3331, 5
    %v3413 = vsel %vm3374, %v3411, %v3412
    %v3414 = vrot.slane %v3412, 4
    %v3415 = vrot.slane %v3355, 5
    %v3416 = vrot.slane %v3415, 4
    %v3417 = vrot.slane %v3332, 5
    %v3418 = vsel %vm3374, %v3416, %v3417
    %v3419 = vrot.slane %v3417, 4
    %v3420 = vrot.slane %v3356, 5
    %v3421 = vsel %vm3374, %v3419, %v3420
    %v3422 = vrot.slane %v3420, 4
    %v3423 = vrot.slane %v3333, 5
    %v3424 = vrot.slane %v3423, 4
    %v3425 = vrot.slane %v3357, 5
    %v3426 = vsel %vm3374, %v3424, %v3425
    %v3427 = vrot.slane %v3425, 4
    %v3428 = vrot.slane %v3334, 5
    %v3429 = vsel %vm3374, %v3427, %v3428
    %v3430 = vrot.slane %v3428, 4
    %v3431 = vrot.slane %v3358, 5
    %v3432 = vrot.slane %v3431, 4
    %v3433 = vrot.slane %v3335, 5
    %v3434 = vsel %vm3374, %v3432, %v3433
    %v3435 = vrot.slane %v3433, 4
    %v3436 = vrot.slane %v3359, 5
    %v3437 = vsel %vm3374, %v3435, %v3436
    %v3438 = vrot.slane %v3436, 4
    %v3463 = vmax.f32 %v3324, %v3378
    %v3464 = vmax.f32 %v3348, %v3381
    %v3465 = vmax.f32 %v3325, %v3382
    %v3466 = vmax.f32 %v3349, %v3386
    %v3467 = vmax.f32 %v3326, %v3389
    %v3468 = vmax.f32 %v3350, %v3390
    %v3469 = vmax.f32 %v3327, %v3394
    %v3470 = vmax.f32 %v3351, %v3397
    %v3471 = vmax.f32 %v3328, %v3398
    %v3472 = vmax.f32 %v3352, %v3402
    %v3473 = vmax.f32 %v3329, %v3405
    %v3474 = vmax.f32 %v3353, %v3406
    %v3475 = vmax.f32 %v3330, %v3410
    %v3476 = vmax.f32 %v3354, %v3413
    %v3477 = vmax.f32 %v3331, %v3414
    %v3478 = vmax.f32 %v3355, %v3418
    %v3479 = vmax.f32 %v3332, %v3421
    %v3480 = vmax.f32 %v3356, %v3422
    %v3481 = vmax.f32 %v3333, %v3426
    %v3482 = vmax.f32 %v3357, %v3429
    %v3483 = vmax.f32 %v3334, %v3430
    %v3484 = vmax.f32 %v3358, %v3434
    %v3485 = vmax.f32 %v3335, %v3437
    %v3486 = vmax.f32 %v3359, %v3438
    %v3487 = vld [vmem:[#allocation3] sm:$0xff]
    %v3488 = vld [vmem:[#allocation3 + $0x8] sm:$0xff]
    %v3489 = vld [vmem:[#allocation3 + $0x10] sm:$0xff]
    %v3490 = vld [vmem:[#allocation3 + $0x18] sm:$0xff]
    %v3491 = vld [vmem:[#allocation3 + $0x20] sm:$0xff]
    %v3492 = vld [vmem:[#allocation3 + $0x28] sm:$0xff]
    %v3493 = vld [vmem:[#allocation3 + $0x30] sm:$0xff]
    %v3494 = vld [vmem:[#allocation3 + $0x38] sm:$0xff]
    %s3495 = scalar_lea.vmem [#allocation3], 64
    %v3496 = vld [vmem:[%s3495] sm:$0xff]
    %v3497 = vld [vmem:[%s3495 + $0x8] sm:$0xff]
    %v3498 = vld [vmem:[%s3495 + $0x10] sm:$0xff]
    %v3499 = vld [vmem:[%s3495 + $0x18] sm:$0xff]
    %v3500 = vld [vmem:[%s3495 + $0x20] sm:$0xff]
    %v3501 = vld [vmem:[%s3495 + $0x28] sm:$0xff]
    %v3502 = vld [vmem:[%s3495 + $0x30] sm:$0xff]
    %v3503 = vld [vmem:[%s3495 + $0x38] sm:$0xff]
    %v3512 = vlaneseq
    %v3513 = vshrl.u32 %v3512, 7
    %v3514 = vsub.s32 2, %v3513
    %v3515 = vrot.slane %v3463, %v3514
    %v3516 = vlaneseq
    %v3517 = vshrl.u32 %v3516, 7
    %v3518 = vsub.s32 2, %v3517
    %v3519 = vrot.slane %v3466, %v3518
    %v3520 = vlaneseq
    %v3521 = vshrl.u32 %v3520, 7
    %v3522 = vsub.s32 2, %v3521
    %v3523 = vrot.slane %v3469, %v3522
    %v3524 = vlaneseq
    %v3525 = vshrl.u32 %v3524, 7
    %v3526 = vsub.s32 2, %v3525
    %v3527 = vrot.slane %v3472, %v3526
    %v3528 = vlaneseq
    %v3529 = vshrl.u32 %v3528, 7
    %v3530 = vsub.s32 2, %v3529
    %v3531 = vrot.slane %v3475, %v3530
    %v3532 = vlaneseq
    %v3533 = vshrl.u32 %v3532, 7
    %v3534 = vsub.s32 2, %v3533
    %v3535 = vrot.slane %v3478, %v3534
    %v3536 = vlaneseq
    %v3537 = vshrl.u32 %v3536, 7
    %v3538 = vsub.s32 2, %v3537
    %v3539 = vrot.slane %v3481, %v3538
    %v3540 = vlaneseq
    %v3541 = vshrl.u32 %v3540, 7
    %v3542 = vsub.s32 2, %v3541
    %v3543 = vrot.slane %v3484, %v3542
    %vm3544 = vcmask 1041409
    %v3545 = vsel %vm3544, %v3519, %v3515
    %v3546 = vsel %vm354, %v3523, %v3545
    %vm3547 = vcmask 1043459
    %v3548 = vsel %vm3547, %v3527, %v3546
    %v3549 = vsel %vm356, %v3531, %v3548
    %vm3550 = vcmask 1045509
    %v3551 = vsel %vm3550, %v3535, %v3549
    %v3552 = vsel %vm358, %v3539, %v3551
    %vm3553 = vcmask 1047559
    %v3554 = vsel %vm3553, %v3543, %v3552
    %v3555 = vsel %vm2428, %v3554, 0
    %3557 = vmatprep.subr.mxu0 0.0
    %3558 = vmatpush1.msra.mxu0 0.0
    %3559 = vmatprep.subr.mxu0 0.0
    %3560 = vmatpush1.msra.mxu0 0.0
    %3561 = vmatprep.subr.mxu0 0.0
    %3562 = vmatpush1.msra.mxu0 0.0
    %3563 = vmatprep.subr.mxu0 0.0
    %3564 = vmatpush1.msra.mxu0 0.0
    %3565 = vmatprep.subr.mxu0 0.0
    %3566 = vmatpush1.msra.mxu0 0.0
    %3567 = vmatprep.subr.mxu0 0.0
    %3568 = vmatpush1.msra.mxu0 0.0
    %3569 = vmatprep.subr.mxu0 0.0
    %3570 = vmatpush1.msra.mxu0 0.0
    %3571 = vmatprep.subr.mxu0 0.0
    %3572 = vmatpush1.msra.mxu0 0.0
    %3573 = vmatprep.subr.mxu0 0.0
    %3574 = vmatpush1.msra.mxu0 %v3503
    %3575 = vmatprep.subr.mxu0 0.0
    %3576 = vmatpush1.msra.mxu0 %v3502
    %3577 = vmatprep.subr.mxu0 0.0
    %3578 = vmatpush1.msra.mxu0 %v3501
    %3579 = vmatprep.subr.mxu0 0.0
    %3580 = vmatpush1.msra.mxu0 %v3500
    %3581 = vmatprep.subr.mxu0 0.0
    %3582 = vmatpush1.msra.mxu0 %v3499
    %3583 = vmatprep.subr.mxu0 0.0
    %3584 = vmatpush1.msra.mxu0 %v3498
    %3585 = vmatprep.subr.mxu0 0.0
    %3586 = vmatpush1.msra.mxu0 %v3497
    %3587 = vmatprep.subr.mxu0 0.0
    %3588 = vmatpush1.msra.mxu0 %v3496
    %3589 = vmatprep.subr.mxu0 0.0
    %3590 = vmatpush2.msra.mxu0 0.0
    %3591 = vmatprep.subr.mxu0 0.0
    %3592 = vmatpush2.msra.mxu0 0.0
    %3593 = vmatprep.subr.mxu0 0.0
    %3594 = vmatpush2.msra.mxu0 0.0
    %3595 = vmatprep.subr.mxu0 0.0
    %3596 = vmatpush2.msra.mxu0 0.0
    %3597 = vmatprep.subr.mxu0 0.0
    %3598 = vmatpush2.msra.mxu0 0.0
    %3599 = vmatprep.subr.mxu0 0.0
    %3600 = vmatpush2.msra.mxu0 0.0
    %3601 = vmatprep.subr.mxu0 0.0
    %3602 = vmatpush2.msra.mxu0 0.0
    %3603 = vmatprep.subr.mxu0 0.0
    %3604 = vmatpush2.msra.mxu0 0.0
    %3605 = vmatprep.subr.mxu0 0.0
    %3606 = vmatpush2.msra.mxu0 0.0
    %3607 = vmatprep.subr.mxu0 0.0
    %3608 = vmatpush2.msra.mxu0 0.0
    %3609 = vmatprep.subr.mxu0 0.0
    %3610 = vmatpush2.msra.mxu0 0.0
    %3611 = vmatprep.subr.mxu0 0.0
    %3612 = vmatpush2.msra.mxu0 0.0
    %3613 = vmatprep.subr.mxu0 0.0
    %3614 = vmatpush2.msra.mxu0 0.0
    %3615 = vmatprep.subr.mxu0 0.0
    %3616 = vmatpush2.msra.mxu0 0.0
    %3617 = vmatprep.subr.mxu0 0.0
    %3618 = vmatpush2.msra.mxu0 0.0
    %3619 = vmatprep.subr.mxu0 0.0
    %3620 = vmatpush2.msra.mxu0 0.0
    %3621 = vmatprep.mubr.f32.mxu0 0.0
    %3622 = vmatmul.mubr.f32.gmra.mxu0 %v3555
    %v3623 = vpop.f32.mrf.mxu0
    %v3624 = vadd.f32 0.0, %v3623
    %v3625 = vpop.f32.mrf.mxu0
    %3626 = vdwg.mxu0
    %v3627 = vlaneseq
    %v3628 = vshrl.u32 %v3627, 7
    %v3629 = vsub.s32 0, %v3628
    %v3630 = vrot.slane %v3463, %v3629
    %v3631 = vlaneseq
    %v3632 = vshrl.u32 %v3631, 7
    %v3633 = vsub.s32 0, %v3632
    %v3634 = vrot.slane %v3466, %v3633
    %v3635 = vlaneseq
    %v3636 = vshrl.u32 %v3635, 7
    %v3637 = vsub.s32 0, %v3636
    %v3638 = vrot.slane %v3469, %v3637
    %v3639 = vlaneseq
    %v3640 = vshrl.u32 %v3639, 7
    %v3641 = vsub.s32 0, %v3640
    %v3642 = vrot.slane %v3472, %v3641
    %v3643 = vlaneseq
    %v3644 = vshrl.u32 %v3643, 7
    %v3645 = vsub.s32 0, %v3644
    %v3646 = vrot.slane %v3475, %v3645
    %v3647 = vlaneseq
    %v3648 = vshrl.u32 %v3647, 7
    %v3649 = vsub.s32 0, %v3648
    %v3650 = vrot.slane %v3478, %v3649
    %v3651 = vlaneseq
    %v3652 = vshrl.u32 %v3651, 7
    %v3653 = vsub.s32 0, %v3652
    %v3654 = vrot.slane %v3481, %v3653
    %v3655 = vlaneseq
    %v3656 = vshrl.u32 %v3655, 7
    %v3657 = vsub.s32 0, %v3656
    %v3658 = vrot.slane %v3484, %v3657
    %v3659 = vsel %vm3544, %v3634, %v3630
    %v3660 = vsel %vm354, %v3638, %v3659
    %v3661 = vsel %vm3547, %v3642, %v3660
    %v3662 = vsel %vm356, %v3646, %v3661
    %v3663 = vsel %vm3550, %v3650, %v3662
    %v3664 = vsel %vm358, %v3654, %v3663
    %v3665 = vsel %vm3553, %v3658, %v3664
    %v3666 = vsel %vm2428, %v3665, 0
    %3668 = vmatprep.subr.mxu0 0.0
    %3669 = vmatpush1.msra.mxu0 0.0
    %3670 = vmatprep.subr.mxu0 0.0
    %3671 = vmatpush1.msra.mxu0 0.0
    %3672 = vmatprep.subr.mxu0 0.0
    %3673 = vmatpush1.msra.mxu0 0.0
    %3674 = vmatprep.subr.mxu0 0.0
    %3675 = vmatpush1.msra.mxu0 0.0
    %3676 = vmatprep.subr.mxu0 0.0
    %3677 = vmatpush1.msra.mxu0 0.0
    %3678 = vmatprep.subr.mxu0 0.0
    %3679 = vmatpush1.msra.mxu0 0.0
    %3680 = vmatprep.subr.mxu0 0.0
    %3681 = vmatpush1.msra.mxu0 0.0
    %3682 = vmatprep.subr.mxu0 0.0
    %3683 = vmatpush1.msra.mxu0 0.0
    %3684 = vmatprep.subr.mxu0 0.0
    %3685 = vmatpush1.msra.mxu0 %v3494
    %3686 = vmatprep.subr.mxu0 0.0
    %3687 = vmatpush1.msra.mxu0 %v3493
    %3688 = vmatprep.subr.mxu0 0.0
    %3689 = vmatpush1.msra.mxu0 %v3492
    %3690 = vmatprep.subr.mxu0 0.0
    %3691 = vmatpush1.msra.mxu0 %v3491
    %3692 = vmatprep.subr.mxu0 0.0
    %3693 = vmatpush1.msra.mxu0 %v3490
    %3694 = vmatprep.subr.mxu0 0.0
    %3695 = vmatpush1.msra.mxu0 %v3489
    %3696 = vmatprep.subr.mxu0 0.0
    %3697 = vmatpush1.msra.mxu0 %v3488
    %3698 = vmatprep.subr.mxu0 0.0
    %3699 = vmatpush1.msra.mxu0 %v3487
    %3700 = vmatprep.subr.mxu0 0.0
    %3701 = vmatpush2.msra.mxu0 0.0
    %3702 = vmatprep.subr.mxu0 0.0
    %3703 = vmatpush2.msra.mxu0 0.0
    %3704 = vmatprep.subr.mxu0 0.0
    %3705 = vmatpush2.msra.mxu0 0.0
    %3706 = vmatprep.subr.mxu0 0.0
    %3707 = vmatpush2.msra.mxu0 0.0
    %3708 = vmatprep.subr.mxu0 0.0
    %3709 = vmatpush2.msra.mxu0 0.0
    %3710 = vmatprep.subr.mxu0 0.0
    %3711 = vmatpush2.msra.mxu0 0.0
    %3712 = vmatprep.subr.mxu0 0.0
    %3713 = vmatpush2.msra.mxu0 0.0
    %3714 = vmatprep.subr.mxu0 0.0
    %3715 = vmatpush2.msra.mxu0 0.0
    %3716 = vmatprep.subr.mxu0 0.0
    %3717 = vmatpush2.msra.mxu0 0.0
    %3718 = vmatprep.subr.mxu0 0.0
    %3719 = vmatpush2.msra.mxu0 0.0
    %3720 = vmatprep.subr.mxu0 0.0
    %3721 = vmatpush2.msra.mxu0 0.0
    %3722 = vmatprep.subr.mxu0 0.0
    %3723 = vmatpush2.msra.mxu0 0.0
    %3724 = vmatprep.subr.mxu0 0.0
    %3725 = vmatpush2.msra.mxu0 0.0
    %3726 = vmatprep.subr.mxu0 0.0
    %3727 = vmatpush2.msra.mxu0 0.0
    %3728 = vmatprep.subr.mxu0 0.0
    %3729 = vmatpush2.msra.mxu0 0.0
    %3730 = vmatprep.subr.mxu0 0.0
    %3731 = vmatpush2.msra.mxu0 0.0
    %3732 = vmatprep.mubr.f32.mxu0 0.0
    %3733 = vmatmul.mubr.f32.gmra.mxu0 %v3666
    %v3734 = vpop.f32.mrf.mxu0
    %v3735 = vadd.f32 %v3624, %v3734
    %v3736 = vpop.f32.mrf.mxu0
    %3737 = vdwg.mxu0
    %s3738 = scalar_lea.vmem [#allocation3], 128
    %v3739 = vld [vmem:[%s3738] sm:$0xff]
    %v3740 = vld [vmem:[%s3738 + $0x8] sm:$0xff]
    %v3741 = vld [vmem:[%s3738 + $0x10] sm:$0xff]
    %v3742 = vld [vmem:[%s3738 + $0x18] sm:$0xff]
    %v3743 = vld [vmem:[%s3738 + $0x20] sm:$0xff]
    %v3744 = vld [vmem:[%s3738 + $0x28] sm:$0xff]
    %v3745 = vld [vmem:[%s3738 + $0x30] sm:$0xff]
    %v3746 = vld [vmem:[%s3738 + $0x38] sm:$0xff]
    %v3755 = vlaneseq
    %v3756 = vshrl.u32 %v3755, 7
    %v3757 = vsub.s32 0, %v3756
    %v3758 = vrot.slane %v3464, %v3757
    %v3759 = vlaneseq
    %v3760 = vshrl.u32 %v3759, 7
    %v3761 = vsub.s32 0, %v3760
    %v3762 = vrot.slane %v3467, %v3761
    %v3763 = vlaneseq
    %v3764 = vshrl.u32 %v3763, 7
    %v3765 = vsub.s32 0, %v3764
    %v3766 = vrot.slane %v3470, %v3765
    %v3767 = vlaneseq
    %v3768 = vshrl.u32 %v3767, 7
    %v3769 = vsub.s32 0, %v3768
    %v3770 = vrot.slane %v3473, %v3769
    %v3771 = vlaneseq
    %v3772 = vshrl.u32 %v3771, 7
    %v3773 = vsub.s32 0, %v3772
    %v3774 = vrot.slane %v3476, %v3773
    %v3775 = vlaneseq
    %v3776 = vshrl.u32 %v3775, 7
    %v3777 = vsub.s32 0, %v3776
    %v3778 = vrot.slane %v3479, %v3777
    %v3779 = vlaneseq
    %v3780 = vshrl.u32 %v3779, 7
    %v3781 = vsub.s32 0, %v3780
    %v3782 = vrot.slane %v3482, %v3781
    %v3783 = vlaneseq
    %v3784 = vshrl.u32 %v3783, 7
    %v3785 = vsub.s32 0, %v3784
    %v3786 = vrot.slane %v3485, %v3785
    %v3787 = vsel %vm3544, %v3762, %v3758
    %v3788 = vsel %vm354, %v3766, %v3787
    %v3789 = vsel %vm3547, %v3770, %v3788
    %v3790 = vsel %vm356, %v3774, %v3789
    %v3791 = vsel %vm3550, %v3778, %v3790
    %v3792 = vsel %vm358, %v3782, %v3791
    %v3793 = vsel %vm3553, %v3786, %v3792
    %v3794 = vsel %vm2428, %v3793, 0
    %3796 = vmatprep.subr.mxu0 0.0
    %3797 = vmatpush1.msra.mxu0 0.0
    %3798 = vmatprep.subr.mxu0 0.0
    %3799 = vmatpush1.msra.mxu0 0.0
    %3800 = vmatprep.subr.mxu0 0.0
    %3801 = vmatpush1.msra.mxu0 0.0
    %3802 = vmatprep.subr.mxu0 0.0
    %3803 = vmatpush1.msra.mxu0 0.0
    %3804 = vmatprep.subr.mxu0 0.0
    %3805 = vmatpush1.msra.mxu0 0.0
    %3806 = vmatprep.subr.mxu0 0.0
    %3807 = vmatpush1.msra.mxu0 0.0
    %3808 = vmatprep.subr.mxu0 0.0
    %3809 = vmatpush1.msra.mxu0 0.0
    %3810 = vmatprep.subr.mxu0 0.0
    %3811 = vmatpush1.msra.mxu0 0.0
    %3812 = vmatprep.subr.mxu0 0.0
    %3813 = vmatpush1.msra.mxu0 %v3746
    %3814 = vmatprep.subr.mxu0 0.0
    %3815 = vmatpush1.msra.mxu0 %v3745
    %3816 = vmatprep.subr.mxu0 0.0
    %3817 = vmatpush1.msra.mxu0 %v3744
    %3818 = vmatprep.subr.mxu0 0.0
    %3819 = vmatpush1.msra.mxu0 %v3743
    %3820 = vmatprep.subr.mxu0 0.0
    %3821 = vmatpush1.msra.mxu0 %v3742
    %3822 = vmatprep.subr.mxu0 0.0
    %3823 = vmatpush1.msra.mxu0 %v3741
    %3824 = vmatprep.subr.mxu0 0.0
    %3825 = vmatpush1.msra.mxu0 %v3740
    %3826 = vmatprep.subr.mxu0 0.0
    %3827 = vmatpush1.msra.mxu0 %v3739
    %3828 = vmatprep.subr.mxu0 0.0
    %3829 = vmatpush2.msra.mxu0 0.0
    %3830 = vmatprep.subr.mxu0 0.0
    %3831 = vmatpush2.msra.mxu0 0.0
    %3832 = vmatprep.subr.mxu0 0.0
    %3833 = vmatpush2.msra.mxu0 0.0
    %3834 = vmatprep.subr.mxu0 0.0
    %3835 = vmatpush2.msra.mxu0 0.0
    %3836 = vmatprep.subr.mxu0 0.0
    %3837 = vmatpush2.msra.mxu0 0.0
    %3838 = vmatprep.subr.mxu0 0.0
    %3839 = vmatpush2.msra.mxu0 0.0
    %3840 = vmatprep.subr.mxu0 0.0
    %3841 = vmatpush2.msra.mxu0 0.0
    %3842 = vmatprep.subr.mxu0 0.0
    %3843 = vmatpush2.msra.mxu0 0.0
    %3844 = vmatprep.subr.mxu0 0.0
    %3845 = vmatpush2.msra.mxu0 0.0
    %3846 = vmatprep.subr.mxu0 0.0
    %3847 = vmatpush2.msra.mxu0 0.0
    %3848 = vmatprep.subr.mxu0 0.0
    %3849 = vmatpush2.msra.mxu0 0.0
    %3850 = vmatprep.subr.mxu0 0.0
    %3851 = vmatpush2.msra.mxu0 0.0
    %3852 = vmatprep.subr.mxu0 0.0
    %3853 = vmatpush2.msra.mxu0 0.0
    %3854 = vmatprep.subr.mxu0 0.0
    %3855 = vmatpush2.msra.mxu0 0.0
    %3856 = vmatprep.subr.mxu0 0.0
    %3857 = vmatpush2.msra.mxu0 0.0
    %3858 = vmatprep.subr.mxu0 0.0
    %3859 = vmatpush2.msra.mxu0 0.0
    %3860 = vmatprep.mubr.f32.mxu0 0.0
    %3861 = vmatmul.mubr.f32.gmra.mxu0 %v3794
    %v3862 = vpop.f32.mrf.mxu0
    %v3863 = vadd.f32 0.0, %v3862
    %v3864 = vpop.f32.mrf.mxu0
    %3865 = vdwg.mxu0
    %v3866 = vadd.f32 %v3735, %v3863
    %s3867 = scalar_lea.vmem [#allocation3], 192
    %v3868 = vld [vmem:[%s3867] sm:$0xff]
    %v3869 = vld [vmem:[%s3867 + $0x8] sm:$0xff]
    %v3870 = vld [vmem:[%s3867 + $0x10] sm:$0xff]
    %v3871 = vld [vmem:[%s3867 + $0x18] sm:$0xff]
    %v3872 = vld [vmem:[%s3867 + $0x20] sm:$0xff]
    %v3873 = vld [vmem:[%s3867 + $0x28] sm:$0xff]
    %v3874 = vld [vmem:[%s3867 + $0x30] sm:$0xff]
    %v3875 = vld [vmem:[%s3867 + $0x38] sm:$0xff]
    %v3876 = vlaneseq
    %v3877 = vshrl.u32 %v3876, 7
    %v3878 = vsub.s32 2, %v3877
    %v3879 = vrot.slane %v3464, %v3878
    %v3880 = vlaneseq
    %v3881 = vshrl.u32 %v3880, 7
    %v3882 = vsub.s32 2, %v3881
    %v3883 = vrot.slane %v3467, %v3882
    %v3884 = vlaneseq
    %v3885 = vshrl.u32 %v3884, 7
    %v3886 = vsub.s32 2, %v3885
    %v3887 = vrot.slane %v3470, %v3886
    %v3888 = vlaneseq
    %v3889 = vshrl.u32 %v3888, 7
    %v3890 = vsub.s32 2, %v3889
    %v3891 = vrot.slane %v3473, %v3890
    %v3892 = vlaneseq
    %v3893 = vshrl.u32 %v3892, 7
    %v3894 = vsub.s32 2, %v3893
    %v3895 = vrot.slane %v3476, %v3894
    %v3896 = vlaneseq
    %v3897 = vshrl.u32 %v3896, 7
    %v3898 = vsub.s32 2, %v3897
    %v3899 = vrot.slane %v3479, %v3898
    %v3900 = vlaneseq
    %v3901 = vshrl.u32 %v3900, 7
    %v3902 = vsub.s32 2, %v3901
    %v3903 = vrot.slane %v3482, %v3902
    %v3904 = vlaneseq
    %v3905 = vshrl.u32 %v3904, 7
    %v3906 = vsub.s32 2, %v3905
    %v3907 = vrot.slane %v3485, %v3906
    %v3908 = vsel %vm3544, %v3883, %v3879
    %v3909 = vsel %vm354, %v3887, %v3908
    %v3910 = vsel %vm3547, %v3891, %v3909
    %v3911 = vsel %vm356, %v3895, %v3910
    %v3912 = vsel %vm3550, %v3899, %v3911
    %v3913 = vsel %vm358, %v3903, %v3912
    %v3914 = vsel %vm3553, %v3907, %v3913
    %v3915 = vsel %vm2428, %v3914, 0
    %3917 = vmatprep.subr.mxu0 0.0
    %3918 = vmatpush1.msra.mxu0 0.0
    %3919 = vmatprep.subr.mxu0 0.0
    %3920 = vmatpush1.msra.mxu0 0.0
    %3921 = vmatprep.subr.mxu0 0.0
    %3922 = vmatpush1.msra.mxu0 0.0
    %3923 = vmatprep.subr.mxu0 0.0
    %3924 = vmatpush1.msra.mxu0 0.0
    %3925 = vmatprep.subr.mxu0 0.0
    %3926 = vmatpush1.msra.mxu0 0.0
    %3927 = vmatprep.subr.mxu0 0.0
    %3928 = vmatpush1.msra.mxu0 0.0
    %3929 = vmatprep.subr.mxu0 0.0
    %3930 = vmatpush1.msra.mxu0 0.0
    %3931 = vmatprep.subr.mxu0 0.0
    %3932 = vmatpush1.msra.mxu0 0.0
    %3933 = vmatprep.subr.mxu0 0.0
    %3934 = vmatpush1.msra.mxu0 %v3875
    %3935 = vmatprep.subr.mxu0 0.0
    %3936 = vmatpush1.msra.mxu0 %v3874
    %3937 = vmatprep.subr.mxu0 0.0
    %3938 = vmatpush1.msra.mxu0 %v3873
    %3939 = vmatprep.subr.mxu0 0.0
    %3940 = vmatpush1.msra.mxu0 %v3872
    %3941 = vmatprep.subr.mxu0 0.0
    %3942 = vmatpush1.msra.mxu0 %v3871
    %3943 = vmatprep.subr.mxu0 0.0
    %3944 = vmatpush1.msra.mxu0 %v3870
    %3945 = vmatprep.subr.mxu0 0.0
    %3946 = vmatpush1.msra.mxu0 %v3869
    %3947 = vmatprep.subr.mxu0 0.0
    %3948 = vmatpush1.msra.mxu0 %v3868
    %3949 = vmatprep.subr.mxu0 0.0
    %3950 = vmatpush2.msra.mxu0 0.0
    %3951 = vmatprep.subr.mxu0 0.0
    %3952 = vmatpush2.msra.mxu0 0.0
    %3953 = vmatprep.subr.mxu0 0.0
    %3954 = vmatpush2.msra.mxu0 0.0
    %3955 = vmatprep.subr.mxu0 0.0
    %3956 = vmatpush2.msra.mxu0 0.0
    %3957 = vmatprep.subr.mxu0 0.0
    %3958 = vmatpush2.msra.mxu0 0.0
    %3959 = vmatprep.subr.mxu0 0.0
    %3960 = vmatpush2.msra.mxu0 0.0
    %3961 = vmatprep.subr.mxu0 0.0
    %3962 = vmatpush2.msra.mxu0 0.0
    %3963 = vmatprep.subr.mxu0 0.0
    %3964 = vmatpush2.msra.mxu0 0.0
    %3965 = vmatprep.subr.mxu0 0.0
    %3966 = vmatpush2.msra.mxu0 0.0
    %3967 = vmatprep.subr.mxu0 0.0
    %3968 = vmatpush2.msra.mxu0 0.0
    %3969 = vmatprep.subr.mxu0 0.0
    %3970 = vmatpush2.msra.mxu0 0.0
    %3971 = vmatprep.subr.mxu0 0.0
    %3972 = vmatpush2.msra.mxu0 0.0
    %3973 = vmatprep.subr.mxu0 0.0
    %3974 = vmatpush2.msra.mxu0 0.0
    %3975 = vmatprep.subr.mxu0 0.0
    %3976 = vmatpush2.msra.mxu0 0.0
    %3977 = vmatprep.subr.mxu0 0.0
    %3978 = vmatpush2.msra.mxu0 0.0
    %3979 = vmatprep.subr.mxu0 0.0
    %3980 = vmatpush2.msra.mxu0 0.0
    %3981 = vmatprep.mubr.f32.mxu0 0.0
    %3982 = vmatmul.mubr.f32.gmra.mxu0 %v3915
    %v3983 = vpop.f32.mrf.mxu0
    %v3984 = vadd.f32 0.0, %v3983
    %v3985 = vpop.f32.mrf.mxu0
    %3986 = vdwg.mxu0
    %v3987 = vadd.f32 %v3866, %v3984
    %s3988 = scalar_lea.vmem [#allocation3], 256
    %v3989 = vld [vmem:[%s3988] sm:$0xff]
    %v3990 = vld [vmem:[%s3988 + $0x8] sm:$0xff]
    %v3991 = vld [vmem:[%s3988 + $0x10] sm:$0xff]
    %v3992 = vld [vmem:[%s3988 + $0x18] sm:$0xff]
    %v3993 = vld [vmem:[%s3988 + $0x20] sm:$0xff]
    %v3994 = vld [vmem:[%s3988 + $0x28] sm:$0xff]
    %v3995 = vld [vmem:[%s3988 + $0x30] sm:$0xff]
    %v3996 = vld [vmem:[%s3988 + $0x38] sm:$0xff]
    %v4005 = vlaneseq
    %v4006 = vshrl.u32 %v4005, 7
    %v4007 = vsub.s32 0, %v4006
    %v4008 = vrot.slane %v3465, %v4007
    %v4009 = vlaneseq
    %v4010 = vshrl.u32 %v4009, 7
    %v4011 = vsub.s32 0, %v4010
    %v4012 = vrot.slane %v3468, %v4011
    %v4013 = vlaneseq
    %v4014 = vshrl.u32 %v4013, 7
    %v4015 = vsub.s32 0, %v4014
    %v4016 = vrot.slane %v3471, %v4015
    %v4017 = vlaneseq
    %v4018 = vshrl.u32 %v4017, 7
    %v4019 = vsub.s32 0, %v4018
    %v4020 = vrot.slane %v3474, %v4019
    %v4021 = vlaneseq
    %v4022 = vshrl.u32 %v4021, 7
    %v4023 = vsub.s32 0, %v4022
    %v4024 = vrot.slane %v3477, %v4023
    %v4025 = vlaneseq
    %v4026 = vshrl.u32 %v4025, 7
    %v4027 = vsub.s32 0, %v4026
    %v4028 = vrot.slane %v3480, %v4027
    %v4029 = vlaneseq
    %v4030 = vshrl.u32 %v4029, 7
    %v4031 = vsub.s32 0, %v4030
    %v4032 = vrot.slane %v3483, %v4031
    %v4033 = vlaneseq
    %v4034 = vshrl.u32 %v4033, 7
    %v4035 = vsub.s32 0, %v4034
    %v4036 = vrot.slane %v3486, %v4035
    %v4037 = vsel %vm3544, %v4012, %v4008
    %v4038 = vsel %vm354, %v4016, %v4037
    %v4039 = vsel %vm3547, %v4020, %v4038
    %v4040 = vsel %vm356, %v4024, %v4039
    %v4041 = vsel %vm3550, %v4028, %v4040
    %v4042 = vsel %vm358, %v4032, %v4041
    %v4043 = vsel %vm3553, %v4036, %v4042
    %v4044 = vsel %vm2428, %v4043, 0
    %4046 = vmatprep.subr.mxu0 0.0
    %4047 = vmatpush1.msra.mxu0 0.0
    %4048 = vmatprep.subr.mxu0 0.0
    %4049 = vmatpush1.msra.mxu0 0.0
    %4050 = vmatprep.subr.mxu0 0.0
    %4051 = vmatpush1.msra.mxu0 0.0
    %4052 = vmatprep.subr.mxu0 0.0
    %4053 = vmatpush1.msra.mxu0 0.0
    %4054 = vmatprep.subr.mxu0 0.0
    %4055 = vmatpush1.msra.mxu0 0.0
    %4056 = vmatprep.subr.mxu0 0.0
    %4057 = vmatpush1.msra.mxu0 0.0
    %4058 = vmatprep.subr.mxu0 0.0
    %4059 = vmatpush1.msra.mxu0 0.0
    %4060 = vmatprep.subr.mxu0 0.0
    %4061 = vmatpush1.msra.mxu0 0.0
    %4062 = vmatprep.subr.mxu0 0.0
    %4063 = vmatpush1.msra.mxu0 %v3996
    %4064 = vmatprep.subr.mxu0 0.0
    %4065 = vmatpush1.msra.mxu0 %v3995
    %4066 = vmatprep.subr.mxu0 0.0
    %4067 = vmatpush1.msra.mxu0 %v3994
    %4068 = vmatprep.subr.mxu0 0.0
    %4069 = vmatpush1.msra.mxu0 %v3993
    %4070 = vmatprep.subr.mxu0 0.0
    %4071 = vmatpush1.msra.mxu0 %v3992
    %4072 = vmatprep.subr.mxu0 0.0
    %4073 = vmatpush1.msra.mxu0 %v3991
    %4074 = vmatprep.subr.mxu0 0.0
    %4075 = vmatpush1.msra.mxu0 %v3990
    %4076 = vmatprep.subr.mxu0 0.0
    %4077 = vmatpush1.msra.mxu0 %v3989
    %4078 = vmatprep.subr.mxu0 0.0
    %4079 = vmatpush2.msra.mxu0 0.0
    %4080 = vmatprep.subr.mxu0 0.0
    %4081 = vmatpush2.msra.mxu0 0.0
    %4082 = vmatprep.subr.mxu0 0.0
    %4083 = vmatpush2.msra.mxu0 0.0
    %4084 = vmatprep.subr.mxu0 0.0
    %4085 = vmatpush2.msra.mxu0 0.0
    %4086 = vmatprep.subr.mxu0 0.0
    %4087 = vmatpush2.msra.mxu0 0.0
    %4088 = vmatprep.subr.mxu0 0.0
    %4089 = vmatpush2.msra.mxu0 0.0
    %4090 = vmatprep.subr.mxu0 0.0
    %4091 = vmatpush2.msra.mxu0 0.0
    %4092 = vmatprep.subr.mxu0 0.0
    %4093 = vmatpush2.msra.mxu0 0.0
    %4094 = vmatprep.subr.mxu0 0.0
    %4095 = vmatpush2.msra.mxu0 0.0
    %4096 = vmatprep.subr.mxu0 0.0
    %4097 = vmatpush2.msra.mxu0 0.0
    %4098 = vmatprep.subr.mxu0 0.0
    %4099 = vmatpush2.msra.mxu0 0.0
    %4100 = vmatprep.subr.mxu0 0.0
    %4101 = vmatpush2.msra.mxu0 0.0
    %4102 = vmatprep.subr.mxu0 0.0
    %4103 = vmatpush2.msra.mxu0 0.0
    %4104 = vmatprep.subr.mxu0 0.0
    %4105 = vmatpush2.msra.mxu0 0.0
    %4106 = vmatprep.subr.mxu0 0.0
    %4107 = vmatpush2.msra.mxu0 0.0
    %4108 = vmatprep.subr.mxu0 0.0
    %4109 = vmatpush2.msra.mxu0 0.0
    %4110 = vmatprep.mubr.f32.mxu0 0.0
    %4111 = vmatmul.mubr.f32.gmra.mxu0 %v4044
    %v4112 = vpop.f32.mrf.mxu0
    %v4113 = vadd.f32 0.0, %v4112
    %v4114 = vpop.f32.mrf.mxu0
    %4115 = vdwg.mxu0
    %v4116 = vadd.f32 %v3987, %v4113
    %s4117 = scalar_lea.vmem [#allocation3], 320
    %v4118 = vld [vmem:[%s4117] sm:$0xff]
    %v4119 = vld [vmem:[%s4117 + $0x8] sm:$0xff]
    %v4120 = vld [vmem:[%s4117 + $0x10] sm:$0xff]
    %v4121 = vld [vmem:[%s4117 + $0x18] sm:$0xff]
    %v4122 = vld [vmem:[%s4117 + $0x20] sm:$0xff]
    %v4123 = vld [vmem:[%s4117 + $0x28] sm:$0xff]
    %v4124 = vld [vmem:[%s4117 + $0x30] sm:$0xff]
    %v4125 = vld [vmem:[%s4117 + $0x38] sm:$0xff]
    %v4126 = vlaneseq
    %v4127 = vshrl.u32 %v4126, 7
    %v4128 = vsub.s32 2, %v4127
    %v4129 = vrot.slane %v3465, %v4128
    %v4130 = vlaneseq
    %v4131 = vshrl.u32 %v4130, 7
    %v4132 = vsub.s32 2, %v4131
    %v4133 = vrot.slane %v3468, %v4132
    %v4134 = vlaneseq
    %v4135 = vshrl.u32 %v4134, 7
    %v4136 = vsub.s32 2, %v4135
    %v4137 = vrot.slane %v3471, %v4136
    %v4138 = vlaneseq
    %v4139 = vshrl.u32 %v4138, 7
    %v4140 = vsub.s32 2, %v4139
    %v4141 = vrot.slane %v3474, %v4140
    %v4142 = vlaneseq
    %v4143 = vshrl.u32 %v4142, 7
    %v4144 = vsub.s32 2, %v4143
    %v4145 = vrot.slane %v3477, %v4144
    %v4146 = vlaneseq
    %v4147 = vshrl.u32 %v4146, 7
    %v4148 = vsub.s32 2, %v4147
    %v4149 = vrot.slane %v3480, %v4148
    %v4150 = vlaneseq
    %v4151 = vshrl.u32 %v4150, 7
    %v4152 = vsub.s32 2, %v4151
    %v4153 = vrot.slane %v3483, %v4152
    %v4154 = vlaneseq
    %v4155 = vshrl.u32 %v4154, 7
    %v4156 = vsub.s32 2, %v4155
    %v4157 = vrot.slane %v3486, %v4156
    %v4158 = vsel %vm3544, %v4133, %v4129
    %v4159 = vsel %vm354, %v4137, %v4158
    %v4160 = vsel %vm3547, %v4141, %v4159
    %v4161 = vsel %vm356, %v4145, %v4160
    %v4162 = vsel %vm3550, %v4149, %v4161
    %v4163 = vsel %vm358, %v4153, %v4162
    %v4164 = vsel %vm3553, %v4157, %v4163
    %v4165 = vsel %vm2428, %v4164, 0
    %4167 = vmatprep.subr.mxu0 0.0
    %4168 = vmatpush1.msra.mxu0 0.0
    %4169 = vmatprep.subr.mxu0 0.0
    %4170 = vmatpush1.msra.mxu0 0.0
    %4171 = vmatprep.subr.mxu0 0.0
    %4172 = vmatpush1.msra.mxu0 0.0
    %4173 = vmatprep.subr.mxu0 0.0
    %4174 = vmatpush1.msra.mxu0 0.0
    %4175 = vmatprep.subr.mxu0 0.0
    %4176 = vmatpush1.msra.mxu0 0.0
    %4177 = vmatprep.subr.mxu0 0.0
    %4178 = vmatpush1.msra.mxu0 0.0
    %4179 = vmatprep.subr.mxu0 0.0
    %4180 = vmatpush1.msra.mxu0 0.0
    %4181 = vmatprep.subr.mxu0 0.0
    %4182 = vmatpush1.msra.mxu0 0.0
    %4183 = vmatprep.subr.mxu0 0.0
    %4184 = vmatpush1.msra.mxu0 %v4125
    %4185 = vmatprep.subr.mxu0 0.0
    %4186 = vmatpush1.msra.mxu0 %v4124
    %4187 = vmatprep.subr.mxu0 0.0
    %4188 = vmatpush1.msra.mxu0 %v4123
    %4189 = vmatprep.subr.mxu0 0.0
    %4190 = vmatpush1.msra.mxu0 %v4122
    %4191 = vmatprep.subr.mxu0 0.0
    %4192 = vmatpush1.msra.mxu0 %v4121
    %4193 = vmatprep.subr.mxu0 0.0
    %4194 = vmatpush1.msra.mxu0 %v4120
    %4195 = vmatprep.subr.mxu0 0.0
    %4196 = vmatpush1.msra.mxu0 %v4119
    %4197 = vmatprep.subr.mxu0 0.0
    %4198 = vmatpush1.msra.mxu0 %v4118
    %4199 = vmatprep.subr.mxu0 0.0
    %4200 = vmatpush2.msra.mxu0 0.0
    %4201 = vmatprep.subr.mxu0 0.0
    %4202 = vmatpush2.msra.mxu0 0.0
    %4203 = vmatprep.subr.mxu0 0.0
    %4204 = vmatpush2.msra.mxu0 0.0
    %4205 = vmatprep.subr.mxu0 0.0
    %4206 = vmatpush2.msra.mxu0 0.0
    %4207 = vmatprep.subr.mxu0 0.0
    %4208 = vmatpush2.msra.mxu0 0.0
    %4209 = vmatprep.subr.mxu0 0.0
    %4210 = vmatpush2.msra.mxu0 0.0
    %4211 = vmatprep.subr.mxu0 0.0
    %4212 = vmatpush2.msra.mxu0 0.0
    %4213 = vmatprep.subr.mxu0 0.0
    %4214 = vmatpush2.msra.mxu0 0.0
    %4215 = vmatprep.subr.mxu0 0.0
    %4216 = vmatpush2.msra.mxu0 0.0
    %4217 = vmatprep.subr.mxu0 0.0
    %4218 = vmatpush2.msra.mxu0 0.0
    %4219 = vmatprep.subr.mxu0 0.0
    %4220 = vmatpush2.msra.mxu0 0.0
    %4221 = vmatprep.subr.mxu0 0.0
    %4222 = vmatpush2.msra.mxu0 0.0
    %4223 = vmatprep.subr.mxu0 0.0
    %4224 = vmatpush2.msra.mxu0 0.0
    %4225 = vmatprep.subr.mxu0 0.0
    %4226 = vmatpush2.msra.mxu0 0.0
    %4227 = vmatprep.subr.mxu0 0.0
    %4228 = vmatpush2.msra.mxu0 0.0
    %4229 = vmatprep.subr.mxu0 0.0
    %4230 = vmatpush2.msra.mxu0 0.0
    %4231 = vmatprep.mubr.f32.mxu0 0.0
    %4232 = vmatmul.mubr.f32.gmra.mxu0 %v4165
    %v4233 = vpop.f32.mrf.mxu0
    %v4234 = vadd.f32 0.0, %v4233
    %v4235 = vpop.f32.mrf.mxu0
    %4236 = vdwg.mxu0
    %v4237 = vadd.f32 %v4116, %v4234
    %v4238 = vld [vmem:[%s6] sm:$0x1]
    %v4240 = vlaneseq
    %v4241 = vshrl.u32 %v4240, 7
    %v4242 = vsub.s32 0, %v4241
    %v4243 = vrot.slane %v4238, %v4242
    %v4245 = vadd.f32 %v4237, %v4243
    %v4246 = vtanh.pop %v4245
    %v4247 = vld [vmem:[%s7] sm:$0xff]
    %v4248 = vld [vmem:[%s7 + $0x8] sm:$0xff]
    %v4249 = vld [vmem:[%s7 + $0x10] sm:$0xff]
    %v4250 = vld [vmem:[%s7 + $0x18] sm:$0xff]
    %v4251 = vld [vmem:[%s7 + $0x20] sm:$0xff]
    %v4252 = vld [vmem:[%s7 + $0x28] sm:$0xff]
    %v4253 = vld [vmem:[%s7 + $0x30] sm:$0xff]
    %v4254 = vld [vmem:[%s7 + $0x38] sm:$0xff]
    %v4255 = vld [vmem:[#allocation2] sm:$0x1]
    %v4257 = vlaneseq
    %v4258 = vshrl.u32 %v4257, 7
    %v4259 = vsub.s32 0, %v4258
    %v4260 = vrot.slane %v4255, %v4259
    %v4263 = vsel %vm2428, %v4246, 0
    %4265 = vmatprep.subr.mxu0 0.0
    %4266 = vmatpush1.msra.mxu0 0.0
    %4267 = vmatprep.subr.mxu0 0.0
    %4268 = vmatpush1.msra.mxu0 0.0
    %4269 = vmatprep.subr.mxu0 0.0
    %4270 = vmatpush1.msra.mxu0 0.0
    %4271 = vmatprep.subr.mxu0 0.0
    %4272 = vmatpush1.msra.mxu0 0.0
    %4273 = vmatprep.subr.mxu0 0.0
    %4274 = vmatpush1.msra.mxu0 0.0
    %4275 = vmatprep.subr.mxu0 0.0
    %4276 = vmatpush1.msra.mxu0 0.0
    %4277 = vmatprep.subr.mxu0 0.0
    %4278 = vmatpush1.msra.mxu0 0.0
    %4279 = vmatprep.subr.mxu0 0.0
    %4280 = vmatpush1.msra.mxu0 0.0
    %4281 = vmatprep.subr.mxu0 0.0
    %4282 = vmatpush1.msra.mxu0 %v4254
    %4283 = vmatprep.subr.mxu0 0.0
    %4284 = vmatpush1.msra.mxu0 %v4253
    %4285 = vmatprep.subr.mxu0 0.0
    %4286 = vmatpush1.msra.mxu0 %v4252
    %4287 = vmatprep.subr.mxu0 0.0
    %4288 = vmatpush1.msra.mxu0 %v4251
    %4289 = vmatprep.subr.mxu0 0.0
    %4290 = vmatpush1.msra.mxu0 %v4250
    %4291 = vmatprep.subr.mxu0 0.0
    %4292 = vmatpush1.msra.mxu0 %v4249
    %4293 = vmatprep.subr.mxu0 0.0
    %4294 = vmatpush1.msra.mxu0 %v4248
    %4295 = vmatprep.subr.mxu0 0.0
    %4296 = vmatpush1.msra.mxu0 %v4247
    %4297 = vmatprep.subr.mxu0 0.0
    %4298 = vmatpush2.msra.mxu0 0.0
    %4299 = vmatprep.subr.mxu0 0.0
    %4300 = vmatpush2.msra.mxu0 0.0
    %4301 = vmatprep.subr.mxu0 0.0
    %4302 = vmatpush2.msra.mxu0 0.0
    %4303 = vmatprep.subr.mxu0 0.0
    %4304 = vmatpush2.msra.mxu0 0.0
    %4305 = vmatprep.subr.mxu0 0.0
    %4306 = vmatpush2.msra.mxu0 0.0
    %4307 = vmatprep.subr.mxu0 0.0
    %4308 = vmatpush2.msra.mxu0 0.0
    %4309 = vmatprep.subr.mxu0 0.0
    %4310 = vmatpush2.msra.mxu0 0.0
    %4311 = vmatprep.subr.mxu0 0.0
    %4312 = vmatpush2.msra.mxu0 0.0
    %4313 = vmatprep.subr.mxu0 0.0
    %4314 = vmatpush2.msra.mxu0 0.0
    %4315 = vmatprep.subr.mxu0 0.0
    %4316 = vmatpush2.msra.mxu0 0.0
    %4317 = vmatprep.subr.mxu0 0.0
    %4318 = vmatpush2.msra.mxu0 0.0
    %4319 = vmatprep.subr.mxu0 0.0
    %4320 = vmatpush2.msra.mxu0 0.0
    %4321 = vmatprep.subr.mxu0 0.0
    %4322 = vmatpush2.msra.mxu0 0.0
    %4323 = vmatprep.subr.mxu0 0.0
    %4324 = vmatpush2.msra.mxu0 0.0
    %4325 = vmatprep.subr.mxu0 0.0
    %4326 = vmatpush2.msra.mxu0 0.0
    %4327 = vmatprep.subr.mxu0 0.0
    %4328 = vmatpush2.msra.mxu0 0.0
    %4329 = vmatprep.mubr.f32.mxu0 0.0
    %4330 = vmatmul.mubr.f32.gmra.mxu0 %v4263
    %v4331 = vpop.f32.mrf.mxu0
    %v4332 = vadd.f32 %v4260, %v4331
    %v4333 = vpop.f32.mrf.mxu0
    %4334 = vdwg.mxu0
    %v4335 = vsub.f32 0.0, %v4332
    %v4336 = vmul.f32 %v4335, 1.442695
    %v4337 = vpow.pop %v4336
    %v4338 = vadd.f32 %v4337, 1.0
    %v4339 = vrcp.pop %v4338
    %v4340 = vmul.f32 1.0, %v4339
    %vm4341 = vcmask 7168
    %4342 = vst.msk [vmem:[%s9] sm:$0xff] %vm4341, %v4340
    // Predicated region
    $region42: #{tpu_custom_call.1} parent=1 // pred_check
      _
    $region43: #{tpu_custom_call.1} parent=1 // pred_check_branch
      %4344 = sbr.rel (0) target = $region45
    $region44: #{tpu_custom_call.1} parent=1 // pred_region
      _
    $region45: #{tpu_custom_call.1} parent=1 // pred_fallthru
      _
    // Predicated region
    $region46: #{tpu_custom_call.1} parent=1 // pred_check
      _
    $region47: #{tpu_custom_call.1} parent=1 // pred_check_branch
      %4346 = sbr.rel (0) target = $region49
    $region48: #{tpu_custom_call.1} parent=1 // pred_region
      _
    $region49: #{tpu_custom_call.1} parent=1 // pred_fallthru
      _
    %4347 = vsyncpa [#allocation4], 1

</llo_original>
